<compile_context>
chip_gen: v6e
topology: v6e:2x2x1
jax: 0.10.0
libtpu: 0.0.40
codegen_flags: <defaults>
</compile_context>

<pallas_src>
import math
import functools

import numpy as np
import jax
import jax.numpy as jnp
from jax.experimental import pallas as pl
from jax.experimental.pallas import tpu as pltpu


_COMPILER = pltpu.CompilerParams(
    dimension_semantics=("parallel",),
    vmem_limit_bytes=32 * 1024 * 1024,
)


def _round_up(x, m):
    return (x + m - 1) // m * m


# -----------------------------------------------------------------------------
# Pallas kernels (all operands arrive pre-padded to (8,128)-aligned tiles,
# biases already folded into the weights via "ones" K columns)
# -----------------------------------------------------------------------------
def _matmul_kernel(x_ref, w_ref, o_ref, *, relu):
    y = jnp.dot(x_ref[...], w_ref[...], preferred_element_type=jnp.float32)
    if relu:
        y = jnp.maximum(y, 0.0)
    o_ref[...] = y


def _mlp2_kernel(x_ref, w1_ref, w2_ref, o_ref):
    # Fused 2-layer MLP: relu(x @ W1) @ W2, biases folded into W1/W2.
    h = jnp.dot(x_ref[...], w1_ref[...], preferred_element_type=jnp.float32)
    h = jnp.maximum(h, 0.0).astype(w2_ref.dtype)
    o_ref[...] = jnp.dot(h, w2_ref[...], preferred_element_type=jnp.float32)


def _tnt_layer_kernel(x_ref, w_ref, sel_ref, y_ref, m_ref):
    # One block-stacked matmul drives all four per-scale linears (+relu);
    # the per-(scale,batch) cls mean-pooling is a tiny selection matmul.
    y = jnp.maximum(
        jnp.dot(x_ref[...], w_ref[...], preferred_element_type=jnp.float32), 0.0)
    y_ref[...] = y
    m_ref[...] = jnp.dot(sel_ref[...], y, preferred_element_type=jnp.float32)


def _gcn_kernel(x_ref, adj_ref, *rest, g_per_step, jp):
    # All GCN layers fused: h <- relu(adj @ (h @ W) + b), shared (Jp,Jp)
    # adjacency applied per graph (no block-diagonal kron).
    # TODO(synk): GraphConvolution internals are external; conventional
    # pygcn order (support = xW; out = adj @ support + b; relu) is assumed.
    *wb, o_ref = rest
    adj = adj_ref[...]
    h = x_ref[...]
    for l in range(len(wb) // 2):
        w = wb[2 * l][...]
        b = wb[2 * l + 1][...]
        t = jnp.dot(h.astype(w.dtype), w, preferred_element_type=jnp.float32)
        blocks = [jnp.dot(adj, t[g * jp:(g + 1) * jp, :],
                          preferred_element_type=jnp.float32)
                  for g in range(g_per_step)]
        h = jnp.maximum(jnp.concatenate(blocks, axis=0) + b, 0.0)
    o_ref[...] = h


# -----------------------------------------------------------------------------
# Pallas call wrappers
# -----------------------------------------------------------------------------
def _pick_tm(Mp):
    # Grid the M axis when it is large enough to matter (v7x megacore).
    if Mp >= 256 and Mp % 128 == 0:
        return 128
    return Mp


def pallas_matmul(x_padded, w, relu=False):
    Mp, Kp = x_padded.shape
    Kw, Np = w.shape
    assert Kp == Kw
    tm = _pick_tm(Mp)
    return pl.pallas_call(
        functools.partial(_matmul_kernel, relu=relu),
        out_shape=jax.ShapeDtypeStruct((Mp, Np), jnp.float32),
        grid=(Mp // tm,),
        in_specs=[pl.BlockSpec((tm, Kp), lambda i: (i, 0)),
                  pl.BlockSpec((Kp, Np), lambda i: (0, 0))],
        out_specs=pl.BlockSpec((tm, Np), lambda i: (i, 0)),
        compiler_params=_COMPILER,
    )(x_padded, w)


def pallas_mlp2(x_padded, w1, w2):
    Mp, Kp = x_padded.shape
    _, Hp = w1.shape
    _, Np = w2.shape
    tm = _pick_tm(Mp)
    return pl.pallas_call(
        _mlp2_kernel,
        out_shape=jax.ShapeDtypeStruct((Mp, Np), jnp.float32),
        grid=(Mp // tm,),
        in_specs=[pl.BlockSpec((tm, Kp), lambda i: (i, 0)),
                  pl.BlockSpec((Kp, Hp), lambda i: (0, 0)),
                  pl.BlockSpec((Hp, Np), lambda i: (0, 0))],
        out_specs=pl.BlockSpec((tm, Np), lambda i: (i, 0)),
        compiler_params=_COMPILER,
    )(x_padded, w1, w2)


def pallas_tnt_layer(xs, w, sel):
    Rp, Kp = xs.shape
    _, Np = w.shape
    Gp = sel.shape[0]
    return pl.pallas_call(
        _tnt_layer_kernel,
        out_shape=(jax.ShapeDtypeStruct((Rp, Np), jnp.float32),
                   jax.ShapeDtypeStruct((Gp, Np), jnp.float32)),
        grid=(1,),
        in_specs=[pl.BlockSpec((Rp, Kp), lambda i: (0, 0)),
                  pl.BlockSpec((Kp, Np), lambda i: (0, 0)),
                  pl.BlockSpec((Gp, Rp), lambda i: (0, 0))],
        out_specs=(pl.BlockSpec((Rp, Np), lambda i: (0, 0)),
                   pl.BlockSpec((Gp, Np), lambda i: (0, 0))),
        compiler_params=_COMPILER,
    )(xs, w, sel)


def pallas_gcn(xg, adj_p, gcn_layers, g_per_step, jp):
    R, Ep = xg.shape
    rows_per_step = g_per_step * jp
    n_steps = R // rows_per_step
    operands = [xg, adj_p]
    in_specs = [pl.BlockSpec((rows_per_step, Ep), lambda i: (i, 0)),
                pl.BlockSpec(adj_p.shape, lambda i: (0, 0))]
    for l in gcn_layers:
        operands += [l["w"], l["b"]]
        in_specs += [pl.BlockSpec(l["w"].shape, lambda i: (0, 0)),
                     pl.BlockSpec(l["b"].shape, lambda i: (0, 0))]
    return pl.pallas_call(
        functools.partial(_gcn_kernel, g_per_step=g_per_step, jp=jp),
        out_shape=jax.ShapeDtypeStruct((R, Ep), jnp.float32),
        grid=(n_steps,),
        in_specs=in_specs,
        out_specs=pl.BlockSpec((rows_per_step, Ep), lambda i: (i, 0)),
        compiler_params=_COMPILER,
    )(*operands)


# -----------------------------------------------------------------------------
# Parameter packing (weights padded / bias-folded / cast ONCE at build time)
# -----------------------------------------------------------------------------
def init_linear(key, din, dout):
    k1, k2 = jax.random.split(key)
    s = 1.0 / math.sqrt(din)
    W = jax.random.uniform(k1, (din, dout), minval=-s, maxval=s, dtype=jnp.float32)
    b = jax.random.uniform(k2, (dout,), minval=-s, maxval=s, dtype=jnp.float32)
    return W, b


def init_embedding(key, num, dim):
    return jax.random.normal(key, (num, dim), dtype=jnp.float32) * 0.02


def pack_linear(W, b=None, dtype=jnp.bfloat16):
    K, N = W.shape
    need_k = K + (1 if b is not None else 0)
    Kp = _round_up(max(need_k, 128), 128)
    Np = _round_up(max(N, 128), 128)
    out = jnp.zeros((Kp, Np), jnp.float32).at[:K, :N].set(W)
    if b is not None:
        out = out.at[K, :N].set(b)       # bias row, activated by ones column K
    return {"w": out.astype(dtype), "K": K, "N": N, "Kp": Kp, "Np": Np,
            "flag_col": (K if b is not None else None)}


def pad_act(x, lin):
    M, K = x.shape
    Mp = _round_up(max(M, 8), 8)
    dtype = lin["w"].dtype
    X = jnp.zeros((Mp, lin["Kp"]), dtype).at[:M, :K].set(x.astype(dtype))
    if lin["flag_col"] is not None:
        X = X.at[:M, lin["flag_col"]].set(1.0)
    return X


def pack_gcn_layer(W, b, dtype=jnp.bfloat16):
    e_in, e_out = W.shape
    Ep = _round_up(max(e_in, 128), 128)
    Wp = jnp.zeros((Ep, Ep), jnp.float32).at[:e_in, :e_out].set(W).astype(dtype)
    bp = jnp.zeros((1, Ep), jnp.float32).at[0, :e_out].set(b)
    return {"w": Wp, "b": bp}


def pack_fused_mlp2(raw_mlps, d, dtype=jnp.bfloat16):
    # Block-stack several Linear->ReLU->Linear MLPs (shared output dim d) into
    # one pair of weights; bias of layer 1 lives in "flag" K rows, bias of
    # layer 2 in "ones" hidden columns produced by those same flag rows.
    n = len(raw_mlps)
    Ks = [int(m["w1"].shape[0]) for m in raw_mlps]
    k_offs = [0]
    for K in Ks:
        k_offs.append(k_offs[-1] + K)
    flag_base = k_offs[-1]
    Kp = _round_up(max(flag_base + n, 128), 128)
    Hp = _round_up(max(n * d + n, 128), 128)
    Np = _round_up(max(d, 128), 128)
    W1 = jnp.zeros((Kp, Hp), jnp.float32)
    W2 = jnp.zeros((Hp, Np), jnp.float32)
    for i, m in enumerate(raw_mlps):
        W1 = W1.at[k_offs[i]:k_offs[i + 1], i * d:(i + 1) * d].set(m["w1"])
        W1 = W1.at[flag_base + i, i * d:(i + 1) * d].set(m["b1"])
        W1 = W1.at[flag_base + i, n * d + i].set(1.0)      # ones col -> layer-2 bias
        W2 = W2.at[i * d:(i + 1) * d, :d].set(m["w2"])
        W2 = W2.at[n * d + i, :d].set(m["b2"])
    return {"w1": W1.astype(dtype), "w2": W2.astype(dtype), "k_offs": k_offs,
            "flag_base": flag_base, "Kp": Kp, "Np": Np, "d": d, "n": n}


def fused_mlp2_apply(xs_list, fused):
    rows = [int(x.shape[0]) for x in xs_list]
    R = sum(rows)
    Rp = _round_up(max(R, 8), 8)
    X = jnp.zeros((Rp, fused["Kp"]), jnp.float32)
    r0 = 0
    for i, x in enumerate(xs_list):
        X = X.at[r0:r0 + rows[i], fused["k_offs"][i]:fused["k_offs"][i + 1]].set(x)
        X = X.at[r0:r0 + rows[i], fused["flag_base"] + i].set(1.0)
        r0 += rows[i]
    out = pallas_mlp2(X.astype(fused["w1"].dtype), fused["w1"], fused["w2"])
    outs, r0 = [], 0
    for r in rows:
        outs.append(out[r0:r0 + r, :fused["d"]])
        r0 += r
    return outs


def pack_tnt_layer(lins, d, dtype=jnp.bfloat16):
    # Row-stack the four per-scale (d,d) linears; per-scale biases live in the
    # flag K rows so one matmul does all four scales, bias included.
    n = len(lins)
    flag_base = n * d
    Kp = _round_up(max(flag_base + n, 128), 128)
    Np = _round_up(max(d, 128), 128)
    W = jnp.zeros((Kp, Np), jnp.float32)
    for s, (w, b) in enumerate(lins):
        W = W.at[s * d:(s + 1) * d, :d].set(w)
        W = W.at[flag_base + s, :d].set(b)
    return {"w": W.astype(dtype), "Kp": Kp, "Np": Np, "flag_base": flag_base, "d": d}


def pack_heads(Wc, bc, Wpc, bpc, Wproto, d):
    # classifier | person_classifier | prototypes column-stacked, f32 (proto
    # fidelity).  Biases in row d; prototype columns keep a zero bias row.
    ncols = [int(Wc.shape[1]), int(Wpc.shape[1]), int(Wproto.shape[1])]
    Kp = _round_up(d + 1, 128)
    Np = _round_up(max(sum(ncols), 128), 128)
    W = jnp.zeros((Kp, Np), jnp.float32)
    c = 0
    W = W.at[:d, c:c + ncols[0]].set(Wc)
    W = W.at[d, c:c + ncols[0]].set(bc)
    c += ncols[0]
    W = W.at[:d, c:c + ncols[1]].set(Wpc)
    W = W.at[d, c:c + ncols[1]].set(bpc)
    c += ncols[1]
    W = W.at[:d, c:c + ncols[2]].set(Wproto)
    return {"w": W, "ncols": ncols, "Kp": Kp, "Np": Np, "d": d}


def get_joint_graph(J):
    # TODO(synk): real adjacency is read from models/joint_graph.txt; using a
    # deterministic chain graph + self loops with row normalization instead.
    A = jnp.eye(J, dtype=jnp.float32)
    idx = jnp.arange(J - 1)
    A = A.at[idx, idx + 1].set(1.0)
    A = A.at[idx + 1, idx].set(1.0)
    return A / jnp.sum(A, axis=-1, keepdims=True)


class Args:
    pass


def make_args():
    a = Args()
    a.N = 4
    a.J = 13
    a.T = 4
    a.joint_initial_feat_dim = 16
    a.joint2person_feat_dim = a.joint_initial_feat_dim + 3
    a.TNT_hidden_dim = 32
    a.TNT_n_layers = 2
    a.num_gcn_layers = 2
    a.max_num_tokens = 4
    a.max_times_embed = a.T + 2
    a.image_h = 16
    a.image_w = 16
    a.num_classes = 8
    a.num_person_action_classes = 9
    a.nmb_prototypes = 10
    a.group_person_frame_idx = 0
    a.dataset_name = "volleyball"
    a.projection_batchnorm = False
    a.projection_dropout = 0.0
    a.classifier_use_batchnorm = False
    a.classifier_dropout = 0.0
    a.ball_trajectory_use = False
    return a


def make_params(args, seed=0):
    key = jax.random.PRNGKey(seed)
    ks = jax.random.split(key, 16)
    e = args.joint_initial_feat_dim
    d = args.TNT_hidden_dim
    p = {}
    p["joint_class_embed"] = init_embedding(ks[0], args.J, e)
    p["special_token_embed"] = init_embedding(ks[1], args.max_num_tokens, d)
    p["time_embed"] = init_embedding(ks[2], args.max_times_embed, e)
    # LearnedFourierFeatureTransform: 1x1 conv 2 -> e//2 (no bias) as a matmul.
    p["fourier"] = pack_linear(
        jax.random.normal(ks[3], (2, e // 2), dtype=jnp.float32), None,
        dtype=jnp.bfloat16)
    p["gcn"] = [pack_gcn_layer(*init_linear(k, e, e))
                for k in jax.random.split(ks[4], args.num_gcn_layers)]

    def raw_mlp(k, din):
        k1, k2 = jax.random.split(k)
        w1, b1 = init_linear(k1, din, d)
        w2, b2 = init_linear(k2, d, d)
        return {"w1": w1, "b1": b1, "w2": w2, "b2": b2}

    # joint + person projections fused (independent inputs).
    p["proj_jp"] = pack_fused_mlp2(
        [raw_mlp(ks[5], args.T * e * 4),
         raw_mlp(ks[6], args.J * args.T * args.joint2person_feat_dim)], d)
    # interaction + group projections fused (both consume person features).
    p["proj_ig"] = pack_fused_mlp2(
        [raw_mlp(ks[7], d * 2),
         raw_mlp(ks[8], (args.N // 2) * d)], d)
    # classifier + person classifier + prototypes in one f32 weight.
    Wc, bc = init_linear(ks[9], d, args.num_classes)
    Wpc, bpc = init_linear(ks[10], d, args.num_person_action_classes)
    Wproto, _ = init_linear(ks[11], d, args.nmb_prototypes)
    p["heads"] = pack_heads(Wc, bc, Wpc, bpc, Wproto, d)
    # surrogate TNT: per layer, one (d,d) linear per scale, block-stacked.
    p["tnt"] = [pack_tnt_layer([init_linear(k2, d, d)
                                for k2 in jax.random.split(lk, 4)], d)
                for lk in jax.random.split(ks[12], args.TNT_n_layers)]
    p["adj"] = get_joint_graph(args.J)
    return p


# -----------------------------------------------------------------------------
# TNT surrogate (four scales) — one Pallas call per layer, cls means fused
# -----------------------------------------------------------------------------
def tnt_forward(cls_tok, toks, tnt_layers, d, B):
    # TODO(synk): the real multi-scale TNT (models/tnt_four_scales.py) is an
    # external module; this surrogate keeps the interface/shapes (seq-first
    # tokens, per-layer [fine_cls, middle_cls, coarse_cls, group_cls,
    # group_tokens, person_tokens]).
    shapes = [t.shape for t in toks]
    rows = [int(s[0] * s[1]) for s in shapes]
    offs = [0]
    for r in rows:
        offs.append(offs[-1] + r)
    R = offs[-1]
    Rp = _round_up(max(R, 8), 8)
    Gp = _round_up(max(4 * B, 8), 8)
    # Per-(scale,batch) mean-pooling matrix (means = sel @ y in-kernel).
    sel_np = np.zeros((Gp, Rp), np.float32)
    for s in range(4):
        seq = int(shapes[s][0])
        for b in range(B):
            sel_np[s * B + b, offs[s] + b: offs[s] + seq * B: B] = 1.0 / seq
    sel = jnp.asarray(sel_np)

    cls = [cls_tok, cls_tok, cls_tok, cls_tok]
    outputs = []
    for layer in tnt_layers:
        X = jnp.zeros((Rp, layer["Kp"]), jnp.float32)
        for s in range(4):
            X = X.at[offs[s]:offs[s + 1], s * d:(s + 1) * d].set(
                toks[s].reshape(rows[s], d))
            X = X.at[offs[s]:offs[s + 1], layer["flag_base"] + s].set(1.0)
        y, means = pallas_tnt_layer(X.astype(layer["w"].dtype), layer["w"], sel)
        toks = [y[offs[s]:offs[s + 1], :d].reshape(shapes[s][0], shapes[s][1], d)
                for s in range(4)]
        cls = [cls[s] + means[s * B:(s + 1) * B, :d][None] for s in range(4)]
        outputs.append([cls[0], cls[1], cls[2], cls[3], toks[3], toks[1]])
    return outputs


# -----------------------------------------------------------------------------
# COMPOSER forward (volleyball branch, ball_trajectory_use = False)
# -----------------------------------------------------------------------------
def composer_forward(params, args, joint_feats_thisbatch, ball_feats_thisbatch):
    # TODO(synk): collective/kmeans branch and ball-trajectory branch are not
    # implemented (volleyball, ball_trajectory_use=False only).
    B, N, J, T, _ = joint_feats_thisbatch.shape
    e = args.joint_initial_feat_dim
    d = args.TNT_hidden_dim
    L = args.TNT_n_layers
    interaction_indexes = jnp.array(
        [args.N * i + j for i in range(args.N) for j in range(args.N) if j != i],
        dtype=jnp.int32)

    jf = jnp.asarray(joint_feats_thisbatch, jnp.float32)
    joint_feats_for_person = jf[..., :args.joint2person_feat_dim]
    image_coords = jf[..., -2:].astype(jnp.int32)               # (x, y)

    # --- Learned Fourier features over the image grid (1x1 conv == matmul) ---
    coords_h = jnp.arange(args.image_h, dtype=jnp.float32) / args.image_h
    coords_w = jnp.arange(args.image_w, dtype=jnp.float32) / args.image_w
    gw, gh = jnp.meshgrid(coords_w, coords_h)                   # (H, W)
    grid_flat = jnp.stack([gw, gh], axis=-1).reshape(-1, 2)
    fy = pallas_matmul(pad_act(grid_flat, params["fourier"]),
                       params["fourier"]["w"])[:, :e // 2]
    fy = 2.0 * jnp.pi * fy
    image_coords_learned = jnp.concatenate([jnp.sin(fy), jnp.cos(fy)], axis=-1)
    image_coords_learned = image_coords_learned.reshape(args.image_h, args.image_w, e)
    image_coords_embeded = image_coords_learned[image_coords[..., 1],
                                                image_coords[..., 0]]

    jf = jf[..., :-2]                                           # drop (x, y)

    # --- time embedding ---
    time_ids = jnp.broadcast_to(jnp.arange(1, T + 1), (B, N, J, T))
    time_seq = params["time_embed"][time_ids]

    # --- joint class embedding + fused GCN (no kron; gridded over graphs) ---
    joint_class_ids = jf[..., -1].astype(jnp.int32)
    joint_classes_embeded = params["joint_class_embed"][joint_class_ids]
    Bn = B * N * T
    Jp = _round_up(J, 8)
    Ep = params["gcn"][0]["w"].shape[0]
    G_PER_STEP = 8
    Bn_pad = _round_up(Bn, G_PER_STEP)
    x = jnp.transpose(joint_classes_embeded, (0, 1, 3, 2, 4)).reshape(Bn, J, e)
    xg = (jnp.zeros((Bn_pad, Jp, Ep), jnp.float32)
          .at[:Bn, :J, :e].set(x).reshape(Bn_pad * Jp, Ep))
    adj_p = jnp.zeros((Jp, Jp), jnp.float32).at[:J, :J].set(params["adj"])
    enc = pallas_gcn(xg, adj_p, params["gcn"], G_PER_STEP, Jp)
    joint_classes_encode = enc.reshape(Bn_pad, Jp, Ep)[:Bn, :J, :e]
    joint_classes_encode = jnp.transpose(
        joint_classes_encode.reshape(B, N, T, J, e), (0, 1, 3, 2, 4))
    jf = jf[..., :-1]                                           # drop class id

    # --- CLS token ---
    CLS = jnp.broadcast_to(params["special_token_embed"][0], (B, 1, d))

    # --- joint + person track projections (ONE fused block-stacked call) ---
    composite = jnp.concatenate(
        [jf, time_seq, image_coords_embeded, joint_classes_encode], axis=-1)
    joint_in = composite.reshape(B * N * J, T * 4 * e)
    person_in = joint_feats_for_person.reshape(B * N, -1)
    joint_out, person_out = fused_mlp2_apply([joint_in, person_in],
                                             params["proj_jp"])
    joint_track_proj = joint_out.reshape(B, N * J, d)
    person_track_proj = person_out.reshape(B, N, d)

    # --- interaction + group track projections (second fused call) ---
    tem1 = jnp.repeat(person_track_proj, N, axis=1)             # row N*i+j -> person i
    tem2 = jnp.tile(person_track_proj, (1, N, 1))               # row N*i+j -> person j
    inter_feats = jnp.concatenate([tem1, tem2], axis=-1)[:, interaction_indexes, :]
    inter_in = inter_feats.reshape(B * N * (N - 1), 2 * d)

    fidx = args.group_person_frame_idx
    hips = (joint_feats_for_person[:, :, 11, fidx, -2:]
            + joint_feats_for_person[:, :, 12, fidx, -2:]) / 2.0
    order = jnp.argsort(hips[:, :, 0], axis=-1)
    left_idx = order[:, :N // 2]
    right_idx = order[:, N // 2:]
    left_rep = jnp.take_along_axis(person_track_proj, left_idx[..., None], axis=1)
    right_rep = jnp.take_along_axis(person_track_proj, right_idx[..., None], axis=1)
    group_in = jnp.concatenate(
        [left_rep.reshape(B, -1), right_rep.reshape(B, -1)], axis=0)   # (2B, N//2*d)

    inter_out, group_out = fused_mlp2_apply([inter_in, group_in], params["proj_ig"])
    inter_track_proj = inter_out.reshape(B, N * (N - 1), d)
    group_track_proj = jnp.stack([group_out[:B], group_out[B:]], axis=1)  # (B, 2, d)

    # --- TNT (surrogate) over the four scales, tokens seq-first ---
    outputs = tnt_forward(
        jnp.transpose(CLS, (1, 0, 2)),
        [jnp.transpose(joint_track_proj, (1, 0, 2)),
         jnp.transpose(person_track_proj, (1, 0, 2)),
         jnp.transpose(inter_track_proj, (1, 0, 2)),
         jnp.transpose(group_track_proj, (1, 0, 2))],
        params["tnt"], d, B)

    # --- all classification heads + prototypes in ONE Pallas call ---
    heads = params["heads"]
    cls_all = jnp.concatenate(
        [outputs[l][s][0] for l in range(L) for s in range(4)], axis=0)  # (L*4*B, d)
    person_all = jnp.concatenate(
        [jnp.transpose(outputs[l][5], (1, 0, 2)).reshape(B * N, d) for l in range(L)],
        axis=0)                                                          # (L*B*N, d)
    last_cls = jnp.concatenate([outputs[L - 1][s][0] for s in range(4)], axis=0)
    ss = jnp.sum(last_cls * last_cls, axis=-1, keepdims=True)
    last_cls_n = last_cls * jax.lax.rsqrt(jnp.maximum(ss, 1e-24))        # F.normalize

    n_cls, n_per, n_pro = (cls_all.shape[0], person_all.shape[0],
                           last_cls_n.shape[0])
    R = n_cls + n_per + n_pro
    Rp = _round_up(max(R, 8), 8)
    hx = jnp.zeros((Rp, heads["Kp"]), jnp.float32)
    hx = hx.at[:n_cls, :d].set(cls_all)
    hx = hx.at[n_cls:n_cls + n_per, :d].set(person_all)
    hx = hx.at[n_cls + n_per:R, :d].set(last_cls_n)
    hx = hx.at[:R, d].set(1.0)                 # bias column (proto bias row is 0)
    hout = pallas_matmul(hx, heads["w"])
    c0 = heads["ncols"][0]
    c1 = c0 + heads["ncols"][1]
    c2 = c1 + heads["ncols"][2]
    logits_all = hout[:n_cls, :c0]
    person_logits_all = hout[n_cls:n_cls + n_per, c0:c1]
    scores_all = hout[n_cls + n_per:R, c1:c2]

    pred_logits = [[logits_all[(l * 4 + s) * B:(l * 4 + s + 1) * B]
                    for s in range(4)] for l in range(L)]
    pred_logits_person = [person_logits_all[l * B * N:(l + 1) * B * N]
                          for l in range(L)]
    scores = [scores_all[s * B:(s + 1) * B] for s in range(4)]
    return pred_logits, pred_logits_person, scores


# -----------------------------------------------------------------------------
# Main
# -----------------------------------------------------------------------------
if __name__ == "__main__":
    args = make_args()
    params = make_params(args, seed=0)

    B, N, J, T = 2, args.N, args.J, args.T
    e = args.joint_initial_feat_dim

    key = jax.random.PRNGKey(0)
    k1, k2, k3, k4 = jax.random.split(key, 4)
    feats_cont = jax.random.normal(k1, (B, N, J, T, e), dtype=jnp.float32)
    class_ids = jnp.broadcast_to(
        jnp.arange(J, dtype=jnp.float32)[None, None, :, None], (B, N, J, T))
    coords_x = jax.random.randint(k2, (B, N, J, T), 0, args.image_w).astype(jnp.float32)
    coords_y = jax.random.randint(k3, (B, N, J, T), 0, args.image_h).astype(jnp.float32)
    joint_feats = jnp.concatenate(
        [feats_cont, class_ids[..., None], coords_x[..., None], coords_y[..., None]],
        axis=-1)                                                 # (B,N,J,T, e+3)
    ball_feats = jax.random.normal(k4, (B, T, 6), dtype=jnp.float32)  # unused

    forward = jax.jit(lambda jfb, bfb: composer_forward(params, args, jfb, bfb))

    pred_logits, pred_logits_person, scores = forward(joint_feats, ball_feats)
    jax.block_until_ready((pred_logits, pred_logits_person, scores))
    print("KERNEL_OK")
</pallas_src>

<mosaic_0001>
module attributes {stable_mosaic.version = 11 : i64} {
  func.func @_gcn_kernel(%arg0: i32, %arg1: memref<128x128xf32, #tpu.memory_space<vmem>>, %arg2: memref<16x16xf32, #tpu.memory_space<vmem>>, %arg3: memref<128x128xbf16, #tpu.memory_space<vmem>>, %arg4: memref<1x128xf32, #tpu.memory_space<vmem>>, %arg5: memref<128x128xbf16, #tpu.memory_space<vmem>>, %arg6: memref<1x128xf32, #tpu.memory_space<vmem>>, %arg7: memref<128x128xf32, #tpu.memory_space<vmem>>) attributes {dimension_semantics = [#tpu.dimension_semantics<parallel>], iteration_bounds = array<i64: 4>, scalar_prefetch = 0 : i64, scratch_operands = 0 : i64, tpu.core_type = #tpu.core_type<tc>, window_params = [{transform_indices = @transform_0, window_bounds = array<i64: 128, 128>}, {pipeline_mode = #tpu.pipeline_mode<synchronous>, transform_indices = @transform_1, window_bounds = array<i64: 16, 16>}, {pipeline_mode = #tpu.pipeline_mode<synchronous>, transform_indices = @transform_2, window_bounds = array<i64: 128, 128>}, {pipeline_mode = #tpu.pipeline_mode<synchronous>, transform_indices = @transform_3, window_bounds = array<i64: 1, 128>}, {pipeline_mode = #tpu.pipeline_mode<synchronous>, transform_indices = @transform_4, window_bounds = array<i64: 128, 128>}, {pipeline_mode = #tpu.pipeline_mode<synchronous>, transform_indices = @transform_5, window_bounds = array<i64: 1, 128>}, {transform_indices = @transform_6, window_bounds = array<i64: 128, 128>}]} {
    %c0 = arith.constant 0 : index
    %c0_0 = arith.constant 0 : index
    %0 = vector.load %arg2[%c0, %c0_0] : memref<16x16xf32, #tpu.memory_space<vmem>>, vector<16x16xf32>
    %c0_1 = arith.constant 0 : index
    %c0_2 = arith.constant 0 : index
    %1 = vector.load %arg1[%c0_1, %c0_2] : memref<128x128xf32, #tpu.memory_space<vmem>>, vector<128x128xf32>
    %c0_3 = arith.constant 0 : index
    %c0_4 = arith.constant 0 : index
    %2 = vector.load %arg3[%c0_3, %c0_4] : memref<128x128xbf16, #tpu.memory_space<vmem>>, vector<128x128xbf16>
    %c0_5 = arith.constant 0 : index
    %c0_6 = arith.constant 0 : index
    %3 = vector.load %arg4[%c0_5, %c0_6] : memref<1x128xf32, #tpu.memory_space<vmem>>, vector<1x128xf32>
    %4 = arith.truncf %1 : vector<128x128xf32> to vector<128x128xbf16>
    %cst = arith.constant dense<0.000000e+00> : vector<128x128xf32>
    %5 = tpu.matmul %4, %2, %cst {dimension_numbers = #tpu.dot_dimension_numbers<[1], [0], [0], [1], [0, 0, 1, 1], [], []>} : vector<128x128xbf16>, vector<128x128xbf16>, vector<128x128xf32> -> vector<128x128xf32>
    %6 = vector.extract_strided_slice %5 {offsets = [0, 0], sizes = [16, 128], strides = [1, 1]} : vector<128x128xf32> to vector<16x128xf32>
    %cst_7 = arith.constant dense<0.000000e+00> : vector<16x128xf32>
    %7 = tpu.matmul %0, %6, %cst_7 {dimension_numbers = #tpu.dot_dimension_numbers<[1], [0], [0], [1], [0, 0, 1, 1], [], []>} : vector<16x16xf32>, vector<16x128xf32>, vector<16x128xf32> -> vector<16x128xf32>
    %8 = vector.extract_strided_slice %5 {offsets = [16, 0], sizes = [16, 128], strides = [1, 1]} : vector<128x128xf32> to vector<16x128xf32>
    %cst_8 = arith.constant dense<0.000000e+00> : vector<16x128xf32>
    %9 = tpu.matmul %0, %8, %cst_8 {dimension_numbers = #tpu.dot_dimension_numbers<[1], [0], [0], [1], [0, 0, 1, 1], [], []>} : vector<16x16xf32>, vector<16x128xf32>, vector<16x128xf32> -> vector<16x128xf32>
    %10 = vector.extract_strided_slice %5 {offsets = [32, 0], sizes = [16, 128], strides = [1, 1]} : vector<128x128xf32> to vector<16x128xf32>
    %cst_9 = arith.constant dense<0.000000e+00> : vector<16x128xf32>
    %11 = tpu.matmul %0, %10, %cst_9 {dimension_numbers = #tpu.dot_dimension_numbers<[1], [0], [0], [1], [0, 0, 1, 1], [], []>} : vector<16x16xf32>, vector<16x128xf32>, vector<16x128xf32> -> vector<16x128xf32>
    %12 = vector.extract_strided_slice %5 {offsets = [48, 0], sizes = [16, 128], strides = [1, 1]} : vector<128x128xf32> to vector<16x128xf32>
    %cst_10 = arith.constant dense<0.000000e+00> : vector<16x128xf32>
    %13 = tpu.matmul %0, %12, %cst_10 {dimension_numbers = #tpu.dot_dimension_numbers<[1], [0], [0], [1], [0, 0, 1, 1], [], []>} : vector<16x16xf32>, vector<16x128xf32>, vector<16x128xf32> -> vector<16x128xf32>
    %14 = vector.extract_strided_slice %5 {offsets = [64, 0], sizes = [16, 128], strides = [1, 1]} : vector<128x128xf32> to vector<16x128xf32>
    %cst_11 = arith.constant dense<0.000000e+00> : vector<16x128xf32>
    %15 = tpu.matmul %0, %14, %cst_11 {dimension_numbers = #tpu.dot_dimension_numbers<[1], [0], [0], [1], [0, 0, 1, 1], [], []>} : vector<16x16xf32>, vector<16x128xf32>, vector<16x128xf32> -> vector<16x128xf32>
    %16 = vector.extract_strided_slice %5 {offsets = [80, 0], sizes = [16, 128], strides = [1, 1]} : vector<128x128xf32> to vector<16x128xf32>
    %cst_12 = arith.constant dense<0.000000e+00> : vector<16x128xf32>
    %17 = tpu.matmul %0, %16, %cst_12 {dimension_numbers = #tpu.dot_dimension_numbers<[1], [0], [0], [1], [0, 0, 1, 1], [], []>} : vector<16x16xf32>, vector<16x128xf32>, vector<16x128xf32> -> vector<16x128xf32>
    %18 = vector.extract_strided_slice %5 {offsets = [96, 0], sizes = [16, 128], strides = [1, 1]} : vector<128x128xf32> to vector<16x128xf32>
    %cst_13 = arith.constant dense<0.000000e+00> : vector<16x128xf32>
    %19 = tpu.matmul %0, %18, %cst_13 {dimension_numbers = #tpu.dot_dimension_numbers<[1], [0], [0], [1], [0, 0, 1, 1], [], []>} : vector<16x16xf32>, vector<16x128xf32>, vector<16x128xf32> -> vector<16x128xf32>
    %20 = vector.extract_strided_slice %5 {offsets = [112, 0], sizes = [16, 128], strides = [1, 1]} : vector<128x128xf32> to vector<16x128xf32>
    %cst_14 = arith.constant dense<0.000000e+00> : vector<16x128xf32>
    %21 = tpu.matmul %0, %20, %cst_14 {dimension_numbers = #tpu.dot_dimension_numbers<[1], [0], [0], [1], [0, 0, 1, 1], [], []>} : vector<16x16xf32>, vector<16x128xf32>, vector<16x128xf32> -> vector<16x128xf32>
    %22 = tpu.concatenate %7, %9, %11, %13, %15, %17, %19, %21 in 0 : vector<16x128xf32>, vector<16x128xf32>, vector<16x128xf32>, vector<16x128xf32>, vector<16x128xf32>, vector<16x128xf32>, vector<16x128xf32>, vector<16x128xf32> -> vector<128x128xf32>
    %23 = vector.broadcast %3 : vector<1x128xf32> to vector<128x128xf32>
    %24 = arith.addf %22, %23 : vector<128x128xf32>
    %cst_15 = arith.constant 0.000000e+00 : f32
    %25 = vector.broadcast %cst_15 : f32 to vector<128x128xf32>
    %26 = arith.maximumf %24, %25 : vector<128x128xf32>
    %c0_16 = arith.constant 0 : index
    %c0_17 = arith.constant 0 : index
    %27 = vector.load %arg5[%c0_16, %c0_17] : memref<128x128xbf16, #tpu.memory_space<vmem>>, vector<128x128xbf16>
    %c0_18 = arith.constant 0 : index
    %c0_19 = arith.constant 0 : index
    %28 = vector.load %arg6[%c0_18, %c0_19] : memref<1x128xf32, #tpu.memory_space<vmem>>, vector<1x128xf32>
    %29 = arith.truncf %26 : vector<128x128xf32> to vector<128x128xbf16>
    %cst_20 = arith.constant dense<0.000000e+00> : vector<128x128xf32>
    %30 = tpu.matmul %29, %27, %cst_20 {dimension_numbers = #tpu.dot_dimension_numbers<[1], [0], [0], [1], [0, 0, 1, 1], [], []>} : vector<128x128xbf16>, vector<128x128xbf16>, vector<128x128xf32> -> vector<128x128xf32>
    %31 = vector.extract_strided_slice %30 {offsets = [0, 0], sizes = [16, 128], strides = [1, 1]} : vector<128x128xf32> to vector<16x128xf32>
    %cst_21 = arith.constant dense<0.000000e+00> : vector<16x128xf32>
    %32 = tpu.matmul %0, %31, %cst_21 {dimension_numbers = #tpu.dot_dimension_numbers<[1], [0], [0], [1], [0, 0, 1, 1], [], []>} : vector<16x16xf32>, vector<16x128xf32>, vector<16x128xf32> -> vector<16x128xf32>
    %33 = vector.extract_strided_slice %30 {offsets = [16, 0], sizes = [16, 128], strides = [1, 1]} : vector<128x128xf32> to vector<16x128xf32>
    %cst_22 = arith.constant dense<0.000000e+00> : vector<16x128xf32>
    %34 = tpu.matmul %0, %33, %cst_22 {dimension_numbers = #tpu.dot_dimension_numbers<[1], [0], [0], [1], [0, 0, 1, 1], [], []>} : vector<16x16xf32>, vector<16x128xf32>, vector<16x128xf32> -> vector<16x128xf32>
    %35 = vector.extract_strided_slice %30 {offsets = [32, 0], sizes = [16, 128], strides = [1, 1]} : vector<128x128xf32> to vector<16x128xf32>
    %cst_23 = arith.constant dense<0.000000e+00> : vector<16x128xf32>
    %36 = tpu.matmul %0, %35, %cst_23 {dimension_numbers = #tpu.dot_dimension_numbers<[1], [0], [0], [1], [0, 0, 1, 1], [], []>} : vector<16x16xf32>, vector<16x128xf32>, vector<16x128xf32> -> vector<16x128xf32>
    %37 = vector.extract_strided_slice %30 {offsets = [48, 0], sizes = [16, 128], strides = [1, 1]} : vector<128x128xf32> to vector<16x128xf32>
    %cst_24 = arith.constant dense<0.000000e+00> : vector<16x128xf32>
    %38 = tpu.matmul %0, %37, %cst_24 {dimension_numbers = #tpu.dot_dimension_numbers<[1], [0], [0], [1], [0, 0, 1, 1], [], []>} : vector<16x16xf32>, vector<16x128xf32>, vector<16x128xf32> -> vector<16x128xf32>
    %39 = vector.extract_strided_slice %30 {offsets = [64, 0], sizes = [16, 128], strides = [1, 1]} : vector<128x128xf32> to vector<16x128xf32>
    %cst_25 = arith.constant dense<0.000000e+00> : vector<16x128xf32>
    %40 = tpu.matmul %0, %39, %cst_25 {dimension_numbers = #tpu.dot_dimension_numbers<[1], [0], [0], [1], [0, 0, 1, 1], [], []>} : vector<16x16xf32>, vector<16x128xf32>, vector<16x128xf32> -> vector<16x128xf32>
    %41 = vector.extract_strided_slice %30 {offsets = [80, 0], sizes = [16, 128], strides = [1, 1]} : vector<128x128xf32> to vector<16x128xf32>
    %cst_26 = arith.constant dense<0.000000e+00> : vector<16x128xf32>
    %42 = tpu.matmul %0, %41, %cst_26 {dimension_numbers = #tpu.dot_dimension_numbers<[1], [0], [0], [1], [0, 0, 1, 1], [], []>} : vector<16x16xf32>, vector<16x128xf32>, vector<16x128xf32> -> vector<16x128xf32>
    %43 = vector.extract_strided_slice %30 {offsets = [96, 0], sizes = [16, 128], strides = [1, 1]} : vector<128x128xf32> to vector<16x128xf32>
    %cst_27 = arith.constant dense<0.000000e+00> : vector<16x128xf32>
    %44 = tpu.matmul %0, %43, %cst_27 {dimension_numbers = #tpu.dot_dimension_numbers<[1], [0], [0], [1], [0, 0, 1, 1], [], []>} : vector<16x16xf32>, vector<16x128xf32>, vector<16x128xf32> -> vector<16x128xf32>
    %45 = vector.extract_strided_slice %30 {offsets = [112, 0], sizes = [16, 128], strides = [1, 1]} : vector<128x128xf32> to vector<16x128xf32>
    %cst_28 = arith.constant dense<0.000000e+00> : vector<16x128xf32>
    %46 = tpu.matmul %0, %45, %cst_28 {dimension_numbers = #tpu.dot_dimension_numbers<[1], [0], [0], [1], [0, 0, 1, 1], [], []>} : vector<16x16xf32>, vector<16x128xf32>, vector<16x128xf32> -> vector<16x128xf32>
    %47 = tpu.concatenate %32, %34, %36, %38, %40, %42, %44, %46 in 0 : vector<16x128xf32>, vector<16x128xf32>, vector<16x128xf32>, vector<16x128xf32>, vector<16x128xf32>, vector<16x128xf32>, vector<16x128xf32>, vector<16x128xf32> -> vector<128x128xf32>
    %48 = vector.broadcast %28 : vector<1x128xf32> to vector<128x128xf32>
    %49 = arith.addf %47, %48 : vector<128x128xf32>
    %cst_29 = arith.constant 0.000000e+00 : f32
    %50 = vector.broadcast %cst_29 : f32 to vector<128x128xf32>
    %51 = arith.maximumf %49, %50 : vector<128x128xf32>
    %c0_30 = arith.constant 0 : index
    %c0_31 = arith.constant 0 : index
    %52 = vector.load %arg7[%c0_30, %c0_31] : memref<128x128xf32, #tpu.memory_space<vmem>>, vector<128x128xf32>
    tpu.vector_store %arg7[%c0_30, %c0_31], %51 {strides = array<i32>} : memref<128x128xf32, #tpu.memory_space<vmem>>, vector<128x128xf32>,
    return
  }
  func.func @transform_0(%arg0: i32) -> (i32, i32) {
    %c0_i32 = arith.constant 0 : i32
    %c0_i32_0 = arith.constant 0 : i32
    return %arg0, %c0_i32 : i32, i32
  }
  func.func @transform_1(%arg0: i32) -> (i32, i32) {
    %c0_i32 = arith.constant 0 : i32
    %c0_i32_0 = arith.constant 0 : i32
    %c0_i32_1 = arith.constant 0 : i32
    return %c0_i32, %c0_i32_0 : i32, i32
  }
  func.func @transform_2(%arg0: i32) -> (i32, i32) {
    %c0_i32 = arith.constant 0 : i32
    %c0_i32_0 = arith.constant 0 : i32
    %c0_i32_1 = arith.constant 0 : i32
    return %c0_i32, %c0_i32_0 : i32, i32
  }
  func.func @transform_3(%arg0: i32) -> (i32, i32) {
    %c0_i32 = arith.constant 0 : i32
    %c0_i32_0 = arith.constant 0 : i32
    %c0_i32_1 = arith.constant 0 : i32
    return %c0_i32, %c0_i32_0 : i32, i32
  }
  func.func @transform_4(%arg0: i32) -> (i32, i32) {
    %c0_i32 = arith.constant 0 : i32
    %c0_i32_0 = arith.constant 0 : i32
    %c0_i32_1 = arith.constant 0 : i32
    return %c0_i32, %c0_i32_0 : i32, i32
  }
  func.func @transform_5(%arg0: i32) -> (i32, i32) {
    %c0_i32 = arith.constant 0 : i32
    %c0_i32_0 = arith.constant 0 : i32
    %c0_i32_1 = arith.constant 0 : i32
    return %c0_i32, %c0_i32_0 : i32, i32
  }
  func.func @transform_6(%arg0: i32) -> (i32, i32) {
    %c0_i32 = arith.constant 0 : i32
    %c0_i32_0 = arith.constant 0 : i32
    return %arg0, %c0_i32 : i32, i32
  }
}

module attributes {stable_mosaic.version = 11 : i64} {
  func.func @_matmul_kernel(%arg0: i32, %arg1: memref<128x128xbf16, #tpu.memory_space<vmem>>, %arg2: memref<128x128xbf16, #tpu.memory_space<vmem>>, %arg3: memref<128x128xf32, #tpu.memory_space<vmem>>) attributes {dimension_semantics = [#tpu.dimension_semantics<parallel>], iteration_bounds = array<i64: 2>, scalar_prefetch = 0 : i64, scratch_operands = 0 : i64, tpu.core_type = #tpu.core_type<tc>, window_params = [{transform_indices = @transform_0, window_bounds = array<i64: 128, 128>}, {pipeline_mode = #tpu.pipeline_mode<synchronous>, transform_indices = @transform_1, window_bounds = array<i64: 128, 128>}, {transform_indices = @transform_2, window_bounds = array<i64: 128, 128>}]} {
    %c0 = arith.constant 0 : index
    %c0_0 = arith.constant 0 : index
    %0 = vector.load %arg1[%c0, %c0_0] : memref<128x128xbf16, #tpu.memory_space<vmem>>, vector<128x128xbf16>
    %c0_1 = arith.constant 0 : index
    %c0_2 = arith.constant 0 : index
    %1 = vector.load %arg2[%c0_1, %c0_2] : memref<128x128xbf16, #tpu.memory_space<vmem>>, vector<128x128xbf16>
    %cst = arith.constant dense<0.000000e+00> : vector<128x128xf32>
    %2 = tpu.matmul %0, %1, %cst {dimension_numbers = #tpu.dot_dimension_numbers<[1], [0], [0], [1], [0, 0, 1, 1], [], []>} : vector<128x128xbf16>, vector<128x128xbf16>, vector<128x128xf32> -> vector<128x128xf32>
    %c0_3 = arith.constant 0 : index
    %c0_4 = arith.constant 0 : index
    %3 = vector.load %arg3[%c0_3, %c0_4] : memref<128x128xf32, #tpu.memory_space<vmem>>, vector<128x128xf32>
    tpu.vector_store %arg3[%c0_3, %c0_4], %2 {strides = array<i32>} : memref<128x128xf32, #tpu.memory_space<vmem>>, vector<128x128xf32>,
    return
  }
  func.func @transform_0(%arg0: i32) -> (i32, i32) {
    %c0_i32 = arith.constant 0 : i32
    %c0_i32_0 = arith.constant 0 : i32
    return %arg0, %c0_i32 : i32, i32
  }
  func.func @transform_1(%arg0: i32) -> (i32, i32) {
    %c0_i32 = arith.constant 0 : i32
    %c0_i32_0 = arith.constant 0 : i32
    %c0_i32_1 = arith.constant 0 : i32
    return %c0_i32, %c0_i32_0 : i32, i32
  }
  func.func @transform_2(%arg0: i32) -> (i32, i32) {
    %c0_i32 = arith.constant 0 : i32
    %c0_i32_0 = arith.constant 0 : i32
    return %arg0, %c0_i32 : i32, i32
  }
}

module attributes {stable_mosaic.version = 11 : i64} {
  func.func @_mlp2_kernel(%arg0: i32, %arg1: memref<112x1280xbf16, #tpu.memory_space<vmem>>, %arg2: memref<1280x128xbf16, #tpu.memory_space<vmem>>, %arg3: memref<128x128xbf16, #tpu.memory_space<vmem>>, %arg4: memref<112x128xf32, #tpu.memory_space<vmem>>) attributes {dimension_semantics = [#tpu.dimension_semantics<parallel>], iteration_bounds = array<i64: 1>, scalar_prefetch = 0 : i64, scratch_operands = 0 : i64, tpu.core_type = #tpu.core_type<tc>, window_params = [{transform_indices = @transform_0, window_bounds = array<i64: 112, 1280>}, {pipeline_mode = #tpu.pipeline_mode<synchronous>, transform_indices = @transform_1, window_bounds = array<i64: 1280, 128>}, {pipeline_mode = #tpu.pipeline_mode<synchronous>, transform_indices = @transform_2, window_bounds = array<i64: 128, 128>}, {transform_indices = @transform_3, window_bounds = array<i64: 112, 128>}]} {
    %c0 = arith.constant 0 : index
    %c0_0 = arith.constant 0 : index
    %0 = vector.load %arg1[%c0, %c0_0] : memref<112x1280xbf16, #tpu.memory_space<vmem>>, vector<112x1280xbf16>
    %c0_1 = arith.constant 0 : index
    %c0_2 = arith.constant 0 : index
    %1 = vector.load %arg2[%c0_1, %c0_2] : memref<1280x128xbf16, #tpu.memory_space<vmem>>, vector<1280x128xbf16>
    %cst = arith.constant dense<0.000000e+00> : vector<112x128xf32>
    %2 = tpu.matmul %0, %1, %cst {dimension_numbers = #tpu.dot_dimension_numbers<[1], [0], [0], [1], [0, 0, 1, 1], [], []>} : vector<112x1280xbf16>, vector<1280x128xbf16>, vector<112x128xf32> -> vector<112x128xf32>
    %cst_3 = arith.constant 0.000000e+00 : f32
    %3 = vector.broadcast %cst_3 : f32 to vector<112x128xf32>
    %4 = arith.maximumf %2, %3 : vector<112x128xf32>
    %5 = arith.truncf %4 : vector<112x128xf32> to vector<112x128xbf16>
    %c0_4 = arith.constant 0 : index
    %c0_5 = arith.constant 0 : index
    %6 = vector.load %arg3[%c0_4, %c0_5] : memref<128x128xbf16, #tpu.memory_space<vmem>>, vector<128x128xbf16>
    %cst_6 = arith.constant dense<0.000000e+00> : vector<112x128xf32>
    %7 = tpu.matmul %5, %6, %cst_6 {dimension_numbers = #tpu.dot_dimension_numbers<[1], [0], [0], [1], [0, 0, 1, 1], [], []>} : vector<112x128xbf16>, vector<128x128xbf16>, vector<112x128xf32> -> vector<112x128xf32>
    %c0_7 = arith.constant 0 : index
    %c0_8 = arith.constant 0 : index
    %8 = vector.load %arg4[%c0_7, %c0_8] : memref<112x128xf32, #tpu.memory_space<vmem>>, vector<112x128xf32>
    tpu.vector_store %arg4[%c0_7, %c0_8], %7 {strides = array<i32>} : memref<112x128xf32, #tpu.memory_space<vmem>>, vector<112x128xf32>,
    return
  }
  func.func @transform_0(%arg0: i32) -> (i32, i32) {
    %c0_i32 = arith.constant 0 : i32
    %c0_i32_0 = arith.constant 0 : i32
    return %arg0, %c0_i32 : i32, i32
  }
  func.func @transform_1(%arg0: i32) -> (i32, i32) {
    %c0_i32 = arith.constant 0 : i32
    %c0_i32_0 = arith.constant 0 : i32
    %c0_i32_1 = arith.constant 0 : i32
    return %c0_i32, %c0_i32_0 : i32, i32
  }
  func.func @transform_2(%arg0: i32) -> (i32, i32) {
    %c0_i32 = arith.constant 0 : i32
    %c0_i32_0 = arith.constant 0 : i32
    %c0_i32_1 = arith.constant 0 : i32
    return %c0_i32, %c0_i32_0 : i32, i32
  }
  func.func @transform_3(%arg0: i32) -> (i32, i32) {
    %c0_i32 = arith.constant 0 : i32
    %c0_i32_0 = arith.constant 0 : i32
    return %arg0, %c0_i32 : i32, i32
  }
}

module attributes {stable_mosaic.version = 11 : i64} {
  func.func @_mlp2_kernel(%arg0: i32, %arg1: memref<32x256xbf16, #tpu.memory_space<vmem>>, %arg2: memref<256x128xbf16, #tpu.memory_space<vmem>>, %arg3: memref<128x128xbf16, #tpu.memory_space<vmem>>, %arg4: memref<32x128xf32, #tpu.memory_space<vmem>>) attributes {dimension_semantics = [#tpu.dimension_semantics<parallel>], iteration_bounds = array<i64: 1>, scalar_prefetch = 0 : i64, scratch_operands = 0 : i64, tpu.core_type = #tpu.core_type<tc>, window_params = [{transform_indices = @transform_0, window_bounds = array<i64: 32, 256>}, {pipeline_mode = #tpu.pipeline_mode<synchronous>, transform_indices = @transform_1, window_bounds = array<i64: 256, 128>}, {pipeline_mode = #tpu.pipeline_mode<synchronous>, transform_indices = @transform_2, window_bounds = array<i64: 128, 128>}, {transform_indices = @transform_3, window_bounds = array<i64: 32, 128>}]} {
    %c0 = arith.constant 0 : index
    %c0_0 = arith.constant 0 : index
    %0 = vector.load %arg1[%c0, %c0_0] : memref<32x256xbf16, #tpu.memory_space<vmem>>, vector<32x256xbf16>
    %c0_1 = arith.constant 0 : index
    %c0_2 = arith.constant 0 : index
    %1 = vector.load %arg2[%c0_1, %c0_2] : memref<256x128xbf16, #tpu.memory_space<vmem>>, vector<256x128xbf16>
    %cst = arith.constant dense<0.000000e+00> : vector<32x128xf32>
    %2 = tpu.matmul %0, %1, %cst {dimension_numbers = #tpu.dot_dimension_numbers<[1], [0], [0], [1], [0, 0, 1, 1], [], []>} : vector<32x256xbf16>, vector<256x128xbf16>, vector<32x128xf32> -> vector<32x128xf32>
    %cst_3 = arith.constant 0.000000e+00 : f32
    %3 = vector.broadcast %cst_3 : f32 to vector<32x128xf32>
    %4 = arith.maximumf %2, %3 : vector<32x128xf32>
    %5 = arith.truncf %4 : vector<32x128xf32> to vector<32x128xbf16>
    %c0_4 = arith.constant 0 : index
    %c0_5 = arith.constant 0 : index
    %6 = vector.load %arg3[%c0_4, %c0_5] : memref<128x128xbf16, #tpu.memory_space<vmem>>, vector<128x128xbf16>
    %cst_6 = arith.constant dense<0.000000e+00> : vector<32x128xf32>
    %7 = tpu.matmul %5, %6, %cst_6 {dimension_numbers = #tpu.dot_dimension_numbers<[1], [0], [0], [1], [0, 0, 1, 1], [], []>} : vector<32x128xbf16>, vector<128x128xbf16>, vector<32x128xf32> -> vector<32x128xf32>
    %c0_7 = arith.constant 0 : index
    %c0_8 = arith.constant 0 : index
    %8 = vector.load %arg4[%c0_7, %c0_8] : memref<32x128xf32, #tpu.memory_space<vmem>>, vector<32x128xf32>
    tpu.vector_store %arg4[%c0_7, %c0_8], %7 {strides = array<i32>} : memref<32x128xf32, #tpu.memory_space<vmem>>, vector<32x128xf32>,
    return
  }
  func.func @transform_0(%arg0: i32) -> (i32, i32) {
    %c0_i32 = arith.constant 0 : i32
    %c0_i32_0 = arith.constant 0 : i32
    return %arg0, %c0_i32 : i32, i32
  }
  func.func @transform_1(%arg0: i32) -> (i32, i32) {
    %c0_i32 = arith.constant 0 : i32
    %c0_i32_0 = arith.constant 0 : i32
    %c0_i32_1 = arith.constant 0 : i32
    return %c0_i32, %c0_i32_0 : i32, i32
  }
  func.func @transform_2(%arg0: i32) -> (i32, i32) {
    %c0_i32 = arith.constant 0 : i32
    %c0_i32_0 = arith.constant 0 : i32
    %c0_i32_1 = arith.constant 0 : i32
    return %c0_i32, %c0_i32_0 : i32, i32
  }
  func.func @transform_3(%arg0: i32) -> (i32, i32) {
    %c0_i32 = arith.constant 0 : i32
    %c0_i32_0 = arith.constant 0 : i32
    return %arg0, %c0_i32 : i32, i32
  }
}

module attributes {stable_mosaic.version = 11 : i64} {
  func.func @_tnt_layer_kernel(%arg0: i32, %arg1: memref<144x256xbf16, #tpu.memory_space<vmem>>, %arg2: memref<256x128xbf16, #tpu.memory_space<vmem>>, %arg3: memref<8x144xf32, #tpu.memory_space<vmem>>, %arg4: memref<144x128xf32, #tpu.memory_space<vmem>>, %arg5: memref<8x128xf32, #tpu.memory_space<vmem>>) attributes {dimension_semantics = [#tpu.dimension_semantics<parallel>], iteration_bounds = array<i64: 1>, scalar_prefetch = 0 : i64, scratch_operands = 0 : i64, tpu.core_type = #tpu.core_type<tc>, window_params = [{pipeline_mode = #tpu.pipeline_mode<synchronous>, transform_indices = @transform_0, window_bounds = array<i64: 144, 256>}, {pipeline_mode = #tpu.pipeline_mode<synchronous>, transform_indices = @transform_1, window_bounds = array<i64: 256, 128>}, {pipeline_mode = #tpu.pipeline_mode<synchronous>, transform_indices = @transform_2, window_bounds = array<i64: 8, 144>}, {pipeline_mode = #tpu.pipeline_mode<synchronous>, transform_indices = @transform_3, window_bounds = array<i64: 144, 128>}, {pipeline_mode = #tpu.pipeline_mode<synchronous>, transform_indices = @transform_4, window_bounds = array<i64: 8, 128>}]} {
    %c0 = arith.constant 0 : index
    %c0_0 = arith.constant 0 : index
    %0 = vector.load %arg1[%c0, %c0_0] : memref<144x256xbf16, #tpu.memory_space<vmem>>, vector<144x256xbf16>
    %c0_1 = arith.constant 0 : index
    %c0_2 = arith.constant 0 : index
    %1 = vector.load %arg2[%c0_1, %c0_2] : memref<256x128xbf16, #tpu.memory_space<vmem>>, vector<256x128xbf16>
    %cst = arith.constant dense<0.000000e+00> : vector<144x128xf32>
    %2 = tpu.matmul %0, %1, %cst {dimension_numbers = #tpu.dot_dimension_numbers<[1], [0], [0], [1], [0, 0, 1, 1], [], []>} : vector<144x256xbf16>, vector<256x128xbf16>, vector<144x128xf32> -> vector<144x128xf32>
    %cst_3 = arith.constant 0.000000e+00 : f32
    %3 = vector.broadcast %cst_3 : f32 to vector<144x128xf32>
    %4 = arith.maximumf %2, %3 : vector<144x128xf32>
    %c0_4 = arith.constant 0 : index
    %c0_5 = arith.constant 0 : index
    %5 = vector.load %arg4[%c0_4, %c0_5] : memref<144x128xf32, #tpu.memory_space<vmem>>, vector<144x128xf32>
    tpu.vector_store %arg4[%c0_4, %c0_5], %4 {strides = array<i32>} : memref<144x128xf32, #tpu.memory_space<vmem>>, vector<144x128xf32>,
    %c0_6 = arith.constant 0 : index
    %c0_7 = arith.constant 0 : index
    %6 = vector.load %arg3[%c0_6, %c0_7] : memref<8x144xf32, #tpu.memory_space<vmem>>, vector<8x144xf32>
    %cst_8 = arith.constant dense<0.000000e+00> : vector<8x128xf32>
    %7 = tpu.matmul %6, %4, %cst_8 {dimension_numbers = #tpu.dot_dimension_numbers<[1], [0], [0], [1], [0, 0, 1, 1], [], []>} : vector<8x144xf32>, vector<144x128xf32>, vector<8x128xf32> -> vector<8x128xf32>
    %c0_9 = arith.constant 0 : index
    %c0_10 = arith.constant 0 : index
    %8 = vector.load %arg5[%c0_9, %c0_10] : memref<8x128xf32, #tpu.memory_space<vmem>>, vector<8x128xf32>
    tpu.vector_store %arg5[%c0_9, %c0_10], %7 {strides = array<i32>} : memref<8x128xf32, #tpu.memory_space<vmem>>, vector<8x128xf32>,
    return
  }
  func.func @transform_0(%arg0: i32) -> (i32, i32) {
    %c0_i32 = arith.constant 0 : i32
    %c0_i32_0 = arith.constant 0 : i32
    %c0_i32_1 = arith.constant 0 : i32
    return %c0_i32, %c0_i32_0 : i32, i32
  }
  func.func @transform_1(%arg0: i32) -> (i32, i32) {
    %c0_i32 = arith.constant 0 : i32
    %c0_i32_0 = arith.constant 0 : i32
    %c0_i32_1 = arith.constant 0 : i32
    return %c0_i32, %c0_i32_0 : i32, i32
  }
  func.func @transform_2(%arg0: i32) -> (i32, i32) {
    %c0_i32 = arith.constant 0 : i32
    %c0_i32_0 = arith.constant 0 : i32
    %c0_i32_1 = arith.constant 0 : i32
    return %c0_i32, %c0_i32_0 : i32, i32
  }
  func.func @transform_3(%arg0: i32) -> (i32, i32) {
    %c0_i32 = arith.constant 0 : i32
    %c0_i32_0 = arith.constant 0 : i32
    %c0_i32_1 = arith.constant 0 : i32
    return %c0_i32, %c0_i32_0 : i32, i32
  }
  func.func @transform_4(%arg0: i32) -> (i32, i32) {
    %c0_i32 = arith.constant 0 : i32
    %c0_i32_0 = arith.constant 0 : i32
    %c0_i32_1 = arith.constant 0 : i32
    return %c0_i32, %c0_i32_0 : i32, i32
  }
}

module attributes {stable_mosaic.version = 11 : i64} {
  func.func @_matmul_kernel(%arg0: i32, %arg1: memref<40x128xf32, #tpu.memory_space<vmem>>, %arg2: memref<128x128xf32, #tpu.memory_space<vmem>>, %arg3: memref<40x128xf32, #tpu.memory_space<vmem>>) attributes {dimension_semantics = [#tpu.dimension_semantics<parallel>], iteration_bounds = array<i64: 1>, scalar_prefetch = 0 : i64, scratch_operands = 0 : i64, tpu.core_type = #tpu.core_type<tc>, window_params = [{transform_indices = @transform_0, window_bounds = array<i64: 40, 128>}, {pipeline_mode = #tpu.pipeline_mode<synchronous>, transform_indices = @transform_1, window_bounds = array<i64: 128, 128>}, {transform_indices = @transform_2, window_bounds = array<i64: 40, 128>}]} {
    %c0 = arith.constant 0 : index
    %c0_0 = arith.constant 0 : index
    %0 = vector.load %arg1[%c0, %c0_0] : memref<40x128xf32, #tpu.memory_space<vmem>>, vector<40x128xf32>
    %c0_1 = arith.constant 0 : index
    %c0_2 = arith.constant 0 : index
    %1 = vector.load %arg2[%c0_1, %c0_2] : memref<128x128xf32, #tpu.memory_space<vmem>>, vector<128x128xf32>
    %cst = arith.constant dense<0.000000e+00> : vector<40x128xf32>
    %2 = tpu.matmul %0, %1, %cst {dimension_numbers = #tpu.dot_dimension_numbers<[1], [0], [0], [1], [0, 0, 1, 1], [], []>} : vector<40x128xf32>, vector<128x128xf32>, vector<40x128xf32> -> vector<40x128xf32>
    %c0_3 = arith.constant 0 : index
    %c0_4 = arith.constant 0 : index
    %3 = vector.load %arg3[%c0_3, %c0_4] : memref<40x128xf32, #tpu.memory_space<vmem>>, vector<40x128xf32>
    tpu.vector_store %arg3[%c0_3, %c0_4], %2 {strides = array<i32>} : memref<40x128xf32, #tpu.memory_space<vmem>>, vector<40x128xf32>,
    return
  }
  func.func @transform_0(%arg0: i32) -> (i32, i32) {
    %c0_i32 = arith.constant 0 : i32
    %c0_i32_0 = arith.constant 0 : i32
    return %arg0, %c0_i32 : i32, i32
  }
  func.func @transform_1(%arg0: i32) -> (i32, i32) {
    %c0_i32 = arith.constant 0 : i32
    %c0_i32_0 = arith.constant 0 : i32
    %c0_i32_1 = arith.constant 0 : i32
    return %c0_i32, %c0_i32_0 : i32, i32
  }
  func.func @transform_2(%arg0: i32) -> (i32, i32) {
    %c0_i32 = arith.constant 0 : i32
    %c0_i32_0 = arith.constant 0 : i32
    return %arg0, %c0_i32 : i32, i32
  }
}

</mosaic_0001>

<llo_original>
// kernel: _lambda_.8
$region0: #{_lambda_.8}
  #allocation0 [shape = 'u32[]', space=smem, size = 0x4, offset = 0x4, fixed_abs, tag = 'smem constant byte address 0x4 - core index']
  #allocation1 [shape = 'u32[144,128]{1,0:T(1,128)}', space=vmem, size = 0x12000, scoped, tag = 'internal scratch']
  %s0 = inlined_call_operand.vmem [shape: f32[512,128], index: 0, kind: input, shape index: {}]
  %s1 = inlined_call_operand.vmem [shape: f32[16,16], index: 1, kind: input, shape index: {}]
  %s2 = inlined_call_operand.vmem [shape: bf16[128,128], index: 2, kind: input, shape index: {}]
  %s3 = inlined_call_operand.vmem [shape: f32[1,128], index: 3, kind: input, shape index: {}]
  %s4 = inlined_call_operand.vmem [shape: bf16[128,128], index: 4, kind: input, shape index: {}]
  %s5 = inlined_call_operand.vmem [shape: f32[1,128], index: 5, kind: input, shape index: {}]
  %s6 = inlined_call_operand.vmem [shape: f32[512,128], index: 6, kind: output, shape index: {}]
  %s7 = sld [smem:[#allocation0]]
  $region57: #{_lambda_.8} parent=0
    _
  %s9 = ssub.s32 1, %s7
  %s10 = scalar_select 0, %s9, %s7
  loop: start=0, step=1, limit=6
  $region2: #{_lambda_.8} parent=0 // loop_pre_header
    _
  $region3: #{_lambda_.8} parent=0 // loop_header
    %s12 = sphi 0, %s16
    %p13 = scmp.ge.s32.totalorder %s12, 6
    %s22 = sphi 0, %s24
    %s25 = sphi 0, %s22
    %s26 = sphi 0, %s25
    %s42 = sphi 0, %s26
    %s46 = sphi 0, %s46
    %s48 = sphi 0, %s46
    %s49 = sphi 0, %s48
    %s63 = sphi 0, %s49
    %s67 = sphi 0, %s67
    %s69 = sphi 0, %s67
    %s70 = sphi 0, %s69
    %s84 = sphi 0, %s70
    %s88 = sphi 0, %s88
    %s90 = sphi 0, %s88
    %s91 = sphi 0, %s90
    %s105 = sphi 0, %s91
    %s109 = sphi 0, %s109
    %s111 = sphi 0, %s109
    %s112 = sphi 0, %s111
    %s126 = sphi 0, %s112
    %s130 = sphi 0, %s130
    %s132 = sphi 0, %s130
    %s133 = sphi 0, %s132
    %s147 = sphi 0, %s133
    %s153 = sphi 0, %s155
    %s156 = sphi 0, %s153
    %s157 = sphi 0, %s156
    %s173 = sphi 0, %s157
  $region4: #{_lambda_.8} parent=0 // loop_header_branch
    %15 = sbr.rel (%p13) target = $region8
  $region5: #{_lambda_.8} parent=0 // loop_body
    %s17 = ssub.s32 %s12, 1
    %s18 = ssub.s32 %s12, 2
    %s19 = sadd.s32 %s12, 1
    %s20 = ssub.s32 %s12, %s19
    %p21 = scmp.eq.s32.totalorder %s20, 0
    %s23 = sadd.s32 %s22, 1
    %s24 = scalar_select %p21, %s22, %s23
    %p27 = pneg %p21
    %p28 = scmp.eq.s32.totalorder %s12, 3
    %p29 = por %p27, %p28
    %p30 = scmp.ne.s32.totalorder %s22, %s25
    %p31 = scmp.eq.s32.totalorder %s12, 0
    %p32 = por %p30, %p31
    %p33 = scmp.ne.s32.totalorder %s22, %s25
    %p34 = scmp.eq.s32.totalorder %s17, 3
    %p35 = por %p33, %p34
    %p36 = scmp.ne.s32.totalorder %s25, %s26
    %p37 = scmp.eq.s32.totalorder %s17, 0
    %p38 = por %p36, %p37
    %p39 = scmp.ne.s32.totalorder %s25, %s26
    %p40 = scmp.eq.s32.totalorder %s18, 3
    %p41 = por %p39, %p40
    %p43 = scmp.ne.s32.totalorder %s26, %s42
    %p44 = scmp.eq.s32.totalorder %s18, 0
    %p45 = por %p43, %p44
    %s47 = sadd.s32 %s46, 1
    %p50 = scmp.eq.s32.totalorder %s12, 3
    %p51 = scmp.ne.s32.totalorder %s46, %s48
    %p52 = scmp.eq.s32.totalorder %s12, 0
    %p53 = por %p51, %p52
    %p54 = scmp.ne.s32.totalorder %s46, %s48
    %p55 = scmp.eq.s32.totalorder %s17, 3
    %p56 = por %p54, %p55
    %p57 = scmp.ne.s32.totalorder %s48, %s49
    %p58 = scmp.eq.s32.totalorder %s17, 0
    %p59 = por %p57, %p58
    %p60 = scmp.ne.s32.totalorder %s48, %s49
    %p61 = scmp.eq.s32.totalorder %s18, 3
    %p62 = por %p60, %p61
    %p64 = scmp.ne.s32.totalorder %s49, %s63
    %p65 = scmp.eq.s32.totalorder %s18, 0
    %p66 = por %p64, %p65
    %s68 = sadd.s32 %s67, 1
    %p71 = scmp.eq.s32.totalorder %s12, 3
    %p72 = scmp.ne.s32.totalorder %s67, %s69
    %p73 = scmp.eq.s32.totalorder %s12, 0
    %p74 = por %p72, %p73
    %p75 = scmp.ne.s32.totalorder %s67, %s69
    %p76 = scmp.eq.s32.totalorder %s17, 3
    %p77 = por %p75, %p76
    %p78 = scmp.ne.s32.totalorder %s69, %s70
    %p79 = scmp.eq.s32.totalorder %s17, 0
    %p80 = por %p78, %p79
    %p81 = scmp.ne.s32.totalorder %s69, %s70
    %p82 = scmp.eq.s32.totalorder %s18, 3
    %p83 = por %p81, %p82
    %p85 = scmp.ne.s32.totalorder %s70, %s84
    %p86 = scmp.eq.s32.totalorder %s18, 0
    %p87 = por %p85, %p86
    %s89 = sadd.s32 %s88, 1
    %p92 = scmp.eq.s32.totalorder %s12, 3
    %p93 = scmp.ne.s32.totalorder %s88, %s90
    %p94 = scmp.eq.s32.totalorder %s12, 0
    %p95 = por %p93, %p94
    %p96 = scmp.ne.s32.totalorder %s88, %s90
    %p97 = scmp.eq.s32.totalorder %s17, 3
    %p98 = por %p96, %p97
    %p99 = scmp.ne.s32.totalorder %s90, %s91
    %p100 = scmp.eq.s32.totalorder %s17, 0
    %p101 = por %p99, %p100
    %p102 = scmp.ne.s32.totalorder %s90, %s91
    %p103 = scmp.eq.s32.totalorder %s18, 3
    %p104 = por %p102, %p103
    %p106 = scmp.ne.s32.totalorder %s91, %s105
    %p107 = scmp.eq.s32.totalorder %s18, 0
    %p108 = por %p106, %p107
    %s110 = sadd.s32 %s109, 1
    %p113 = scmp.eq.s32.totalorder %s12, 3
    %p114 = scmp.ne.s32.totalorder %s109, %s111
    %p115 = scmp.eq.s32.totalorder %s12, 0
    %p116 = por %p114, %p115
    %p117 = scmp.ne.s32.totalorder %s109, %s111
    %p118 = scmp.eq.s32.totalorder %s17, 3
    %p119 = por %p117, %p118
    %p120 = scmp.ne.s32.totalorder %s111, %s112
    %p121 = scmp.eq.s32.totalorder %s17, 0
    %p122 = por %p120, %p121
    %p123 = scmp.ne.s32.totalorder %s111, %s112
    %p124 = scmp.eq.s32.totalorder %s18, 3
    %p125 = por %p123, %p124
    %p127 = scmp.ne.s32.totalorder %s112, %s126
    %p128 = scmp.eq.s32.totalorder %s18, 0
    %p129 = por %p127, %p128
    %s131 = sadd.s32 %s130, 1
    %p134 = scmp.eq.s32.totalorder %s12, 3
    %p135 = scmp.ne.s32.totalorder %s130, %s132
    %p136 = scmp.eq.s32.totalorder %s12, 0
    %p137 = por %p135, %p136
    %p138 = scmp.ne.s32.totalorder %s130, %s132
    %p139 = scmp.eq.s32.totalorder %s17, 3
    %p140 = por %p138, %p139
    %p141 = scmp.ne.s32.totalorder %s132, %s133
    %p142 = scmp.eq.s32.totalorder %s17, 0
    %p143 = por %p141, %p142
    %p144 = scmp.ne.s32.totalorder %s132, %s133
    %p145 = scmp.eq.s32.totalorder %s18, 3
    %p146 = por %p144, %p145
    %p148 = scmp.ne.s32.totalorder %s133, %s147
    %p149 = scmp.eq.s32.totalorder %s18, 0
    %p150 = por %p148, %p149
    %s151 = ssub.s32 %s12, %s19
    %p152 = scmp.eq.s32.totalorder %s151, 0
    %s154 = sadd.s32 %s153, 1
    %s155 = scalar_select %p152, %s153, %s154
    %p158 = pneg %p152
    %p159 = scmp.eq.s32.totalorder %s12, 3
    %p160 = por %p158, %p159
    %p161 = scmp.ne.s32.totalorder %s153, %s156
    %p162 = scmp.eq.s32.totalorder %s12, 0
    %p163 = por %p161, %p162
    %p164 = scmp.ne.s32.totalorder %s153, %s156
    %p165 = scmp.eq.s32.totalorder %s17, 3
    %p166 = por %p164, %p165
    %p167 = scmp.ne.s32.totalorder %s156, %s157
    %p168 = scmp.eq.s32.totalorder %s17, 0
    %p169 = por %p167, %p168
    %p170 = scmp.ne.s32.totalorder %s156, %s157
    %p171 = scmp.eq.s32.totalorder %s18, 3
    %p172 = por %p170, %p171
    %p174 = scmp.ne.s32.totalorder %s157, %s173
    %p175 = scmp.eq.s32.totalorder %s18, 0
    %p176 = por %p174, %p175
    %p177 = scmp.le.s32.totalorder 1, %s12
    %p178 = scmp.lt.s32.totalorder %s12, 5
    %p179 = pnand %p177, %p178
    %p180 = pneg %p179
    // Predicated region
    $region9: #{_lambda_.8} parent=5 // pred_check
      _
    $region10: #{_lambda_.8} parent=5 // pred_check_branch
      %182 = sbr.rel (%p179) target = $region12
    $region11: #{_lambda_.8} parent=5 // pred_region
      %s183 = ssub.s32 %s12, 1
      // Predicated region
      $region13: #{_lambda_.8} parent=11 // pred_check
        %p184 = pneg %p59
      $region14: #{_lambda_.8} parent=11 // pred_check_branch
        %186 = sbr.rel (%p184) target = $region16
      $region15: #{_lambda_.8} parent=11 // pred_region
        _
      $region16: #{_lambda_.8} parent=11 // pred_fallthru
        _
      // Predicated region
      $region17: #{_lambda_.8} parent=11 // pred_check
        %p187 = pneg %p80
      $region18: #{_lambda_.8} parent=11 // pred_check_branch
        %189 = sbr.rel (%p187) target = $region20
      $region19: #{_lambda_.8} parent=11 // pred_region
        _
      $region20: #{_lambda_.8} parent=11 // pred_fallthru
        _
      // Predicated region
      $region21: #{_lambda_.8} parent=11 // pred_check
        %p190 = pneg %p101
      $region22: #{_lambda_.8} parent=11 // pred_check_branch
        %192 = sbr.rel (%p190) target = $region24
      $region23: #{_lambda_.8} parent=11 // pred_region
        _
      $region24: #{_lambda_.8} parent=11 // pred_fallthru
        _
      // Predicated region
      $region25: #{_lambda_.8} parent=11 // pred_check
        %p193 = pneg %p122
      $region26: #{_lambda_.8} parent=11 // pred_check_branch
        %195 = sbr.rel (%p193) target = $region28
      $region27: #{_lambda_.8} parent=11 // pred_region
        _
      $region28: #{_lambda_.8} parent=11 // pred_fallthru
        _
      // Predicated region
      $region29: #{_lambda_.8} parent=11 // pred_check
        %p196 = pneg %p143
      $region30: #{_lambda_.8} parent=11 // pred_check_branch
        %198 = sbr.rel (%p196) target = $region32
      $region31: #{_lambda_.8} parent=11 // pred_region
        _
      $region32: #{_lambda_.8} parent=11 // pred_fallthru
        _
    $region12: #{_lambda_.8} parent=5 // pred_fallthru
      _
    %p199 = scmp.lt.s32.totalorder %s12, 4
    // Predicated region
    $region33: #{_lambda_.8} parent=5 // pred_check
      %p200 = pneg %p199
    $region34: #{_lambda_.8} parent=5 // pred_check_branch
      %202 = sbr.rel (%p200) target = $region36
    $region35: #{_lambda_.8} parent=5 // pred_region
      // Predicated region
      $region37: #{_lambda_.8} parent=35 // pred_check
        %p203 = pneg %p32
      $region38: #{_lambda_.8} parent=35 // pred_check_branch
        %205 = sbr.rel (%p203) target = $region40
      $region39: #{_lambda_.8} parent=35 // pred_region
        %s206 = smul.u32 16, %s12
        %p207 = scmp.lt.s32.totalorder %s206, 63
        %s208 = scalar_select %p207, %s206, 63
        %s209 = smul.addr %s208, 8
        %s210 = scalar_lea.vmem %s0, %s209
        %s211 = smul.u32 16, %s12
      $region40: #{_lambda_.8} parent=35 // pred_fallthru
        _
    $region36: #{_lambda_.8} parent=5 // pred_fallthru
      _
    %p212 = scmp.le.s32.totalorder 1, %s12
    %p213 = scmp.lt.s32.totalorder %s12, 5
    %p214 = pnand %p212, %p213
    %p215 = pneg %p214
    // Predicated region
    $region41: #{_lambda_.8} parent=5 // pred_check
      _
    $region42: #{_lambda_.8} parent=5 // pred_check_branch
      %217 = sbr.rel (%p214) target = $region44
    $region43: #{_lambda_.8} parent=5 // pred_region
      %s218 = ssub.s32 %s12, 1
      %s219 = smul.u32 16, %s17
      %p220 = scmp.lt.s32.totalorder %s219, 63
      %s221 = scalar_select %p220, %s219, 63
      %s222 = smul.addr %s221, 8
      %s223 = scalar_lea.vmem %s0, %s222
      %p224 = pneg %p38
      %p225 = pneg %p35
      %p226 = pneg %p59
      %p227 = pneg %p56
      %p228 = pneg %p80
      %p229 = pneg %p77
      %p230 = pneg %p101
      %p231 = pneg %p98
      %p232 = pneg %p122
      %p233 = pneg %p119
      %p234 = pneg %p143
      %p235 = pneg %p140
      %p236 = pneg %p169
      %p237 = pneg %p166
      %s238 = smul.u32 16, %s17
      %p239 = scmp.lt.s32.totalorder %s238, 63
      %s240 = scalar_select %p239, %s238, 63
      %s241 = smul.addr %s240, 8
      %s242 = scalar_lea.vmem %s6, %s241
      %s243 = smul.u32 16, %s17
      %p244 = scmp.lt.s32.totalorder %s243, 63
      %s245 = scalar_select %p244, %s243, 63
      %s246 = smul.addr %s245, 8
      %s247 = scalar_lea.vmem %s0, %s246
      %s248 = smul.u32 16, %s17
      %s249 = smul.u32 16, %s17
      %p250 = scmp.lt.s32.totalorder %s249, 63
      %s251 = scalar_select %p250, %s249, 63
      %s252 = smul.addr %s251, 8
      %s253 = scalar_lea.vmem %s6, %s252
      %s254 = smul.u32 16, %s17
      %v256 = vld [vmem:[%s1] sm:$0xff]
      %v257 = vld [vmem:[%s1 + $0x8] sm:$0xff]
      %v258 = vld [vmem:[%s247] sm:$0xff]
      %v259 = vld [vmem:[%s247 + $0x8] sm:$0xff]
      %v260 = vld [vmem:[%s247 + $0x10] sm:$0xff]
      %v261 = vld [vmem:[%s247 + $0x18] sm:$0xff]
      %v262 = vld [vmem:[%s247 + $0x20] sm:$0xff]
      %v263 = vld [vmem:[%s247 + $0x28] sm:$0xff]
      %v264 = vld [vmem:[%s247 + $0x30] sm:$0xff]
      %v265 = vld [vmem:[%s247 + $0x38] sm:$0xff]
      %v266 = vld [vmem:[%s247 + $0x40] sm:$0xff]
      %v267 = vld [vmem:[%s247 + $0x48] sm:$0xff]
      %v268 = vld [vmem:[%s247 + $0x50] sm:$0xff]
      %v269 = vld [vmem:[%s247 + $0x58] sm:$0xff]
      %v270 = vld [vmem:[%s247 + $0x60] sm:$0xff]
      %v271 = vld [vmem:[%s247 + $0x68] sm:$0xff]
      %v272 = vld [vmem:[%s247 + $0x70] sm:$0xff]
      %v273 = vld [vmem:[%s247 + $0x78] sm:$0xff]
      %v274 = vld [vmem:[%s2] sm:$0xf]
      %v275 = vld [vmem:[%s2 + $0x4] sm:$0xf]
      %v276 = vld [vmem:[%s2 + $0x8] sm:$0xf]
      %v277 = vld [vmem:[%s2 + $0xc] sm:$0xf]
      %v278 = vld [vmem:[%s2 + $0x10] sm:$0xf]
      %v279 = vld [vmem:[%s2 + $0x14] sm:$0xf]
      %v280 = vld [vmem:[%s2 + $0x18] sm:$0xf]
      %v281 = vld [vmem:[%s2 + $0x1c] sm:$0xf]
      %v282 = vld [vmem:[%s2 + $0x20] sm:$0xf]
      %v283 = vld [vmem:[%s2 + $0x24] sm:$0xf]
      %v284 = vld [vmem:[%s2 + $0x28] sm:$0xf]
      %v285 = vld [vmem:[%s2 + $0x2c] sm:$0xf]
      %v286 = vld [vmem:[%s2 + $0x30] sm:$0xf]
      %v287 = vld [vmem:[%s2 + $0x34] sm:$0xf]
      %v288 = vld [vmem:[%s2 + $0x38] sm:$0xf]
      %v289 = vld [vmem:[%s2 + $0x3c] sm:$0xf]
      %v290 = vld [vmem:[%s3] sm:$0x1]
      %v291 = vpack.c.bf16 %v259, %v258
      %v292 = vpack.c.bf16 %v261, %v260
      %v293 = vpack.c.bf16 %v263, %v262
      %v294 = vpack.c.bf16 %v265, %v264
      %v295 = vpack.c.bf16 %v267, %v266
      %v296 = vpack.c.bf16 %v269, %v268
      %v297 = vpack.c.bf16 %v271, %v270
      %v298 = vpack.c.bf16 %v273, %v272
      %v315 = vunpack.c.l.b16 %v274
      %v316 = vunpack.c.l.b16 %v275
      %v317 = vunpack.c.l.b16 %v276
      %v318 = vunpack.c.l.b16 %v277
      %v319 = vunpack.c.l.b16 %v278
      %v320 = vunpack.c.l.b16 %v279
      %v321 = vunpack.c.l.b16 %v280
      %v322 = vunpack.c.l.b16 %v281
      %v323 = vunpack.c.l.b16 %v282
      %v324 = vunpack.c.l.b16 %v283
      %v325 = vunpack.c.l.b16 %v284
      %v326 = vunpack.c.l.b16 %v285
      %v327 = vunpack.c.l.b16 %v286
      %v328 = vunpack.c.l.b16 %v287
      %v329 = vunpack.c.l.b16 %v288
      %v330 = vunpack.c.l.b16 %v289
      %v331 = vpack.c.b16 %v316, %v315
      %v332 = vpack.c.b16 %v318, %v317
      %v333 = vpack.c.b16 %v320, %v319
      %v334 = vpack.c.b16 %v322, %v321
      %v335 = vpack.c.b16 %v324, %v323
      %v336 = vpack.c.b16 %v326, %v325
      %v337 = vpack.c.b16 %v328, %v327
      %v338 = vpack.c.b16 %v330, %v329
      %347 = vmatprep.subr.bf16.mxu0 0
      %348 = vmatpush1.bf16.msra.mxu0 %v338
      %349 = vmatprep.subr.bf16.mxu0 0
      %350 = vmatpush1.bf16.msra.mxu0 %v337
      %351 = vmatprep.subr.bf16.mxu0 0
      %352 = vmatpush1.bf16.msra.mxu0 %v336
      %353 = vmatprep.subr.bf16.mxu0 0
      %354 = vmatpush1.bf16.msra.mxu0 %v335
      %355 = vmatprep.subr.bf16.mxu0 0
      %356 = vmatpush1.bf16.msra.mxu0 %v334
      %357 = vmatprep.subr.bf16.mxu0 0
      %358 = vmatpush1.bf16.msra.mxu0 %v333
      %359 = vmatprep.subr.bf16.mxu0 0
      %360 = vmatpush1.bf16.msra.mxu0 %v332
      %361 = vmatprep.subr.bf16.mxu0 0
      %362 = vmatpush1.bf16.msra.mxu0 %v331
      %363 = vmatprep.subr.bf16.mxu0 0
      %364 = vmatpush2.bf16.msra.mxu0 0
      %365 = vmatprep.subr.bf16.mxu0 0
      %366 = vmatpush2.bf16.msra.mxu0 0
      %367 = vmatprep.subr.bf16.mxu0 0
      %368 = vmatpush2.bf16.msra.mxu0 0
      %369 = vmatprep.subr.bf16.mxu0 0
      %370 = vmatpush2.bf16.msra.mxu0 0
      %371 = vmatprep.subr.bf16.mxu0 0
      %372 = vmatpush2.bf16.msra.mxu0 0
      %373 = vmatprep.subr.bf16.mxu0 0
      %374 = vmatpush2.bf16.msra.mxu0 0
      %375 = vmatprep.subr.bf16.mxu0 0
      %376 = vmatpush2.bf16.msra.mxu0 0
      %377 = vmatprep.subr.bf16.mxu0 0
      %378 = vmatpush2.bf16.msra.mxu0 0
      %379 = vmatprep.mubr.bf16.mxu0 0
      %380 = vmatmul.mubr.bf16.gmra.mxu0 %v291
      %v381 = vpop.f32.mrf.mxu0
      %v382 = vadd.f32 0.0, %v381
      %v383 = vpop.f32.mrf.mxu0
      %v384 = vpop.f32.mrf.mxu0
      %v385 = vadd.f32 0.0, %v384
      %v386 = vpop.f32.mrf.mxu0
      %387 = vmatprep.mubr.bf16.mxu0 0
      %388 = vmatmul.mubr.bf16.gmra.mxu0 %v292
      %v389 = vpop.f32.mrf.mxu0
      %v390 = vadd.f32 0.0, %v389
      %v391 = vpop.f32.mrf.mxu0
      %v392 = vpop.f32.mrf.mxu0
      %v393 = vadd.f32 0.0, %v392
      %v394 = vpop.f32.mrf.mxu0
      %395 = vmatprep.mubr.bf16.mxu0 0
      %396 = vmatmul.mubr.bf16.gmra.mxu0 %v293
      %v397 = vpop.f32.mrf.mxu0
      %v398 = vadd.f32 0.0, %v397
      %v399 = vpop.f32.mrf.mxu0
      %v400 = vpop.f32.mrf.mxu0
      %v401 = vadd.f32 0.0, %v400
      %v402 = vpop.f32.mrf.mxu0
      %403 = vmatprep.mubr.bf16.mxu0 0
      %404 = vmatmul.mubr.bf16.gmra.mxu0 %v294
      %v405 = vpop.f32.mrf.mxu0
      %v406 = vadd.f32 0.0, %v405
      %v407 = vpop.f32.mrf.mxu0
      %v408 = vpop.f32.mrf.mxu0
      %v409 = vadd.f32 0.0, %v408
      %v410 = vpop.f32.mrf.mxu0
      %411 = vmatprep.mubr.bf16.mxu0 0
      %412 = vmatmul.mubr.bf16.gmra.mxu0 %v295
      %v413 = vpop.f32.mrf.mxu0
      %v414 = vadd.f32 0.0, %v413
      %v415 = vpop.f32.mrf.mxu0
      %v416 = vpop.f32.mrf.mxu0
      %v417 = vadd.f32 0.0, %v416
      %v418 = vpop.f32.mrf.mxu0
      %419 = vmatprep.mubr.bf16.mxu0 0
      %420 = vmatmul.mubr.bf16.gmra.mxu0 %v296
      %v421 = vpop.f32.mrf.mxu0
      %v422 = vadd.f32 0.0, %v421
      %v423 = vpop.f32.mrf.mxu0
      %v424 = vpop.f32.mrf.mxu0
      %v425 = vadd.f32 0.0, %v424
      %v426 = vpop.f32.mrf.mxu0
      %427 = vmatprep.mubr.bf16.mxu0 0
      %428 = vmatmul.mubr.bf16.gmra.mxu0 %v297
      %v429 = vpop.f32.mrf.mxu0
      %v430 = vadd.f32 0.0, %v429
      %v431 = vpop.f32.mrf.mxu0
      %v432 = vpop.f32.mrf.mxu0
      %v433 = vadd.f32 0.0, %v432
      %v434 = vpop.f32.mrf.mxu0
      %435 = vmatprep.mubr.bf16.mxu0 0
      %436 = vmatmul.mubr.bf16.gmra.mxu0 %v298
      %v437 = vpop.f32.mrf.mxu0
      %v438 = vadd.f32 0.0, %v437
      %v439 = vpop.f32.mrf.mxu0
      %v440 = vpop.f32.mrf.mxu0
      %v441 = vadd.f32 0.0, %v440
      %v442 = vpop.f32.mrf.mxu0
      %443 = vdwg.mxu0
      %vm444 = vcmask 130048
      %v446 = vsel %vm444, %v256, 0
      %v449 = vsel %vm444, %v257, 0
      %451 = vmatprep.subr.mxu0 0.0
      %452 = vmatpush1.msra.mxu0 0.0
      %453 = vmatprep.subr.mxu0 0.0
      %454 = vmatpush1.msra.mxu0 0.0
      %455 = vmatprep.subr.mxu0 0.0
      %456 = vmatpush1.msra.mxu0 0.0
      %457 = vmatprep.subr.mxu0 0.0
      %458 = vmatpush1.msra.mxu0 0.0
      %459 = vmatprep.subr.mxu0 0.0
      %460 = vmatpush1.msra.mxu0 0.0
      %461 = vmatprep.subr.mxu0 0.0
      %462 = vmatpush1.msra.mxu0 0.0
      %463 = vmatprep.subr.mxu0 0.0
      %464 = vmatpush1.msra.mxu0 0.0
      %465 = vmatprep.subr.mxu0 0.0
      %466 = vmatpush1.msra.mxu0 0.0
      %467 = vmatprep.subr.mxu0 0.0
      %468 = vmatpush1.msra.mxu0 0.0
      %469 = vmatprep.subr.mxu0 0.0
      %470 = vmatpush1.msra.mxu0 0.0
      %471 = vmatprep.subr.mxu0 0.0
      %472 = vmatpush1.msra.mxu0 0.0
      %473 = vmatprep.subr.mxu0 0.0
      %474 = vmatpush1.msra.mxu0 0.0
      %475 = vmatprep.subr.mxu0 0.0
      %476 = vmatpush1.msra.mxu0 0.0
      %477 = vmatprep.subr.mxu0 0.0
      %478 = vmatpush1.msra.mxu0 0.0
      %479 = vmatprep.subr.mxu0 0.0
      %480 = vmatpush1.msra.mxu0 %v385
      %481 = vmatprep.subr.mxu0 0.0
      %482 = vmatpush1.msra.mxu0 %v382
      %483 = vmatprep.subr.mxu0 0.0
      %484 = vmatpush2.msra.mxu0 0.0
      %485 = vmatprep.subr.mxu0 0.0
      %486 = vmatpush2.msra.mxu0 0.0
      %487 = vmatprep.subr.mxu0 0.0
      %488 = vmatpush2.msra.mxu0 0.0
      %489 = vmatprep.subr.mxu0 0.0
      %490 = vmatpush2.msra.mxu0 0.0
      %491 = vmatprep.subr.mxu0 0.0
      %492 = vmatpush2.msra.mxu0 0.0
      %493 = vmatprep.subr.mxu0 0.0
      %494 = vmatpush2.msra.mxu0 0.0
      %495 = vmatprep.subr.mxu0 0.0
      %496 = vmatpush2.msra.mxu0 0.0
      %497 = vmatprep.subr.mxu0 0.0
      %498 = vmatpush2.msra.mxu0 0.0
      %499 = vmatprep.subr.mxu0 0.0
      %500 = vmatpush2.msra.mxu0 0.0
      %501 = vmatprep.subr.mxu0 0.0
      %502 = vmatpush2.msra.mxu0 0.0
      %503 = vmatprep.subr.mxu0 0.0
      %504 = vmatpush2.msra.mxu0 0.0
      %505 = vmatprep.subr.mxu0 0.0
      %506 = vmatpush2.msra.mxu0 0.0
      %507 = vmatprep.subr.mxu0 0.0
      %508 = vmatpush2.msra.mxu0 0.0
      %509 = vmatprep.subr.mxu0 0.0
      %510 = vmatpush2.msra.mxu0 0.0
      %511 = vmatprep.subr.mxu0 0.0
      %512 = vmatpush2.msra.mxu0 0.0
      %513 = vmatprep.subr.mxu0 0.0
      %514 = vmatpush2.msra.mxu0 0.0
      %515 = vmatprep.mubr.f32.mxu0 0.0
      %516 = vmatmul.mubr.f32.gmra.mxu0 %v446
      %v517 = vpop.f32.mrf.mxu0
      %v518 = vadd.f32 0.0, %v517
      %v519 = vpop.f32.mrf.mxu0
      %520 = vmatprep.mubr.f32.mxu0 0.0
      %521 = vmatmul.mubr.f32.gmra.mxu0 %v449
      %v522 = vpop.f32.mrf.mxu0
      %v523 = vadd.f32 0.0, %v522
      %v524 = vpop.f32.mrf.mxu0
      %525 = vdwg.mxu0
      %526 = vmatprep.subr.mxu0 0.0
      %527 = vmatpush1.msra.mxu0 0.0
      %528 = vmatprep.subr.mxu0 0.0
      %529 = vmatpush1.msra.mxu0 0.0
      %530 = vmatprep.subr.mxu0 0.0
      %531 = vmatpush1.msra.mxu0 0.0
      %532 = vmatprep.subr.mxu0 0.0
      %533 = vmatpush1.msra.mxu0 0.0
      %534 = vmatprep.subr.mxu0 0.0
      %535 = vmatpush1.msra.mxu0 0.0
      %536 = vmatprep.subr.mxu0 0.0
      %537 = vmatpush1.msra.mxu0 0.0
      %538 = vmatprep.subr.mxu0 0.0
      %539 = vmatpush1.msra.mxu0 0.0
      %540 = vmatprep.subr.mxu0 0.0
      %541 = vmatpush1.msra.mxu0 0.0
      %542 = vmatprep.subr.mxu0 0.0
      %543 = vmatpush1.msra.mxu0 0.0
      %544 = vmatprep.subr.mxu0 0.0
      %545 = vmatpush1.msra.mxu0 0.0
      %546 = vmatprep.subr.mxu0 0.0
      %547 = vmatpush1.msra.mxu0 0.0
      %548 = vmatprep.subr.mxu0 0.0
      %549 = vmatpush1.msra.mxu0 0.0
      %550 = vmatprep.subr.mxu0 0.0
      %551 = vmatpush1.msra.mxu0 0.0
      %552 = vmatprep.subr.mxu0 0.0
      %553 = vmatpush1.msra.mxu0 0.0
      %554 = vmatprep.subr.mxu0 0.0
      %555 = vmatpush1.msra.mxu0 %v393
      %556 = vmatprep.subr.mxu0 0.0
      %557 = vmatpush1.msra.mxu0 %v390
      %558 = vmatprep.subr.mxu0 0.0
      %559 = vmatpush2.msra.mxu0 0.0
      %560 = vmatprep.subr.mxu0 0.0
      %561 = vmatpush2.msra.mxu0 0.0
      %562 = vmatprep.subr.mxu0 0.0
      %563 = vmatpush2.msra.mxu0 0.0
      %564 = vmatprep.subr.mxu0 0.0
      %565 = vmatpush2.msra.mxu0 0.0
      %566 = vmatprep.subr.mxu0 0.0
      %567 = vmatpush2.msra.mxu0 0.0
      %568 = vmatprep.subr.mxu0 0.0
      %569 = vmatpush2.msra.mxu0 0.0
      %570 = vmatprep.subr.mxu0 0.0
      %571 = vmatpush2.msra.mxu0 0.0
      %572 = vmatprep.subr.mxu0 0.0
      %573 = vmatpush2.msra.mxu0 0.0
      %574 = vmatprep.subr.mxu0 0.0
      %575 = vmatpush2.msra.mxu0 0.0
      %576 = vmatprep.subr.mxu0 0.0
      %577 = vmatpush2.msra.mxu0 0.0
      %578 = vmatprep.subr.mxu0 0.0
      %579 = vmatpush2.msra.mxu0 0.0
      %580 = vmatprep.subr.mxu0 0.0
      %581 = vmatpush2.msra.mxu0 0.0
      %582 = vmatprep.subr.mxu0 0.0
      %583 = vmatpush2.msra.mxu0 0.0
      %584 = vmatprep.subr.mxu0 0.0
      %585 = vmatpush2.msra.mxu0 0.0
      %586 = vmatprep.subr.mxu0 0.0
      %587 = vmatpush2.msra.mxu0 0.0
      %588 = vmatprep.subr.mxu0 0.0
      %589 = vmatpush2.msra.mxu0 0.0
      %590 = vmatprep.mubr.f32.mxu0 0.0
      %591 = vmatmul.mubr.f32.gmra.mxu0 %v446
      %v592 = vpop.f32.mrf.mxu0
      %v593 = vadd.f32 0.0, %v592
      %v594 = vpop.f32.mrf.mxu0
      %595 = vmatprep.mubr.f32.mxu0 0.0
      %596 = vmatmul.mubr.f32.gmra.mxu0 %v449
      %v597 = vpop.f32.mrf.mxu0
      %v598 = vadd.f32 0.0, %v597
      %v599 = vpop.f32.mrf.mxu0
      %600 = vdwg.mxu0
      %601 = vmatprep.subr.mxu0 0.0
      %602 = vmatpush1.msra.mxu0 0.0
      %603 = vmatprep.subr.mxu0 0.0
      %604 = vmatpush1.msra.mxu0 0.0
      %605 = vmatprep.subr.mxu0 0.0
      %606 = vmatpush1.msra.mxu0 0.0
      %607 = vmatprep.subr.mxu0 0.0
      %608 = vmatpush1.msra.mxu0 0.0
      %609 = vmatprep.subr.mxu0 0.0
      %610 = vmatpush1.msra.mxu0 0.0
      %611 = vmatprep.subr.mxu0 0.0
      %612 = vmatpush1.msra.mxu0 0.0
      %613 = vmatprep.subr.mxu0 0.0
      %614 = vmatpush1.msra.mxu0 0.0
      %615 = vmatprep.subr.mxu0 0.0
      %616 = vmatpush1.msra.mxu0 0.0
      %617 = vmatprep.subr.mxu0 0.0
      %618 = vmatpush1.msra.mxu0 0.0
      %619 = vmatprep.subr.mxu0 0.0
      %620 = vmatpush1.msra.mxu0 0.0
      %621 = vmatprep.subr.mxu0 0.0
      %622 = vmatpush1.msra.mxu0 0.0
      %623 = vmatprep.subr.mxu0 0.0
      %624 = vmatpush1.msra.mxu0 0.0
      %625 = vmatprep.subr.mxu0 0.0
      %626 = vmatpush1.msra.mxu0 0.0
      %627 = vmatprep.subr.mxu0 0.0
      %628 = vmatpush1.msra.mxu0 0.0
      %629 = vmatprep.subr.mxu0 0.0
      %630 = vmatpush1.msra.mxu0 %v401
      %631 = vmatprep.subr.mxu0 0.0
      %632 = vmatpush1.msra.mxu0 %v398
      %633 = vmatprep.subr.mxu0 0.0
      %634 = vmatpush2.msra.mxu0 0.0
      %635 = vmatprep.subr.mxu0 0.0
      %636 = vmatpush2.msra.mxu0 0.0
      %637 = vmatprep.subr.mxu0 0.0
      %638 = vmatpush2.msra.mxu0 0.0
      %639 = vmatprep.subr.mxu0 0.0
      %640 = vmatpush2.msra.mxu0 0.0
      %641 = vmatprep.subr.mxu0 0.0
      %642 = vmatpush2.msra.mxu0 0.0
      %643 = vmatprep.subr.mxu0 0.0
      %644 = vmatpush2.msra.mxu0 0.0
      %645 = vmatprep.subr.mxu0 0.0
      %646 = vmatpush2.msra.mxu0 0.0
      %647 = vmatprep.subr.mxu0 0.0
      %648 = vmatpush2.msra.mxu0 0.0
      %649 = vmatprep.subr.mxu0 0.0
      %650 = vmatpush2.msra.mxu0 0.0
      %651 = vmatprep.subr.mxu0 0.0
      %652 = vmatpush2.msra.mxu0 0.0
      %653 = vmatprep.subr.mxu0 0.0
      %654 = vmatpush2.msra.mxu0 0.0
      %655 = vmatprep.subr.mxu0 0.0
      %656 = vmatpush2.msra.mxu0 0.0
      %657 = vmatprep.subr.mxu0 0.0
      %658 = vmatpush2.msra.mxu0 0.0
      %659 = vmatprep.subr.mxu0 0.0
      %660 = vmatpush2.msra.mxu0 0.0
      %661 = vmatprep.subr.mxu0 0.0
      %662 = vmatpush2.msra.mxu0 0.0
      %663 = vmatprep.subr.mxu0 0.0
      %664 = vmatpush2.msra.mxu0 0.0
      %665 = vmatprep.mubr.f32.mxu0 0.0
      %666 = vmatmul.mubr.f32.gmra.mxu0 %v446
      %v667 = vpop.f32.mrf.mxu0
      %v668 = vadd.f32 0.0, %v667
      %v669 = vpop.f32.mrf.mxu0
      %670 = vmatprep.mubr.f32.mxu0 0.0
      %671 = vmatmul.mubr.f32.gmra.mxu0 %v449
      %v672 = vpop.f32.mrf.mxu0
      %v673 = vadd.f32 0.0, %v672
      %v674 = vpop.f32.mrf.mxu0
      %675 = vdwg.mxu0
      %676 = vmatprep.subr.mxu0 0.0
      %677 = vmatpush1.msra.mxu0 0.0
      %678 = vmatprep.subr.mxu0 0.0
      %679 = vmatpush1.msra.mxu0 0.0
      %680 = vmatprep.subr.mxu0 0.0
      %681 = vmatpush1.msra.mxu0 0.0
      %682 = vmatprep.subr.mxu0 0.0
      %683 = vmatpush1.msra.mxu0 0.0
      %684 = vmatprep.subr.mxu0 0.0
      %685 = vmatpush1.msra.mxu0 0.0
      %686 = vmatprep.subr.mxu0 0.0
      %687 = vmatpush1.msra.mxu0 0.0
      %688 = vmatprep.subr.mxu0 0.0
      %689 = vmatpush1.msra.mxu0 0.0
      %690 = vmatprep.subr.mxu0 0.0
      %691 = vmatpush1.msra.mxu0 0.0
      %692 = vmatprep.subr.mxu0 0.0
      %693 = vmatpush1.msra.mxu0 0.0
      %694 = vmatprep.subr.mxu0 0.0
      %695 = vmatpush1.msra.mxu0 0.0
      %696 = vmatprep.subr.mxu0 0.0
      %697 = vmatpush1.msra.mxu0 0.0
      %698 = vmatprep.subr.mxu0 0.0
      %699 = vmatpush1.msra.mxu0 0.0
      %700 = vmatprep.subr.mxu0 0.0
      %701 = vmatpush1.msra.mxu0 0.0
      %702 = vmatprep.subr.mxu0 0.0
      %703 = vmatpush1.msra.mxu0 0.0
      %704 = vmatprep.subr.mxu0 0.0
      %705 = vmatpush1.msra.mxu0 %v409
      %706 = vmatprep.subr.mxu0 0.0
      %707 = vmatpush1.msra.mxu0 %v406
      %708 = vmatprep.subr.mxu0 0.0
      %709 = vmatpush2.msra.mxu0 0.0
      %710 = vmatprep.subr.mxu0 0.0
      %711 = vmatpush2.msra.mxu0 0.0
      %712 = vmatprep.subr.mxu0 0.0
      %713 = vmatpush2.msra.mxu0 0.0
      %714 = vmatprep.subr.mxu0 0.0
      %715 = vmatpush2.msra.mxu0 0.0
      %716 = vmatprep.subr.mxu0 0.0
      %717 = vmatpush2.msra.mxu0 0.0
      %718 = vmatprep.subr.mxu0 0.0
      %719 = vmatpush2.msra.mxu0 0.0
      %720 = vmatprep.subr.mxu0 0.0
      %721 = vmatpush2.msra.mxu0 0.0
      %722 = vmatprep.subr.mxu0 0.0
      %723 = vmatpush2.msra.mxu0 0.0
      %724 = vmatprep.subr.mxu0 0.0
      %725 = vmatpush2.msra.mxu0 0.0
      %726 = vmatprep.subr.mxu0 0.0
      %727 = vmatpush2.msra.mxu0 0.0
      %728 = vmatprep.subr.mxu0 0.0
      %729 = vmatpush2.msra.mxu0 0.0
      %730 = vmatprep.subr.mxu0 0.0
      %731 = vmatpush2.msra.mxu0 0.0
      %732 = vmatprep.subr.mxu0 0.0
      %733 = vmatpush2.msra.mxu0 0.0
      %734 = vmatprep.subr.mxu0 0.0
      %735 = vmatpush2.msra.mxu0 0.0
      %736 = vmatprep.subr.mxu0 0.0
      %737 = vmatpush2.msra.mxu0 0.0
      %738 = vmatprep.subr.mxu0 0.0
      %739 = vmatpush2.msra.mxu0 0.0
      %740 = vmatprep.mubr.f32.mxu0 0.0
      %741 = vmatmul.mubr.f32.gmra.mxu0 %v446
      %v742 = vpop.f32.mrf.mxu0
      %v743 = vadd.f32 0.0, %v742
      %v744 = vpop.f32.mrf.mxu0
      %745 = vmatprep.mubr.f32.mxu0 0.0
      %746 = vmatmul.mubr.f32.gmra.mxu0 %v449
      %v747 = vpop.f32.mrf.mxu0
      %v748 = vadd.f32 0.0, %v747
      %v749 = vpop.f32.mrf.mxu0
      %750 = vdwg.mxu0
      %751 = vmatprep.subr.mxu0 0.0
      %752 = vmatpush1.msra.mxu0 0.0
      %753 = vmatprep.subr.mxu0 0.0
      %754 = vmatpush1.msra.mxu0 0.0
      %755 = vmatprep.subr.mxu0 0.0
      %756 = vmatpush1.msra.mxu0 0.0
      %757 = vmatprep.subr.mxu0 0.0
      %758 = vmatpush1.msra.mxu0 0.0
      %759 = vmatprep.subr.mxu0 0.0
      %760 = vmatpush1.msra.mxu0 0.0
      %761 = vmatprep.subr.mxu0 0.0
      %762 = vmatpush1.msra.mxu0 0.0
      %763 = vmatprep.subr.mxu0 0.0
      %764 = vmatpush1.msra.mxu0 0.0
      %765 = vmatprep.subr.mxu0 0.0
      %766 = vmatpush1.msra.mxu0 0.0
      %767 = vmatprep.subr.mxu0 0.0
      %768 = vmatpush1.msra.mxu0 0.0
      %769 = vmatprep.subr.mxu0 0.0
      %770 = vmatpush1.msra.mxu0 0.0
      %771 = vmatprep.subr.mxu0 0.0
      %772 = vmatpush1.msra.mxu0 0.0
      %773 = vmatprep.subr.mxu0 0.0
      %774 = vmatpush1.msra.mxu0 0.0
      %775 = vmatprep.subr.mxu0 0.0
      %776 = vmatpush1.msra.mxu0 0.0
      %777 = vmatprep.subr.mxu0 0.0
      %778 = vmatpush1.msra.mxu0 0.0
      %779 = vmatprep.subr.mxu0 0.0
      %780 = vmatpush1.msra.mxu0 %v417
      %781 = vmatprep.subr.mxu0 0.0
      %782 = vmatpush1.msra.mxu0 %v414
      %783 = vmatprep.subr.mxu0 0.0
      %784 = vmatpush2.msra.mxu0 0.0
      %785 = vmatprep.subr.mxu0 0.0
      %786 = vmatpush2.msra.mxu0 0.0
      %787 = vmatprep.subr.mxu0 0.0
      %788 = vmatpush2.msra.mxu0 0.0
      %789 = vmatprep.subr.mxu0 0.0
      %790 = vmatpush2.msra.mxu0 0.0
      %791 = vmatprep.subr.mxu0 0.0
      %792 = vmatpush2.msra.mxu0 0.0
      %793 = vmatprep.subr.mxu0 0.0
      %794 = vmatpush2.msra.mxu0 0.0
      %795 = vmatprep.subr.mxu0 0.0
      %796 = vmatpush2.msra.mxu0 0.0
      %797 = vmatprep.subr.mxu0 0.0
      %798 = vmatpush2.msra.mxu0 0.0
      %799 = vmatprep.subr.mxu0 0.0
      %800 = vmatpush2.msra.mxu0 0.0
      %801 = vmatprep.subr.mxu0 0.0
      %802 = vmatpush2.msra.mxu0 0.0
      %803 = vmatprep.subr.mxu0 0.0
      %804 = vmatpush2.msra.mxu0 0.0
      %805 = vmatprep.subr.mxu0 0.0
      %806 = vmatpush2.msra.mxu0 0.0
      %807 = vmatprep.subr.mxu0 0.0
      %808 = vmatpush2.msra.mxu0 0.0
      %809 = vmatprep.subr.mxu0 0.0
      %810 = vmatpush2.msra.mxu0 0.0
      %811 = vmatprep.subr.mxu0 0.0
      %812 = vmatpush2.msra.mxu0 0.0
      %813 = vmatprep.subr.mxu0 0.0
      %814 = vmatpush2.msra.mxu0 0.0
      %815 = vmatprep.mubr.f32.mxu0 0.0
      %816 = vmatmul.mubr.f32.gmra.mxu0 %v446
      %v817 = vpop.f32.mrf.mxu0
      %v818 = vadd.f32 0.0, %v817
      %v819 = vpop.f32.mrf.mxu0
      %820 = vmatprep.mubr.f32.mxu0 0.0
      %821 = vmatmul.mubr.f32.gmra.mxu0 %v449
      %v822 = vpop.f32.mrf.mxu0
      %v823 = vadd.f32 0.0, %v822
      %v824 = vpop.f32.mrf.mxu0
      %825 = vdwg.mxu0
      %826 = vmatprep.subr.mxu0 0.0
      %827 = vmatpush1.msra.mxu0 0.0
      %828 = vmatprep.subr.mxu0 0.0
      %829 = vmatpush1.msra.mxu0 0.0
      %830 = vmatprep.subr.mxu0 0.0
      %831 = vmatpush1.msra.mxu0 0.0
      %832 = vmatprep.subr.mxu0 0.0
      %833 = vmatpush1.msra.mxu0 0.0
      %834 = vmatprep.subr.mxu0 0.0
      %835 = vmatpush1.msra.mxu0 0.0
      %836 = vmatprep.subr.mxu0 0.0
      %837 = vmatpush1.msra.mxu0 0.0
      %838 = vmatprep.subr.mxu0 0.0
      %839 = vmatpush1.msra.mxu0 0.0
      %840 = vmatprep.subr.mxu0 0.0
      %841 = vmatpush1.msra.mxu0 0.0
      %842 = vmatprep.subr.mxu0 0.0
      %843 = vmatpush1.msra.mxu0 0.0
      %844 = vmatprep.subr.mxu0 0.0
      %845 = vmatpush1.msra.mxu0 0.0
      %846 = vmatprep.subr.mxu0 0.0
      %847 = vmatpush1.msra.mxu0 0.0
      %848 = vmatprep.subr.mxu0 0.0
      %849 = vmatpush1.msra.mxu0 0.0
      %850 = vmatprep.subr.mxu0 0.0
      %851 = vmatpush1.msra.mxu0 0.0
      %852 = vmatprep.subr.mxu0 0.0
      %853 = vmatpush1.msra.mxu0 0.0
      %854 = vmatprep.subr.mxu0 0.0
      %855 = vmatpush1.msra.mxu0 %v425
      %856 = vmatprep.subr.mxu0 0.0
      %857 = vmatpush1.msra.mxu0 %v422
      %858 = vmatprep.subr.mxu0 0.0
      %859 = vmatpush2.msra.mxu0 0.0
      %860 = vmatprep.subr.mxu0 0.0
      %861 = vmatpush2.msra.mxu0 0.0
      %862 = vmatprep.subr.mxu0 0.0
      %863 = vmatpush2.msra.mxu0 0.0
      %864 = vmatprep.subr.mxu0 0.0
      %865 = vmatpush2.msra.mxu0 0.0
      %866 = vmatprep.subr.mxu0 0.0
      %867 = vmatpush2.msra.mxu0 0.0
      %868 = vmatprep.subr.mxu0 0.0
      %869 = vmatpush2.msra.mxu0 0.0
      %870 = vmatprep.subr.mxu0 0.0
      %871 = vmatpush2.msra.mxu0 0.0
      %872 = vmatprep.subr.mxu0 0.0
      %873 = vmatpush2.msra.mxu0 0.0
      %874 = vmatprep.subr.mxu0 0.0
      %875 = vmatpush2.msra.mxu0 0.0
      %876 = vmatprep.subr.mxu0 0.0
      %877 = vmatpush2.msra.mxu0 0.0
      %878 = vmatprep.subr.mxu0 0.0
      %879 = vmatpush2.msra.mxu0 0.0
      %880 = vmatprep.subr.mxu0 0.0
      %881 = vmatpush2.msra.mxu0 0.0
      %882 = vmatprep.subr.mxu0 0.0
      %883 = vmatpush2.msra.mxu0 0.0
      %884 = vmatprep.subr.mxu0 0.0
      %885 = vmatpush2.msra.mxu0 0.0
      %886 = vmatprep.subr.mxu0 0.0
      %887 = vmatpush2.msra.mxu0 0.0
      %888 = vmatprep.subr.mxu0 0.0
      %889 = vmatpush2.msra.mxu0 0.0
      %890 = vmatprep.mubr.f32.mxu0 0.0
      %891 = vmatmul.mubr.f32.gmra.mxu0 %v446
      %v892 = vpop.f32.mrf.mxu0
      %v893 = vadd.f32 0.0, %v892
      %v894 = vpop.f32.mrf.mxu0
      %895 = vmatprep.mubr.f32.mxu0 0.0
      %896 = vmatmul.mubr.f32.gmra.mxu0 %v449
      %v897 = vpop.f32.mrf.mxu0
      %v898 = vadd.f32 0.0, %v897
      %v899 = vpop.f32.mrf.mxu0
      %900 = vdwg.mxu0
      %901 = vmatprep.subr.mxu0 0.0
      %902 = vmatpush1.msra.mxu0 0.0
      %903 = vmatprep.subr.mxu0 0.0
      %904 = vmatpush1.msra.mxu0 0.0
      %905 = vmatprep.subr.mxu0 0.0
      %906 = vmatpush1.msra.mxu0 0.0
      %907 = vmatprep.subr.mxu0 0.0
      %908 = vmatpush1.msra.mxu0 0.0
      %909 = vmatprep.subr.mxu0 0.0
      %910 = vmatpush1.msra.mxu0 0.0
      %911 = vmatprep.subr.mxu0 0.0
      %912 = vmatpush1.msra.mxu0 0.0
      %913 = vmatprep.subr.mxu0 0.0
      %914 = vmatpush1.msra.mxu0 0.0
      %915 = vmatprep.subr.mxu0 0.0
      %916 = vmatpush1.msra.mxu0 0.0
      %917 = vmatprep.subr.mxu0 0.0
      %918 = vmatpush1.msra.mxu0 0.0
      %919 = vmatprep.subr.mxu0 0.0
      %920 = vmatpush1.msra.mxu0 0.0
      %921 = vmatprep.subr.mxu0 0.0
      %922 = vmatpush1.msra.mxu0 0.0
      %923 = vmatprep.subr.mxu0 0.0
      %924 = vmatpush1.msra.mxu0 0.0
      %925 = vmatprep.subr.mxu0 0.0
      %926 = vmatpush1.msra.mxu0 0.0
      %927 = vmatprep.subr.mxu0 0.0
      %928 = vmatpush1.msra.mxu0 0.0
      %929 = vmatprep.subr.mxu0 0.0
      %930 = vmatpush1.msra.mxu0 %v433
      %931 = vmatprep.subr.mxu0 0.0
      %932 = vmatpush1.msra.mxu0 %v430
      %933 = vmatprep.subr.mxu0 0.0
      %934 = vmatpush2.msra.mxu0 0.0
      %935 = vmatprep.subr.mxu0 0.0
      %936 = vmatpush2.msra.mxu0 0.0
      %937 = vmatprep.subr.mxu0 0.0
      %938 = vmatpush2.msra.mxu0 0.0
      %939 = vmatprep.subr.mxu0 0.0
      %940 = vmatpush2.msra.mxu0 0.0
      %941 = vmatprep.subr.mxu0 0.0
      %942 = vmatpush2.msra.mxu0 0.0
      %943 = vmatprep.subr.mxu0 0.0
      %944 = vmatpush2.msra.mxu0 0.0
      %945 = vmatprep.subr.mxu0 0.0
      %946 = vmatpush2.msra.mxu0 0.0
      %947 = vmatprep.subr.mxu0 0.0
      %948 = vmatpush2.msra.mxu0 0.0
      %949 = vmatprep.subr.mxu0 0.0
      %950 = vmatpush2.msra.mxu0 0.0
      %951 = vmatprep.subr.mxu0 0.0
      %952 = vmatpush2.msra.mxu0 0.0
      %953 = vmatprep.subr.mxu0 0.0
      %954 = vmatpush2.msra.mxu0 0.0
      %955 = vmatprep.subr.mxu0 0.0
      %956 = vmatpush2.msra.mxu0 0.0
      %957 = vmatprep.subr.mxu0 0.0
      %958 = vmatpush2.msra.mxu0 0.0
      %959 = vmatprep.subr.mxu0 0.0
      %960 = vmatpush2.msra.mxu0 0.0
      %961 = vmatprep.subr.mxu0 0.0
      %962 = vmatpush2.msra.mxu0 0.0
      %963 = vmatprep.subr.mxu0 0.0
      %964 = vmatpush2.msra.mxu0 0.0
      %965 = vmatprep.mubr.f32.mxu0 0.0
      %966 = vmatmul.mubr.f32.gmra.mxu0 %v446
      %v967 = vpop.f32.mrf.mxu0
      %v968 = vadd.f32 0.0, %v967
      %v969 = vpop.f32.mrf.mxu0
      %970 = vmatprep.mubr.f32.mxu0 0.0
      %971 = vmatmul.mubr.f32.gmra.mxu0 %v449
      %v972 = vpop.f32.mrf.mxu0
      %v973 = vadd.f32 0.0, %v972
      %v974 = vpop.f32.mrf.mxu0
      %975 = vdwg.mxu0
      %976 = vmatprep.subr.mxu0 0.0
      %977 = vmatpush1.msra.mxu0 0.0
      %978 = vmatprep.subr.mxu0 0.0
      %979 = vmatpush1.msra.mxu0 0.0
      %980 = vmatprep.subr.mxu0 0.0
      %981 = vmatpush1.msra.mxu0 0.0
      %982 = vmatprep.subr.mxu0 0.0
      %983 = vmatpush1.msra.mxu0 0.0
      %984 = vmatprep.subr.mxu0 0.0
      %985 = vmatpush1.msra.mxu0 0.0
      %986 = vmatprep.subr.mxu0 0.0
      %987 = vmatpush1.msra.mxu0 0.0
      %988 = vmatprep.subr.mxu0 0.0
      %989 = vmatpush1.msra.mxu0 0.0
      %990 = vmatprep.subr.mxu0 0.0
      %991 = vmatpush1.msra.mxu0 0.0
      %992 = vmatprep.subr.mxu0 0.0
      %993 = vmatpush1.msra.mxu0 0.0
      %994 = vmatprep.subr.mxu0 0.0
      %995 = vmatpush1.msra.mxu0 0.0
      %996 = vmatprep.subr.mxu0 0.0
      %997 = vmatpush1.msra.mxu0 0.0
      %998 = vmatprep.subr.mxu0 0.0
      %999 = vmatpush1.msra.mxu0 0.0
      %1000 = vmatprep.subr.mxu0 0.0
      %1001 = vmatpush1.msra.mxu0 0.0
      %1002 = vmatprep.subr.mxu0 0.0
      %1003 = vmatpush1.msra.mxu0 0.0
      %1004 = vmatprep.subr.mxu0 0.0
      %1005 = vmatpush1.msra.mxu0 %v441
      %1006 = vmatprep.subr.mxu0 0.0
      %1007 = vmatpush1.msra.mxu0 %v438
      %1008 = vmatprep.subr.mxu0 0.0
      %1009 = vmatpush2.msra.mxu0 0.0
      %1010 = vmatprep.subr.mxu0 0.0
      %1011 = vmatpush2.msra.mxu0 0.0
      %1012 = vmatprep.subr.mxu0 0.0
      %1013 = vmatpush2.msra.mxu0 0.0
      %1014 = vmatprep.subr.mxu0 0.0
      %1015 = vmatpush2.msra.mxu0 0.0
      %1016 = vmatprep.subr.mxu0 0.0
      %1017 = vmatpush2.msra.mxu0 0.0
      %1018 = vmatprep.subr.mxu0 0.0
      %1019 = vmatpush2.msra.mxu0 0.0
      %1020 = vmatprep.subr.mxu0 0.0
      %1021 = vmatpush2.msra.mxu0 0.0
      %1022 = vmatprep.subr.mxu0 0.0
      %1023 = vmatpush2.msra.mxu0 0.0
      %1024 = vmatprep.subr.mxu0 0.0
      %1025 = vmatpush2.msra.mxu0 0.0
      %1026 = vmatprep.subr.mxu0 0.0
      %1027 = vmatpush2.msra.mxu0 0.0
      %1028 = vmatprep.subr.mxu0 0.0
      %1029 = vmatpush2.msra.mxu0 0.0
      %1030 = vmatprep.subr.mxu0 0.0
      %1031 = vmatpush2.msra.mxu0 0.0
      %1032 = vmatprep.subr.mxu0 0.0
      %1033 = vmatpush2.msra.mxu0 0.0
      %1034 = vmatprep.subr.mxu0 0.0
      %1035 = vmatpush2.msra.mxu0 0.0
      %1036 = vmatprep.subr.mxu0 0.0
      %1037 = vmatpush2.msra.mxu0 0.0
      %1038 = vmatprep.subr.mxu0 0.0
      %1039 = vmatpush2.msra.mxu0 0.0
      %1040 = vmatprep.mubr.f32.mxu0 0.0
      %1041 = vmatmul.mubr.f32.gmra.mxu0 %v446
      %v1042 = vpop.f32.mrf.mxu0
      %v1043 = vadd.f32 0.0, %v1042
      %v1044 = vpop.f32.mrf.mxu0
      %1045 = vmatprep.mubr.f32.mxu0 0.0
      %1046 = vmatmul.mubr.f32.gmra.mxu0 %v449
      %v1047 = vpop.f32.mrf.mxu0
      %v1048 = vadd.f32 0.0, %v1047
      %v1049 = vpop.f32.mrf.mxu0
      %1050 = vdwg.mxu0
      %v1052 = vlaneseq
      %v1053 = vshrl.u32 %v1052, 7
      %v1054 = vsub.s32 0, %v1053
      %v1055 = vrot.slane %v290, %v1054
      %v1057 = vadd.f32 %v518, %v1055
      %v1058 = vadd.f32 %v523, %v1055
      %v1059 = vadd.f32 %v593, %v1055
      %v1060 = vadd.f32 %v598, %v1055
      %v1061 = vadd.f32 %v668, %v1055
      %v1062 = vadd.f32 %v673, %v1055
      %v1063 = vadd.f32 %v743, %v1055
      %v1064 = vadd.f32 %v748, %v1055
      %v1065 = vadd.f32 %v818, %v1055
      %v1066 = vadd.f32 %v823, %v1055
      %v1067 = vadd.f32 %v893, %v1055
      %v1068 = vadd.f32 %v898, %v1055
      %v1069 = vadd.f32 %v968, %v1055
      %v1070 = vadd.f32 %v973, %v1055
      %v1071 = vadd.f32 %v1043, %v1055
      %v1072 = vadd.f32 %v1048, %v1055
      %v1073 = vmax.f32 %v1057, 0.0
      %v1074 = vmax.f32 %v1058, 0.0
      %v1075 = vmax.f32 %v1059, 0.0
      %v1076 = vmax.f32 %v1060, 0.0
      %v1077 = vmax.f32 %v1061, 0.0
      %v1078 = vmax.f32 %v1062, 0.0
      %v1079 = vmax.f32 %v1063, 0.0
      %v1080 = vmax.f32 %v1064, 0.0
      %v1081 = vmax.f32 %v1065, 0.0
      %v1082 = vmax.f32 %v1066, 0.0
      %v1083 = vmax.f32 %v1067, 0.0
      %v1084 = vmax.f32 %v1068, 0.0
      %v1085 = vmax.f32 %v1069, 0.0
      %v1086 = vmax.f32 %v1070, 0.0
      %v1087 = vmax.f32 %v1071, 0.0
      %v1088 = vmax.f32 %v1072, 0.0
      %v1089 = vld [vmem:[%s4] sm:$0xf]
      %v1090 = vld [vmem:[%s4 + $0x4] sm:$0xf]
      %v1091 = vld [vmem:[%s4 + $0x8] sm:$0xf]
      %v1092 = vld [vmem:[%s4 + $0xc] sm:$0xf]
      %v1093 = vld [vmem:[%s4 + $0x10] sm:$0xf]
      %v1094 = vld [vmem:[%s4 + $0x14] sm:$0xf]
      %v1095 = vld [vmem:[%s4 + $0x18] sm:$0xf]
      %v1096 = vld [vmem:[%s4 + $0x1c] sm:$0xf]
      %v1097 = vld [vmem:[%s4 + $0x20] sm:$0xf]
      %v1098 = vld [vmem:[%s4 + $0x24] sm:$0xf]
      %v1099 = vld [vmem:[%s4 + $0x28] sm:$0xf]
      %v1100 = vld [vmem:[%s4 + $0x2c] sm:$0xf]
      %v1101 = vld [vmem:[%s4 + $0x30] sm:$0xf]
      %v1102 = vld [vmem:[%s4 + $0x34] sm:$0xf]
      %v1103 = vld [vmem:[%s4 + $0x38] sm:$0xf]
      %v1104 = vld [vmem:[%s4 + $0x3c] sm:$0xf]
      %v1105 = vld [vmem:[%s5] sm:$0x1]
      %v1106 = vpack.c.bf16 %v1074, %v1073
      %v1107 = vpack.c.bf16 %v1076, %v1075
      %v1108 = vpack.c.bf16 %v1078, %v1077
      %v1109 = vpack.c.bf16 %v1080, %v1079
      %v1110 = vpack.c.bf16 %v1082, %v1081
      %v1111 = vpack.c.bf16 %v1084, %v1083
      %v1112 = vpack.c.bf16 %v1086, %v1085
      %v1113 = vpack.c.bf16 %v1088, %v1087
      %v1130 = vunpack.c.l.b16 %v1089
      %v1131 = vunpack.c.l.b16 %v1090
      %v1132 = vunpack.c.l.b16 %v1091
      %v1133 = vunpack.c.l.b16 %v1092
      %v1134 = vunpack.c.l.b16 %v1093
      %v1135 = vunpack.c.l.b16 %v1094
      %v1136 = vunpack.c.l.b16 %v1095
      %v1137 = vunpack.c.l.b16 %v1096
      %v1138 = vunpack.c.l.b16 %v1097
      %v1139 = vunpack.c.l.b16 %v1098
      %v1140 = vunpack.c.l.b16 %v1099
      %v1141 = vunpack.c.l.b16 %v1100
      %v1142 = vunpack.c.l.b16 %v1101
      %v1143 = vunpack.c.l.b16 %v1102
      %v1144 = vunpack.c.l.b16 %v1103
      %v1145 = vunpack.c.l.b16 %v1104
      %v1146 = vpack.c.b16 %v1131, %v1130
      %v1147 = vpack.c.b16 %v1133, %v1132
      %v1148 = vpack.c.b16 %v1135, %v1134
      %v1149 = vpack.c.b16 %v1137, %v1136
      %v1150 = vpack.c.b16 %v1139, %v1138
      %v1151 = vpack.c.b16 %v1141, %v1140
      %v1152 = vpack.c.b16 %v1143, %v1142
      %v1153 = vpack.c.b16 %v1145, %v1144
      %1162 = vmatprep.subr.bf16.mxu0 0
      %1163 = vmatpush1.bf16.msra.mxu0 %v1153
      %1164 = vmatprep.subr.bf16.mxu0 0
      %1165 = vmatpush1.bf16.msra.mxu0 %v1152
      %1166 = vmatprep.subr.bf16.mxu0 0
      %1167 = vmatpush1.bf16.msra.mxu0 %v1151
      %1168 = vmatprep.subr.bf16.mxu0 0
      %1169 = vmatpush1.bf16.msra.mxu0 %v1150
      %1170 = vmatprep.subr.bf16.mxu0 0
      %1171 = vmatpush1.bf16.msra.mxu0 %v1149
      %1172 = vmatprep.subr.bf16.mxu0 0
      %1173 = vmatpush1.bf16.msra.mxu0 %v1148
      %1174 = vmatprep.subr.bf16.mxu0 0
      %1175 = vmatpush1.bf16.msra.mxu0 %v1147
      %1176 = vmatprep.subr.bf16.mxu0 0
      %1177 = vmatpush1.bf16.msra.mxu0 %v1146
      %1178 = vmatprep.subr.bf16.mxu0 0
      %1179 = vmatpush2.bf16.msra.mxu0 0
      %1180 = vmatprep.subr.bf16.mxu0 0
      %1181 = vmatpush2.bf16.msra.mxu0 0
      %1182 = vmatprep.subr.bf16.mxu0 0
      %1183 = vmatpush2.bf16.msra.mxu0 0
      %1184 = vmatprep.subr.bf16.mxu0 0
      %1185 = vmatpush2.bf16.msra.mxu0 0
      %1186 = vmatprep.subr.bf16.mxu0 0
      %1187 = vmatpush2.bf16.msra.mxu0 0
      %1188 = vmatprep.subr.bf16.mxu0 0
      %1189 = vmatpush2.bf16.msra.mxu0 0
      %1190 = vmatprep.subr.bf16.mxu0 0
      %1191 = vmatpush2.bf16.msra.mxu0 0
      %1192 = vmatprep.subr.bf16.mxu0 0
      %1193 = vmatpush2.bf16.msra.mxu0 0
      %1194 = vmatprep.mubr.bf16.mxu0 0
      %1195 = vmatmul.mubr.bf16.gmra.mxu0 %v1106
      %v1196 = vpop.f32.mrf.mxu0
      %v1197 = vadd.f32 0.0, %v1196
      %v1198 = vpop.f32.mrf.mxu0
      %v1199 = vpop.f32.mrf.mxu0
      %v1200 = vadd.f32 0.0, %v1199
      %v1201 = vpop.f32.mrf.mxu0
      %1202 = vmatprep.mubr.bf16.mxu0 0
      %1203 = vmatmul.mubr.bf16.gmra.mxu0 %v1107
      %v1204 = vpop.f32.mrf.mxu0
      %v1205 = vadd.f32 0.0, %v1204
      %v1206 = vpop.f32.mrf.mxu0
      %v1207 = vpop.f32.mrf.mxu0
      %v1208 = vadd.f32 0.0, %v1207
      %v1209 = vpop.f32.mrf.mxu0
      %1210 = vmatprep.mubr.bf16.mxu0 0
      %1211 = vmatmul.mubr.bf16.gmra.mxu0 %v1108
      %v1212 = vpop.f32.mrf.mxu0
      %v1213 = vadd.f32 0.0, %v1212
      %v1214 = vpop.f32.mrf.mxu0
      %v1215 = vpop.f32.mrf.mxu0
      %v1216 = vadd.f32 0.0, %v1215
      %v1217 = vpop.f32.mrf.mxu0
      %1218 = vmatprep.mubr.bf16.mxu0 0
      %1219 = vmatmul.mubr.bf16.gmra.mxu0 %v1109
      %v1220 = vpop.f32.mrf.mxu0
      %v1221 = vadd.f32 0.0, %v1220
      %v1222 = vpop.f32.mrf.mxu0
      %v1223 = vpop.f32.mrf.mxu0
      %v1224 = vadd.f32 0.0, %v1223
      %v1225 = vpop.f32.mrf.mxu0
      %1226 = vmatprep.mubr.bf16.mxu0 0
      %1227 = vmatmul.mubr.bf16.gmra.mxu0 %v1110
      %v1228 = vpop.f32.mrf.mxu0
      %v1229 = vadd.f32 0.0, %v1228
      %v1230 = vpop.f32.mrf.mxu0
      %v1231 = vpop.f32.mrf.mxu0
      %v1232 = vadd.f32 0.0, %v1231
      %v1233 = vpop.f32.mrf.mxu0
      %1234 = vmatprep.mubr.bf16.mxu0 0
      %1235 = vmatmul.mubr.bf16.gmra.mxu0 %v1111
      %v1236 = vpop.f32.mrf.mxu0
      %v1237 = vadd.f32 0.0, %v1236
      %v1238 = vpop.f32.mrf.mxu0
      %v1239 = vpop.f32.mrf.mxu0
      %v1240 = vadd.f32 0.0, %v1239
      %v1241 = vpop.f32.mrf.mxu0
      %1242 = vmatprep.mubr.bf16.mxu0 0
      %1243 = vmatmul.mubr.bf16.gmra.mxu0 %v1112
      %v1244 = vpop.f32.mrf.mxu0
      %v1245 = vadd.f32 0.0, %v1244
      %v1246 = vpop.f32.mrf.mxu0
      %v1247 = vpop.f32.mrf.mxu0
      %v1248 = vadd.f32 0.0, %v1247
      %v1249 = vpop.f32.mrf.mxu0
      %1250 = vmatprep.mubr.bf16.mxu0 0
      %1251 = vmatmul.mubr.bf16.gmra.mxu0 %v1113
      %v1252 = vpop.f32.mrf.mxu0
      %v1253 = vadd.f32 0.0, %v1252
      %v1254 = vpop.f32.mrf.mxu0
      %v1255 = vpop.f32.mrf.mxu0
      %v1256 = vadd.f32 0.0, %v1255
      %v1257 = vpop.f32.mrf.mxu0
      %1258 = vdwg.mxu0
      %1259 = vmatprep.subr.mxu0 0.0
      %1260 = vmatpush1.msra.mxu0 0.0
      %1261 = vmatprep.subr.mxu0 0.0
      %1262 = vmatpush1.msra.mxu0 0.0
      %1263 = vmatprep.subr.mxu0 0.0
      %1264 = vmatpush1.msra.mxu0 0.0
      %1265 = vmatprep.subr.mxu0 0.0
      %1266 = vmatpush1.msra.mxu0 0.0
      %1267 = vmatprep.subr.mxu0 0.0
      %1268 = vmatpush1.msra.mxu0 0.0
      %1269 = vmatprep.subr.mxu0 0.0
      %1270 = vmatpush1.msra.mxu0 0.0
      %1271 = vmatprep.subr.mxu0 0.0
      %1272 = vmatpush1.msra.mxu0 0.0
      %1273 = vmatprep.subr.mxu0 0.0
      %1274 = vmatpush1.msra.mxu0 0.0
      %1275 = vmatprep.subr.mxu0 0.0
      %1276 = vmatpush1.msra.mxu0 0.0
      %1277 = vmatprep.subr.mxu0 0.0
      %1278 = vmatpush1.msra.mxu0 0.0
      %1279 = vmatprep.subr.mxu0 0.0
      %1280 = vmatpush1.msra.mxu0 0.0
      %1281 = vmatprep.subr.mxu0 0.0
      %1282 = vmatpush1.msra.mxu0 0.0
      %1283 = vmatprep.subr.mxu0 0.0
      %1284 = vmatpush1.msra.mxu0 0.0
      %1285 = vmatprep.subr.mxu0 0.0
      %1286 = vmatpush1.msra.mxu0 0.0
      %1287 = vmatprep.subr.mxu0 0.0
      %1288 = vmatpush1.msra.mxu0 %v1200
      %1289 = vmatprep.subr.mxu0 0.0
      %1290 = vmatpush1.msra.mxu0 %v1197
      %1291 = vmatprep.subr.mxu0 0.0
      %1292 = vmatpush2.msra.mxu0 0.0
      %1293 = vmatprep.subr.mxu0 0.0
      %1294 = vmatpush2.msra.mxu0 0.0
      %1295 = vmatprep.subr.mxu0 0.0
      %1296 = vmatpush2.msra.mxu0 0.0
      %1297 = vmatprep.subr.mxu0 0.0
      %1298 = vmatpush2.msra.mxu0 0.0
      %1299 = vmatprep.subr.mxu0 0.0
      %1300 = vmatpush2.msra.mxu0 0.0
      %1301 = vmatprep.subr.mxu0 0.0
      %1302 = vmatpush2.msra.mxu0 0.0
      %1303 = vmatprep.subr.mxu0 0.0
      %1304 = vmatpush2.msra.mxu0 0.0
      %1305 = vmatprep.subr.mxu0 0.0
      %1306 = vmatpush2.msra.mxu0 0.0
      %1307 = vmatprep.subr.mxu0 0.0
      %1308 = vmatpush2.msra.mxu0 0.0
      %1309 = vmatprep.subr.mxu0 0.0
      %1310 = vmatpush2.msra.mxu0 0.0
      %1311 = vmatprep.subr.mxu0 0.0
      %1312 = vmatpush2.msra.mxu0 0.0
      %1313 = vmatprep.subr.mxu0 0.0
      %1314 = vmatpush2.msra.mxu0 0.0
      %1315 = vmatprep.subr.mxu0 0.0
      %1316 = vmatpush2.msra.mxu0 0.0
      %1317 = vmatprep.subr.mxu0 0.0
      %1318 = vmatpush2.msra.mxu0 0.0
      %1319 = vmatprep.subr.mxu0 0.0
      %1320 = vmatpush2.msra.mxu0 0.0
      %1321 = vmatprep.subr.mxu0 0.0
      %1322 = vmatpush2.msra.mxu0 0.0
      %1323 = vmatprep.mubr.f32.mxu0 0.0
      %1324 = vmatmul.mubr.f32.gmra.mxu0 %v446
      %v1325 = vpop.f32.mrf.mxu0
      %v1326 = vadd.f32 0.0, %v1325
      %v1327 = vpop.f32.mrf.mxu0
      %1328 = vmatprep.mubr.f32.mxu0 0.0
      %1329 = vmatmul.mubr.f32.gmra.mxu0 %v449
      %v1330 = vpop.f32.mrf.mxu0
      %v1331 = vadd.f32 0.0, %v1330
      %v1332 = vpop.f32.mrf.mxu0
      %1333 = vdwg.mxu0
      %1334 = vmatprep.subr.mxu0 0.0
      %1335 = vmatpush1.msra.mxu0 0.0
      %1336 = vmatprep.subr.mxu0 0.0
      %1337 = vmatpush1.msra.mxu0 0.0
      %1338 = vmatprep.subr.mxu0 0.0
      %1339 = vmatpush1.msra.mxu0 0.0
      %1340 = vmatprep.subr.mxu0 0.0
      %1341 = vmatpush1.msra.mxu0 0.0
      %1342 = vmatprep.subr.mxu0 0.0
      %1343 = vmatpush1.msra.mxu0 0.0
      %1344 = vmatprep.subr.mxu0 0.0
      %1345 = vmatpush1.msra.mxu0 0.0
      %1346 = vmatprep.subr.mxu0 0.0
      %1347 = vmatpush1.msra.mxu0 0.0
      %1348 = vmatprep.subr.mxu0 0.0
      %1349 = vmatpush1.msra.mxu0 0.0
      %1350 = vmatprep.subr.mxu0 0.0
      %1351 = vmatpush1.msra.mxu0 0.0
      %1352 = vmatprep.subr.mxu0 0.0
      %1353 = vmatpush1.msra.mxu0 0.0
      %1354 = vmatprep.subr.mxu0 0.0
      %1355 = vmatpush1.msra.mxu0 0.0
      %1356 = vmatprep.subr.mxu0 0.0
      %1357 = vmatpush1.msra.mxu0 0.0
      %1358 = vmatprep.subr.mxu0 0.0
      %1359 = vmatpush1.msra.mxu0 0.0
      %1360 = vmatprep.subr.mxu0 0.0
      %1361 = vmatpush1.msra.mxu0 0.0
      %1362 = vmatprep.subr.mxu0 0.0
      %1363 = vmatpush1.msra.mxu0 %v1208
      %1364 = vmatprep.subr.mxu0 0.0
      %1365 = vmatpush1.msra.mxu0 %v1205
      %1366 = vmatprep.subr.mxu0 0.0
      %1367 = vmatpush2.msra.mxu0 0.0
      %1368 = vmatprep.subr.mxu0 0.0
      %1369 = vmatpush2.msra.mxu0 0.0
      %1370 = vmatprep.subr.mxu0 0.0
      %1371 = vmatpush2.msra.mxu0 0.0
      %1372 = vmatprep.subr.mxu0 0.0
      %1373 = vmatpush2.msra.mxu0 0.0
      %1374 = vmatprep.subr.mxu0 0.0
      %1375 = vmatpush2.msra.mxu0 0.0
      %1376 = vmatprep.subr.mxu0 0.0
      %1377 = vmatpush2.msra.mxu0 0.0
      %1378 = vmatprep.subr.mxu0 0.0
      %1379 = vmatpush2.msra.mxu0 0.0
      %1380 = vmatprep.subr.mxu0 0.0
      %1381 = vmatpush2.msra.mxu0 0.0
      %1382 = vmatprep.subr.mxu0 0.0
      %1383 = vmatpush2.msra.mxu0 0.0
      %1384 = vmatprep.subr.mxu0 0.0
      %1385 = vmatpush2.msra.mxu0 0.0
      %1386 = vmatprep.subr.mxu0 0.0
      %1387 = vmatpush2.msra.mxu0 0.0
      %1388 = vmatprep.subr.mxu0 0.0
      %1389 = vmatpush2.msra.mxu0 0.0
      %1390 = vmatprep.subr.mxu0 0.0
      %1391 = vmatpush2.msra.mxu0 0.0
      %1392 = vmatprep.subr.mxu0 0.0
      %1393 = vmatpush2.msra.mxu0 0.0
      %1394 = vmatprep.subr.mxu0 0.0
      %1395 = vmatpush2.msra.mxu0 0.0
      %1396 = vmatprep.subr.mxu0 0.0
      %1397 = vmatpush2.msra.mxu0 0.0
      %1398 = vmatprep.mubr.f32.mxu0 0.0
      %1399 = vmatmul.mubr.f32.gmra.mxu0 %v446
      %v1400 = vpop.f32.mrf.mxu0
      %v1401 = vadd.f32 0.0, %v1400
      %v1402 = vpop.f32.mrf.mxu0
      %1403 = vmatprep.mubr.f32.mxu0 0.0
      %1404 = vmatmul.mubr.f32.gmra.mxu0 %v449
      %v1405 = vpop.f32.mrf.mxu0
      %v1406 = vadd.f32 0.0, %v1405
      %v1407 = vpop.f32.mrf.mxu0
      %1408 = vdwg.mxu0
      %1409 = vmatprep.subr.mxu0 0.0
      %1410 = vmatpush1.msra.mxu0 0.0
      %1411 = vmatprep.subr.mxu0 0.0
      %1412 = vmatpush1.msra.mxu0 0.0
      %1413 = vmatprep.subr.mxu0 0.0
      %1414 = vmatpush1.msra.mxu0 0.0
      %1415 = vmatprep.subr.mxu0 0.0
      %1416 = vmatpush1.msra.mxu0 0.0
      %1417 = vmatprep.subr.mxu0 0.0
      %1418 = vmatpush1.msra.mxu0 0.0
      %1419 = vmatprep.subr.mxu0 0.0
      %1420 = vmatpush1.msra.mxu0 0.0
      %1421 = vmatprep.subr.mxu0 0.0
      %1422 = vmatpush1.msra.mxu0 0.0
      %1423 = vmatprep.subr.mxu0 0.0
      %1424 = vmatpush1.msra.mxu0 0.0
      %1425 = vmatprep.subr.mxu0 0.0
      %1426 = vmatpush1.msra.mxu0 0.0
      %1427 = vmatprep.subr.mxu0 0.0
      %1428 = vmatpush1.msra.mxu0 0.0
      %1429 = vmatprep.subr.mxu0 0.0
      %1430 = vmatpush1.msra.mxu0 0.0
      %1431 = vmatprep.subr.mxu0 0.0
      %1432 = vmatpush1.msra.mxu0 0.0
      %1433 = vmatprep.subr.mxu0 0.0
      %1434 = vmatpush1.msra.mxu0 0.0
      %1435 = vmatprep.subr.mxu0 0.0
      %1436 = vmatpush1.msra.mxu0 0.0
      %1437 = vmatprep.subr.mxu0 0.0
      %1438 = vmatpush1.msra.mxu0 %v1216
      %1439 = vmatprep.subr.mxu0 0.0
      %1440 = vmatpush1.msra.mxu0 %v1213
      %1441 = vmatprep.subr.mxu0 0.0
      %1442 = vmatpush2.msra.mxu0 0.0
      %1443 = vmatprep.subr.mxu0 0.0
      %1444 = vmatpush2.msra.mxu0 0.0
      %1445 = vmatprep.subr.mxu0 0.0
      %1446 = vmatpush2.msra.mxu0 0.0
      %1447 = vmatprep.subr.mxu0 0.0
      %1448 = vmatpush2.msra.mxu0 0.0
      %1449 = vmatprep.subr.mxu0 0.0
      %1450 = vmatpush2.msra.mxu0 0.0
      %1451 = vmatprep.subr.mxu0 0.0
      %1452 = vmatpush2.msra.mxu0 0.0
      %1453 = vmatprep.subr.mxu0 0.0
      %1454 = vmatpush2.msra.mxu0 0.0
      %1455 = vmatprep.subr.mxu0 0.0
      %1456 = vmatpush2.msra.mxu0 0.0
      %1457 = vmatprep.subr.mxu0 0.0
      %1458 = vmatpush2.msra.mxu0 0.0
      %1459 = vmatprep.subr.mxu0 0.0
      %1460 = vmatpush2.msra.mxu0 0.0
      %1461 = vmatprep.subr.mxu0 0.0
      %1462 = vmatpush2.msra.mxu0 0.0
      %1463 = vmatprep.subr.mxu0 0.0
      %1464 = vmatpush2.msra.mxu0 0.0
      %1465 = vmatprep.subr.mxu0 0.0
      %1466 = vmatpush2.msra.mxu0 0.0
      %1467 = vmatprep.subr.mxu0 0.0
      %1468 = vmatpush2.msra.mxu0 0.0
      %1469 = vmatprep.subr.mxu0 0.0
      %1470 = vmatpush2.msra.mxu0 0.0
      %1471 = vmatprep.subr.mxu0 0.0
      %1472 = vmatpush2.msra.mxu0 0.0
      %1473 = vmatprep.mubr.f32.mxu0 0.0
      %1474 = vmatmul.mubr.f32.gmra.mxu0 %v446
      %v1475 = vpop.f32.mrf.mxu0
      %v1476 = vadd.f32 0.0, %v1475
      %v1477 = vpop.f32.mrf.mxu0
      %1478 = vmatprep.mubr.f32.mxu0 0.0
      %1479 = vmatmul.mubr.f32.gmra.mxu0 %v449
      %v1480 = vpop.f32.mrf.mxu0
      %v1481 = vadd.f32 0.0, %v1480
      %v1482 = vpop.f32.mrf.mxu0
      %1483 = vdwg.mxu0
      %1484 = vmatprep.subr.mxu0 0.0
      %1485 = vmatpush1.msra.mxu0 0.0
      %1486 = vmatprep.subr.mxu0 0.0
      %1487 = vmatpush1.msra.mxu0 0.0
      %1488 = vmatprep.subr.mxu0 0.0
      %1489 = vmatpush1.msra.mxu0 0.0
      %1490 = vmatprep.subr.mxu0 0.0
      %1491 = vmatpush1.msra.mxu0 0.0
      %1492 = vmatprep.subr.mxu0 0.0
      %1493 = vmatpush1.msra.mxu0 0.0
      %1494 = vmatprep.subr.mxu0 0.0
      %1495 = vmatpush1.msra.mxu0 0.0
      %1496 = vmatprep.subr.mxu0 0.0
      %1497 = vmatpush1.msra.mxu0 0.0
      %1498 = vmatprep.subr.mxu0 0.0
      %1499 = vmatpush1.msra.mxu0 0.0
      %1500 = vmatprep.subr.mxu0 0.0
      %1501 = vmatpush1.msra.mxu0 0.0
      %1502 = vmatprep.subr.mxu0 0.0
      %1503 = vmatpush1.msra.mxu0 0.0
      %1504 = vmatprep.subr.mxu0 0.0
      %1505 = vmatpush1.msra.mxu0 0.0
      %1506 = vmatprep.subr.mxu0 0.0
      %1507 = vmatpush1.msra.mxu0 0.0
      %1508 = vmatprep.subr.mxu0 0.0
      %1509 = vmatpush1.msra.mxu0 0.0
      %1510 = vmatprep.subr.mxu0 0.0
      %1511 = vmatpush1.msra.mxu0 0.0
      %1512 = vmatprep.subr.mxu0 0.0
      %1513 = vmatpush1.msra.mxu0 %v1224
      %1514 = vmatprep.subr.mxu0 0.0
      %1515 = vmatpush1.msra.mxu0 %v1221
      %1516 = vmatprep.subr.mxu0 0.0
      %1517 = vmatpush2.msra.mxu0 0.0
      %1518 = vmatprep.subr.mxu0 0.0
      %1519 = vmatpush2.msra.mxu0 0.0
      %1520 = vmatprep.subr.mxu0 0.0
      %1521 = vmatpush2.msra.mxu0 0.0
      %1522 = vmatprep.subr.mxu0 0.0
      %1523 = vmatpush2.msra.mxu0 0.0
      %1524 = vmatprep.subr.mxu0 0.0
      %1525 = vmatpush2.msra.mxu0 0.0
      %1526 = vmatprep.subr.mxu0 0.0
      %1527 = vmatpush2.msra.mxu0 0.0
      %1528 = vmatprep.subr.mxu0 0.0
      %1529 = vmatpush2.msra.mxu0 0.0
      %1530 = vmatprep.subr.mxu0 0.0
      %1531 = vmatpush2.msra.mxu0 0.0
      %1532 = vmatprep.subr.mxu0 0.0
      %1533 = vmatpush2.msra.mxu0 0.0
      %1534 = vmatprep.subr.mxu0 0.0
      %1535 = vmatpush2.msra.mxu0 0.0
      %1536 = vmatprep.subr.mxu0 0.0
      %1537 = vmatpush2.msra.mxu0 0.0
      %1538 = vmatprep.subr.mxu0 0.0
      %1539 = vmatpush2.msra.mxu0 0.0
      %1540 = vmatprep.subr.mxu0 0.0
      %1541 = vmatpush2.msra.mxu0 0.0
      %1542 = vmatprep.subr.mxu0 0.0
      %1543 = vmatpush2.msra.mxu0 0.0
      %1544 = vmatprep.subr.mxu0 0.0
      %1545 = vmatpush2.msra.mxu0 0.0
      %1546 = vmatprep.subr.mxu0 0.0
      %1547 = vmatpush2.msra.mxu0 0.0
      %1548 = vmatprep.mubr.f32.mxu0 0.0
      %1549 = vmatmul.mubr.f32.gmra.mxu0 %v446
      %v1550 = vpop.f32.mrf.mxu0
      %v1551 = vadd.f32 0.0, %v1550
      %v1552 = vpop.f32.mrf.mxu0
      %1553 = vmatprep.mubr.f32.mxu0 0.0
      %1554 = vmatmul.mubr.f32.gmra.mxu0 %v449
      %v1555 = vpop.f32.mrf.mxu0
      %v1556 = vadd.f32 0.0, %v1555
      %v1557 = vpop.f32.mrf.mxu0
      %1558 = vdwg.mxu0
      %1559 = vmatprep.subr.mxu0 0.0
      %1560 = vmatpush1.msra.mxu0 0.0
      %1561 = vmatprep.subr.mxu0 0.0
      %1562 = vmatpush1.msra.mxu0 0.0
      %1563 = vmatprep.subr.mxu0 0.0
      %1564 = vmatpush1.msra.mxu0 0.0
      %1565 = vmatprep.subr.mxu0 0.0
      %1566 = vmatpush1.msra.mxu0 0.0
      %1567 = vmatprep.subr.mxu0 0.0
      %1568 = vmatpush1.msra.mxu0 0.0
      %1569 = vmatprep.subr.mxu0 0.0
      %1570 = vmatpush1.msra.mxu0 0.0
      %1571 = vmatprep.subr.mxu0 0.0
      %1572 = vmatpush1.msra.mxu0 0.0
      %1573 = vmatprep.subr.mxu0 0.0
      %1574 = vmatpush1.msra.mxu0 0.0
      %1575 = vmatprep.subr.mxu0 0.0
      %1576 = vmatpush1.msra.mxu0 0.0
      %1577 = vmatprep.subr.mxu0 0.0
      %1578 = vmatpush1.msra.mxu0 0.0
      %1579 = vmatprep.subr.mxu0 0.0
      %1580 = vmatpush1.msra.mxu0 0.0
      %1581 = vmatprep.subr.mxu0 0.0
      %1582 = vmatpush1.msra.mxu0 0.0
      %1583 = vmatprep.subr.mxu0 0.0
      %1584 = vmatpush1.msra.mxu0 0.0
      %1585 = vmatprep.subr.mxu0 0.0
      %1586 = vmatpush1.msra.mxu0 0.0
      %1587 = vmatprep.subr.mxu0 0.0
      %1588 = vmatpush1.msra.mxu0 %v1232
      %1589 = vmatprep.subr.mxu0 0.0
      %1590 = vmatpush1.msra.mxu0 %v1229
      %1591 = vmatprep.subr.mxu0 0.0
      %1592 = vmatpush2.msra.mxu0 0.0
      %1593 = vmatprep.subr.mxu0 0.0
      %1594 = vmatpush2.msra.mxu0 0.0
      %1595 = vmatprep.subr.mxu0 0.0
      %1596 = vmatpush2.msra.mxu0 0.0
      %1597 = vmatprep.subr.mxu0 0.0
      %1598 = vmatpush2.msra.mxu0 0.0
      %1599 = vmatprep.subr.mxu0 0.0
      %1600 = vmatpush2.msra.mxu0 0.0
      %1601 = vmatprep.subr.mxu0 0.0
      %1602 = vmatpush2.msra.mxu0 0.0
      %1603 = vmatprep.subr.mxu0 0.0
      %1604 = vmatpush2.msra.mxu0 0.0
      %1605 = vmatprep.subr.mxu0 0.0
      %1606 = vmatpush2.msra.mxu0 0.0
      %1607 = vmatprep.subr.mxu0 0.0
      %1608 = vmatpush2.msra.mxu0 0.0
      %1609 = vmatprep.subr.mxu0 0.0
      %1610 = vmatpush2.msra.mxu0 0.0
      %1611 = vmatprep.subr.mxu0 0.0
      %1612 = vmatpush2.msra.mxu0 0.0
      %1613 = vmatprep.subr.mxu0 0.0
      %1614 = vmatpush2.msra.mxu0 0.0
      %1615 = vmatprep.subr.mxu0 0.0
      %1616 = vmatpush2.msra.mxu0 0.0
      %1617 = vmatprep.subr.mxu0 0.0
      %1618 = vmatpush2.msra.mxu0 0.0
      %1619 = vmatprep.subr.mxu0 0.0
      %1620 = vmatpush2.msra.mxu0 0.0
      %1621 = vmatprep.subr.mxu0 0.0
      %1622 = vmatpush2.msra.mxu0 0.0
      %1623 = vmatprep.mubr.f32.mxu0 0.0
      %1624 = vmatmul.mubr.f32.gmra.mxu0 %v446
      %v1625 = vpop.f32.mrf.mxu0
      %v1626 = vadd.f32 0.0, %v1625
      %v1627 = vpop.f32.mrf.mxu0
      %1628 = vmatprep.mubr.f32.mxu0 0.0
      %1629 = vmatmul.mubr.f32.gmra.mxu0 %v449
      %v1630 = vpop.f32.mrf.mxu0
      %v1631 = vadd.f32 0.0, %v1630
      %v1632 = vpop.f32.mrf.mxu0
      %1633 = vdwg.mxu0
      %1634 = vmatprep.subr.mxu0 0.0
      %1635 = vmatpush1.msra.mxu0 0.0
      %1636 = vmatprep.subr.mxu0 0.0
      %1637 = vmatpush1.msra.mxu0 0.0
      %1638 = vmatprep.subr.mxu0 0.0
      %1639 = vmatpush1.msra.mxu0 0.0
      %1640 = vmatprep.subr.mxu0 0.0
      %1641 = vmatpush1.msra.mxu0 0.0
      %1642 = vmatprep.subr.mxu0 0.0
      %1643 = vmatpush1.msra.mxu0 0.0
      %1644 = vmatprep.subr.mxu0 0.0
      %1645 = vmatpush1.msra.mxu0 0.0
      %1646 = vmatprep.subr.mxu0 0.0
      %1647 = vmatpush1.msra.mxu0 0.0
      %1648 = vmatprep.subr.mxu0 0.0
      %1649 = vmatpush1.msra.mxu0 0.0
      %1650 = vmatprep.subr.mxu0 0.0
      %1651 = vmatpush1.msra.mxu0 0.0
      %1652 = vmatprep.subr.mxu0 0.0
      %1653 = vmatpush1.msra.mxu0 0.0
      %1654 = vmatprep.subr.mxu0 0.0
      %1655 = vmatpush1.msra.mxu0 0.0
      %1656 = vmatprep.subr.mxu0 0.0
      %1657 = vmatpush1.msra.mxu0 0.0
      %1658 = vmatprep.subr.mxu0 0.0
      %1659 = vmatpush1.msra.mxu0 0.0
      %1660 = vmatprep.subr.mxu0 0.0
      %1661 = vmatpush1.msra.mxu0 0.0
      %1662 = vmatprep.subr.mxu0 0.0
      %1663 = vmatpush1.msra.mxu0 %v1240
      %1664 = vmatprep.subr.mxu0 0.0
      %1665 = vmatpush1.msra.mxu0 %v1237
      %1666 = vmatprep.subr.mxu0 0.0
      %1667 = vmatpush2.msra.mxu0 0.0
      %1668 = vmatprep.subr.mxu0 0.0
      %1669 = vmatpush2.msra.mxu0 0.0
      %1670 = vmatprep.subr.mxu0 0.0
      %1671 = vmatpush2.msra.mxu0 0.0
      %1672 = vmatprep.subr.mxu0 0.0
      %1673 = vmatpush2.msra.mxu0 0.0
      %1674 = vmatprep.subr.mxu0 0.0
      %1675 = vmatpush2.msra.mxu0 0.0
      %1676 = vmatprep.subr.mxu0 0.0
      %1677 = vmatpush2.msra.mxu0 0.0
      %1678 = vmatprep.subr.mxu0 0.0
      %1679 = vmatpush2.msra.mxu0 0.0
      %1680 = vmatprep.subr.mxu0 0.0
      %1681 = vmatpush2.msra.mxu0 0.0
      %1682 = vmatprep.subr.mxu0 0.0
      %1683 = vmatpush2.msra.mxu0 0.0
      %1684 = vmatprep.subr.mxu0 0.0
      %1685 = vmatpush2.msra.mxu0 0.0
      %1686 = vmatprep.subr.mxu0 0.0
      %1687 = vmatpush2.msra.mxu0 0.0
      %1688 = vmatprep.subr.mxu0 0.0
      %1689 = vmatpush2.msra.mxu0 0.0
      %1690 = vmatprep.subr.mxu0 0.0
      %1691 = vmatpush2.msra.mxu0 0.0
      %1692 = vmatprep.subr.mxu0 0.0
      %1693 = vmatpush2.msra.mxu0 0.0
      %1694 = vmatprep.subr.mxu0 0.0
      %1695 = vmatpush2.msra.mxu0 0.0
      %1696 = vmatprep.subr.mxu0 0.0
      %1697 = vmatpush2.msra.mxu0 0.0
      %1698 = vmatprep.mubr.f32.mxu0 0.0
      %1699 = vmatmul.mubr.f32.gmra.mxu0 %v446
      %v1700 = vpop.f32.mrf.mxu0
      %v1701 = vadd.f32 0.0, %v1700
      %v1702 = vpop.f32.mrf.mxu0
      %1703 = vmatprep.mubr.f32.mxu0 0.0
      %1704 = vmatmul.mubr.f32.gmra.mxu0 %v449
      %v1705 = vpop.f32.mrf.mxu0
      %v1706 = vadd.f32 0.0, %v1705
      %v1707 = vpop.f32.mrf.mxu0
      %1708 = vdwg.mxu0
      %1709 = vmatprep.subr.mxu0 0.0
      %1710 = vmatpush1.msra.mxu0 0.0
      %1711 = vmatprep.subr.mxu0 0.0
      %1712 = vmatpush1.msra.mxu0 0.0
      %1713 = vmatprep.subr.mxu0 0.0
      %1714 = vmatpush1.msra.mxu0 0.0
      %1715 = vmatprep.subr.mxu0 0.0
      %1716 = vmatpush1.msra.mxu0 0.0
      %1717 = vmatprep.subr.mxu0 0.0
      %1718 = vmatpush1.msra.mxu0 0.0
      %1719 = vmatprep.subr.mxu0 0.0
      %1720 = vmatpush1.msra.mxu0 0.0
      %1721 = vmatprep.subr.mxu0 0.0
      %1722 = vmatpush1.msra.mxu0 0.0
      %1723 = vmatprep.subr.mxu0 0.0
      %1724 = vmatpush1.msra.mxu0 0.0
      %1725 = vmatprep.subr.mxu0 0.0
      %1726 = vmatpush1.msra.mxu0 0.0
      %1727 = vmatprep.subr.mxu0 0.0
      %1728 = vmatpush1.msra.mxu0 0.0
      %1729 = vmatprep.subr.mxu0 0.0
      %1730 = vmatpush1.msra.mxu0 0.0
      %1731 = vmatprep.subr.mxu0 0.0
      %1732 = vmatpush1.msra.mxu0 0.0
      %1733 = vmatprep.subr.mxu0 0.0
      %1734 = vmatpush1.msra.mxu0 0.0
      %1735 = vmatprep.subr.mxu0 0.0
      %1736 = vmatpush1.msra.mxu0 0.0
      %1737 = vmatprep.subr.mxu0 0.0
      %1738 = vmatpush1.msra.mxu0 %v1248
      %1739 = vmatprep.subr.mxu0 0.0
      %1740 = vmatpush1.msra.mxu0 %v1245
      %1741 = vmatprep.subr.mxu0 0.0
      %1742 = vmatpush2.msra.mxu0 0.0
      %1743 = vmatprep.subr.mxu0 0.0
      %1744 = vmatpush2.msra.mxu0 0.0
      %1745 = vmatprep.subr.mxu0 0.0
      %1746 = vmatpush2.msra.mxu0 0.0
      %1747 = vmatprep.subr.mxu0 0.0
      %1748 = vmatpush2.msra.mxu0 0.0
      %1749 = vmatprep.subr.mxu0 0.0
      %1750 = vmatpush2.msra.mxu0 0.0
      %1751 = vmatprep.subr.mxu0 0.0
      %1752 = vmatpush2.msra.mxu0 0.0
      %1753 = vmatprep.subr.mxu0 0.0
      %1754 = vmatpush2.msra.mxu0 0.0
      %1755 = vmatprep.subr.mxu0 0.0
      %1756 = vmatpush2.msra.mxu0 0.0
      %1757 = vmatprep.subr.mxu0 0.0
      %1758 = vmatpush2.msra.mxu0 0.0
      %1759 = vmatprep.subr.mxu0 0.0
      %1760 = vmatpush2.msra.mxu0 0.0
      %1761 = vmatprep.subr.mxu0 0.0
      %1762 = vmatpush2.msra.mxu0 0.0
      %1763 = vmatprep.subr.mxu0 0.0
      %1764 = vmatpush2.msra.mxu0 0.0
      %1765 = vmatprep.subr.mxu0 0.0
      %1766 = vmatpush2.msra.mxu0 0.0
      %1767 = vmatprep.subr.mxu0 0.0
      %1768 = vmatpush2.msra.mxu0 0.0
      %1769 = vmatprep.subr.mxu0 0.0
      %1770 = vmatpush2.msra.mxu0 0.0
      %1771 = vmatprep.subr.mxu0 0.0
      %1772 = vmatpush2.msra.mxu0 0.0
      %1773 = vmatprep.mubr.f32.mxu0 0.0
      %1774 = vmatmul.mubr.f32.gmra.mxu0 %v446
      %v1775 = vpop.f32.mrf.mxu0
      %v1776 = vadd.f32 0.0, %v1775
      %v1777 = vpop.f32.mrf.mxu0
      %1778 = vmatprep.mubr.f32.mxu0 0.0
      %1779 = vmatmul.mubr.f32.gmra.mxu0 %v449
      %v1780 = vpop.f32.mrf.mxu0
      %v1781 = vadd.f32 0.0, %v1780
      %v1782 = vpop.f32.mrf.mxu0
      %1783 = vdwg.mxu0
      %1784 = vmatprep.subr.mxu0 0.0
      %1785 = vmatpush1.msra.mxu0 0.0
      %1786 = vmatprep.subr.mxu0 0.0
      %1787 = vmatpush1.msra.mxu0 0.0
      %1788 = vmatprep.subr.mxu0 0.0
      %1789 = vmatpush1.msra.mxu0 0.0
      %1790 = vmatprep.subr.mxu0 0.0
      %1791 = vmatpush1.msra.mxu0 0.0
      %1792 = vmatprep.subr.mxu0 0.0
      %1793 = vmatpush1.msra.mxu0 0.0
      %1794 = vmatprep.subr.mxu0 0.0
      %1795 = vmatpush1.msra.mxu0 0.0
      %1796 = vmatprep.subr.mxu0 0.0
      %1797 = vmatpush1.msra.mxu0 0.0
      %1798 = vmatprep.subr.mxu0 0.0
      %1799 = vmatpush1.msra.mxu0 0.0
      %1800 = vmatprep.subr.mxu0 0.0
      %1801 = vmatpush1.msra.mxu0 0.0
      %1802 = vmatprep.subr.mxu0 0.0
      %1803 = vmatpush1.msra.mxu0 0.0
      %1804 = vmatprep.subr.mxu0 0.0
      %1805 = vmatpush1.msra.mxu0 0.0
      %1806 = vmatprep.subr.mxu0 0.0
      %1807 = vmatpush1.msra.mxu0 0.0
      %1808 = vmatprep.subr.mxu0 0.0
      %1809 = vmatpush1.msra.mxu0 0.0
      %1810 = vmatprep.subr.mxu0 0.0
      %1811 = vmatpush1.msra.mxu0 0.0
      %1812 = vmatprep.subr.mxu0 0.0
      %1813 = vmatpush1.msra.mxu0 %v1256
      %1814 = vmatprep.subr.mxu0 0.0
      %1815 = vmatpush1.msra.mxu0 %v1253
      %1816 = vmatprep.subr.mxu0 0.0
      %1817 = vmatpush2.msra.mxu0 0.0
      %1818 = vmatprep.subr.mxu0 0.0
      %1819 = vmatpush2.msra.mxu0 0.0
      %1820 = vmatprep.subr.mxu0 0.0
      %1821 = vmatpush2.msra.mxu0 0.0
      %1822 = vmatprep.subr.mxu0 0.0
      %1823 = vmatpush2.msra.mxu0 0.0
      %1824 = vmatprep.subr.mxu0 0.0
      %1825 = vmatpush2.msra.mxu0 0.0
      %1826 = vmatprep.subr.mxu0 0.0
      %1827 = vmatpush2.msra.mxu0 0.0
      %1828 = vmatprep.subr.mxu0 0.0
      %1829 = vmatpush2.msra.mxu0 0.0
      %1830 = vmatprep.subr.mxu0 0.0
      %1831 = vmatpush2.msra.mxu0 0.0
      %1832 = vmatprep.subr.mxu0 0.0
      %1833 = vmatpush2.msra.mxu0 0.0
      %1834 = vmatprep.subr.mxu0 0.0
      %1835 = vmatpush2.msra.mxu0 0.0
      %1836 = vmatprep.subr.mxu0 0.0
      %1837 = vmatpush2.msra.mxu0 0.0
      %1838 = vmatprep.subr.mxu0 0.0
      %1839 = vmatpush2.msra.mxu0 0.0
      %1840 = vmatprep.subr.mxu0 0.0
      %1841 = vmatpush2.msra.mxu0 0.0
      %1842 = vmatprep.subr.mxu0 0.0
      %1843 = vmatpush2.msra.mxu0 0.0
      %1844 = vmatprep.subr.mxu0 0.0
      %1845 = vmatpush2.msra.mxu0 0.0
      %1846 = vmatprep.subr.mxu0 0.0
      %1847 = vmatpush2.msra.mxu0 0.0
      %1848 = vmatprep.mubr.f32.mxu0 0.0
      %1849 = vmatmul.mubr.f32.gmra.mxu0 %v446
      %v1850 = vpop.f32.mrf.mxu0
      %v1851 = vadd.f32 0.0, %v1850
      %v1852 = vpop.f32.mrf.mxu0
      %1853 = vmatprep.mubr.f32.mxu0 0.0
      %1854 = vmatmul.mubr.f32.gmra.mxu0 %v449
      %v1855 = vpop.f32.mrf.mxu0
      %v1856 = vadd.f32 0.0, %v1855
      %v1857 = vpop.f32.mrf.mxu0
      %1858 = vdwg.mxu0
      %v1860 = vlaneseq
      %v1861 = vshrl.u32 %v1860, 7
      %v1862 = vsub.s32 0, %v1861
      %v1863 = vrot.slane %v1105, %v1862
      %v1865 = vadd.f32 %v1326, %v1863
      %v1866 = vadd.f32 %v1331, %v1863
      %v1867 = vadd.f32 %v1401, %v1863
      %v1868 = vadd.f32 %v1406, %v1863
      %v1869 = vadd.f32 %v1476, %v1863
      %v1870 = vadd.f32 %v1481, %v1863
      %v1871 = vadd.f32 %v1551, %v1863
      %v1872 = vadd.f32 %v1556, %v1863
      %v1873 = vadd.f32 %v1626, %v1863
      %v1874 = vadd.f32 %v1631, %v1863
      %v1875 = vadd.f32 %v1701, %v1863
      %v1876 = vadd.f32 %v1706, %v1863
      %v1877 = vadd.f32 %v1776, %v1863
      %v1878 = vadd.f32 %v1781, %v1863
      %v1879 = vadd.f32 %v1851, %v1863
      %v1880 = vadd.f32 %v1856, %v1863
      %v1881 = vmax.f32 %v1865, 0.0
      %v1882 = vmax.f32 %v1866, 0.0
      %v1883 = vmax.f32 %v1867, 0.0
      %v1884 = vmax.f32 %v1868, 0.0
      %v1885 = vmax.f32 %v1869, 0.0
      %v1886 = vmax.f32 %v1870, 0.0
      %v1887 = vmax.f32 %v1871, 0.0
      %v1888 = vmax.f32 %v1872, 0.0
      %v1889 = vmax.f32 %v1873, 0.0
      %v1890 = vmax.f32 %v1874, 0.0
      %v1891 = vmax.f32 %v1875, 0.0
      %v1892 = vmax.f32 %v1876, 0.0
      %v1893 = vmax.f32 %v1877, 0.0
      %v1894 = vmax.f32 %v1878, 0.0
      %v1895 = vmax.f32 %v1879, 0.0
      %v1896 = vmax.f32 %v1880, 0.0
      %1897 = vst [vmem:[%s253] sm:$0xff] %v1881
      %1898 = vst [vmem:[%s253 + $0x8] sm:$0xff] %v1882
      %1899 = vst [vmem:[%s253 + $0x10] sm:$0xff] %v1883
      %1900 = vst [vmem:[%s253 + $0x18] sm:$0xff] %v1884
      %1901 = vst [vmem:[%s253 + $0x20] sm:$0xff] %v1885
      %1902 = vst [vmem:[%s253 + $0x28] sm:$0xff] %v1886
      %1903 = vst [vmem:[%s253 + $0x30] sm:$0xff] %v1887
      %1904 = vst [vmem:[%s253 + $0x38] sm:$0xff] %v1888
      %1905 = vst [vmem:[%s253 + $0x40] sm:$0xff] %v1889
      %1906 = vst [vmem:[%s253 + $0x48] sm:$0xff] %v1890
      %1907 = vst [vmem:[%s253 + $0x50] sm:$0xff] %v1891
      %1908 = vst [vmem:[%s253 + $0x58] sm:$0xff] %v1892
      %1909 = vst [vmem:[%s253 + $0x60] sm:$0xff] %v1893
      %1910 = vst [vmem:[%s253 + $0x68] sm:$0xff] %v1894
      %1911 = vst [vmem:[%s253 + $0x70] sm:$0xff] %v1895
      %1912 = vst [vmem:[%s253 + $0x78] sm:$0xff] %v1896
      %s1913 = smul.u32 16, %s17
      %p1914 = scmp.lt.s32.totalorder %s1913, 63
      %s1915 = scalar_select %p1914, %s1913, 63
      %s1916 = smul.addr %s1915, 8
      %s1917 = scalar_lea.vmem %s6, %s1916
      // Predicated region
      $region45: #{_lambda_.8} parent=43 // pred_check
        %p1918 = pneg %p166
      $region46: #{_lambda_.8} parent=43 // pred_check_branch
        %1920 = sbr.rel (%p1918) target = $region48
      $region47: #{_lambda_.8} parent=43 // pred_region
        %s1921 = smul.u32 16, %s17
      $region48: #{_lambda_.8} parent=43 // pred_fallthru
        _
    $region44: #{_lambda_.8} parent=5 // pred_fallthru
      _
    %p1922 = scmp.le.s32.totalorder 2, %s12
    // Predicated region
    $region49: #{_lambda_.8} parent=5 // pred_check
      %p1923 = pneg %p1922
    $region50: #{_lambda_.8} parent=5 // pred_check_branch
      %1925 = sbr.rel (%p1923) target = $region52
    $region51: #{_lambda_.8} parent=5 // pred_region
      %s1926 = ssub.s32 %s12, 2
      // Predicated region
      $region53: #{_lambda_.8} parent=51 // pred_check
        %p1927 = pneg %p172
      $region54: #{_lambda_.8} parent=51 // pred_check_branch
        %1929 = sbr.rel (%p1927) target = $region56
      $region55: #{_lambda_.8} parent=51 // pred_region
        %s1930 = smul.u32 16, %s18
        %p1931 = scmp.lt.s32.totalorder %s1930, 63
        %s1932 = scalar_select %p1931, %s1930, 63
        %s1933 = smul.addr %s1932, 8
        %s1934 = scalar_lea.vmem %s6, %s1933
      $region56: #{_lambda_.8} parent=51 // pred_fallthru
        _
    $region52: #{_lambda_.8} parent=5 // pred_fallthru
      _
  $region6: #{_lambda_.8} parent=0 // loop_footer
    %s16 = sadd.s32 1, %s12
  $region7: #{_lambda_.8} parent=0 // loop_footer_branch
    %11 = sbr.rel target = $region3
  $region8: #{_lambda_.8} parent=0 // loop_exit
    _

// kernel: _lambda_.7
$region0: #{_lambda_.7}
  #allocation0 [shape = 'u32[]', space=smem, size = 0x4, offset = 0x4, fixed_abs, tag = 'smem constant byte address 0x4 - core index']
  #allocation1 [shape = 'u32[144,128]{1,0:T(1,128)}', space=vmem, size = 0x12000, scoped, tag = 'internal scratch']
  %s0 = inlined_call_operand.vmem [shape: bf16[256,128], index: 0, kind: input, shape index: {}]
  %s1 = inlined_call_operand.vmem [shape: bf16[128,128], index: 1, kind: input, shape index: {}]
  %s2 = inlined_call_operand.vmem [shape: f32[256,128], index: 2, kind: output, shape index: {}]
  %s3 = sld [smem:[#allocation0]]
  $region41: #{_lambda_.7} parent=0
    _
  %s5 = ssub.s32 1, %s3
  %s6 = scalar_select 0, %s5, %s3
  loop: start=0, step=1, limit=4
  $region2: #{_lambda_.7} parent=0 // loop_pre_header
    _
  $region3: #{_lambda_.7} parent=0 // loop_header
    %s8 = sphi 0, %s12
    %p9 = scmp.ge.s32.totalorder %s8, 4
    %s18 = sphi 0, %s20
    %s21 = sphi 0, %s18
    %s22 = sphi 0, %s21
    %s38 = sphi 0, %s22
    %s42 = sphi 0, %s42
    %s44 = sphi 0, %s42
    %s45 = sphi 0, %s44
    %s59 = sphi 0, %s45
    %s65 = sphi 0, %s67
    %s68 = sphi 0, %s65
    %s69 = sphi 0, %s68
    %s85 = sphi 0, %s69
  $region4: #{_lambda_.7} parent=0 // loop_header_branch
    %11 = sbr.rel (%p9) target = $region8
  $region5: #{_lambda_.7} parent=0 // loop_body
    %s13 = ssub.s32 %s8, 1
    %s14 = ssub.s32 %s8, 2
    %s15 = sadd.s32 %s8, 1
    %s16 = ssub.s32 %s8, %s15
    %p17 = scmp.eq.s32.totalorder %s16, 0
    %s19 = sadd.s32 %s18, 1
    %s20 = scalar_select %p17, %s18, %s19
    %p23 = pneg %p17
    %p24 = scmp.eq.s32.totalorder %s8, 1
    %p25 = por %p23, %p24
    %p26 = scmp.ne.s32.totalorder %s18, %s21
    %p27 = scmp.eq.s32.totalorder %s8, 0
    %p28 = por %p26, %p27
    %p29 = scmp.ne.s32.totalorder %s18, %s21
    %p30 = scmp.eq.s32.totalorder %s13, 1
    %p31 = por %p29, %p30
    %p32 = scmp.ne.s32.totalorder %s21, %s22
    %p33 = scmp.eq.s32.totalorder %s13, 0
    %p34 = por %p32, %p33
    %p35 = scmp.ne.s32.totalorder %s21, %s22
    %p36 = scmp.eq.s32.totalorder %s14, 1
    %p37 = por %p35, %p36
    %p39 = scmp.ne.s32.totalorder %s22, %s38
    %p40 = scmp.eq.s32.totalorder %s14, 0
    %p41 = por %p39, %p40
    %s43 = sadd.s32 %s42, 1
    %p46 = scmp.eq.s32.totalorder %s8, 1
    %p47 = scmp.ne.s32.totalorder %s42, %s44
    %p48 = scmp.eq.s32.totalorder %s8, 0
    %p49 = por %p47, %p48
    %p50 = scmp.ne.s32.totalorder %s42, %s44
    %p51 = scmp.eq.s32.totalorder %s13, 1
    %p52 = por %p50, %p51
    %p53 = scmp.ne.s32.totalorder %s44, %s45
    %p54 = scmp.eq.s32.totalorder %s13, 0
    %p55 = por %p53, %p54
    %p56 = scmp.ne.s32.totalorder %s44, %s45
    %p57 = scmp.eq.s32.totalorder %s14, 1
    %p58 = por %p56, %p57
    %p60 = scmp.ne.s32.totalorder %s45, %s59
    %p61 = scmp.eq.s32.totalorder %s14, 0
    %p62 = por %p60, %p61
    %s63 = ssub.s32 %s8, %s15
    %p64 = scmp.eq.s32.totalorder %s63, 0
    %s66 = sadd.s32 %s65, 1
    %s67 = scalar_select %p64, %s65, %s66
    %p70 = pneg %p64
    %p71 = scmp.eq.s32.totalorder %s8, 1
    %p72 = por %p70, %p71
    %p73 = scmp.ne.s32.totalorder %s65, %s68
    %p74 = scmp.eq.s32.totalorder %s8, 0
    %p75 = por %p73, %p74
    %p76 = scmp.ne.s32.totalorder %s65, %s68
    %p77 = scmp.eq.s32.totalorder %s13, 1
    %p78 = por %p76, %p77
    %p79 = scmp.ne.s32.totalorder %s68, %s69
    %p80 = scmp.eq.s32.totalorder %s13, 0
    %p81 = por %p79, %p80
    %p82 = scmp.ne.s32.totalorder %s68, %s69
    %p83 = scmp.eq.s32.totalorder %s14, 1
    %p84 = por %p82, %p83
    %p86 = scmp.ne.s32.totalorder %s69, %s85
    %p87 = scmp.eq.s32.totalorder %s14, 0
    %p88 = por %p86, %p87
    %p89 = scmp.le.s32.totalorder 1, %s8
    %p90 = scmp.lt.s32.totalorder %s8, 3
    %p91 = pnand %p89, %p90
    %p92 = pneg %p91
    // Predicated region
    $region9: #{_lambda_.7} parent=5 // pred_check
      _
    $region10: #{_lambda_.7} parent=5 // pred_check_branch
      %94 = sbr.rel (%p91) target = $region12
    $region11: #{_lambda_.7} parent=5 // pred_region
      %s95 = ssub.s32 %s8, 1
      // Predicated region
      $region13: #{_lambda_.7} parent=11 // pred_check
        %p96 = pneg %p55
      $region14: #{_lambda_.7} parent=11 // pred_check_branch
        %98 = sbr.rel (%p96) target = $region16
      $region15: #{_lambda_.7} parent=11 // pred_region
        _
      $region16: #{_lambda_.7} parent=11 // pred_fallthru
        _
    $region12: #{_lambda_.7} parent=5 // pred_fallthru
      _
    %p99 = scmp.lt.s32.totalorder %s8, 2
    // Predicated region
    $region17: #{_lambda_.7} parent=5 // pred_check
      %p100 = pneg %p99
    $region18: #{_lambda_.7} parent=5 // pred_check_branch
      %102 = sbr.rel (%p100) target = $region20
    $region19: #{_lambda_.7} parent=5 // pred_region
      // Predicated region
      $region21: #{_lambda_.7} parent=19 // pred_check
        %p103 = pneg %p28
      $region22: #{_lambda_.7} parent=19 // pred_check_branch
        %105 = sbr.rel (%p103) target = $region24
      $region23: #{_lambda_.7} parent=19 // pred_region
        %s106 = smul.u32 16, %s8
        %p107 = scmp.lt.s32.totalorder %s106, 31
        %s108 = scalar_select %p107, %s106, 31
        %s109 = smul.addr %s108, 4
        %s110 = scalar_lea.vmem %s0, %s109
        %s111 = smul.u32 16, %s8
      $region24: #{_lambda_.7} parent=19 // pred_fallthru
        _
    $region20: #{_lambda_.7} parent=5 // pred_fallthru
      _
    %p112 = scmp.le.s32.totalorder 1, %s8
    %p113 = scmp.lt.s32.totalorder %s8, 3
    %p114 = pnand %p112, %p113
    %p115 = pneg %p114
    // Predicated region
    $region25: #{_lambda_.7} parent=5 // pred_check
      _
    $region26: #{_lambda_.7} parent=5 // pred_check_branch
      %117 = sbr.rel (%p114) target = $region28
    $region27: #{_lambda_.7} parent=5 // pred_region
      %s118 = ssub.s32 %s8, 1
      %s119 = smul.u32 16, %s13
      %p120 = scmp.lt.s32.totalorder %s119, 31
      %s121 = scalar_select %p120, %s119, 31
      %s122 = smul.addr %s121, 4
      %s123 = scalar_lea.vmem %s0, %s122
      %p124 = pneg %p34
      %p125 = pneg %p31
      %p126 = pneg %p55
      %p127 = pneg %p52
      %p128 = pneg %p81
      %p129 = pneg %p78
      %s130 = smul.u32 16, %s13
      %p131 = scmp.lt.s32.totalorder %s130, 31
      %s132 = scalar_select %p131, %s130, 31
      %s133 = smul.addr %s132, 8
      %s134 = scalar_lea.vmem %s2, %s133
      %s135 = smul.u32 16, %s13
      %p136 = scmp.lt.s32.totalorder %s135, 31
      %s137 = scalar_select %p136, %s135, 31
      %s138 = smul.addr %s137, 4
      %s139 = scalar_lea.vmem %s0, %s138
      %s140 = smul.u32 16, %s13
      %s141 = smul.u32 16, %s13
      %p142 = scmp.lt.s32.totalorder %s141, 31
      %s143 = scalar_select %p142, %s141, 31
      %s144 = smul.addr %s143, 8
      %s145 = scalar_lea.vmem %s2, %s144
      %s146 = smul.u32 16, %s13
      %v148 = vld [vmem:[%s139] sm:$0xf]
      %v149 = vld [vmem:[%s139 + $0x4] sm:$0xf]
      %v150 = vld [vmem:[%s139 + $0x8] sm:$0xf]
      %v151 = vld [vmem:[%s139 + $0xc] sm:$0xf]
      %v152 = vld [vmem:[%s139 + $0x10] sm:$0xf]
      %v153 = vld [vmem:[%s139 + $0x14] sm:$0xf]
      %v154 = vld [vmem:[%s139 + $0x18] sm:$0xf]
      %v155 = vld [vmem:[%s139 + $0x1c] sm:$0xf]
      %v156 = vld [vmem:[%s139 + $0x20] sm:$0xf]
      %v157 = vld [vmem:[%s139 + $0x24] sm:$0xf]
      %v158 = vld [vmem:[%s139 + $0x28] sm:$0xf]
      %v159 = vld [vmem:[%s139 + $0x2c] sm:$0xf]
      %v160 = vld [vmem:[%s139 + $0x30] sm:$0xf]
      %v161 = vld [vmem:[%s139 + $0x34] sm:$0xf]
      %v162 = vld [vmem:[%s139 + $0x38] sm:$0xf]
      %v163 = vld [vmem:[%s139 + $0x3c] sm:$0xf]
      %v164 = vld [vmem:[%s1] sm:$0xf]
      %v165 = vld [vmem:[%s1 + $0x4] sm:$0xf]
      %v166 = vld [vmem:[%s1 + $0x8] sm:$0xf]
      %v167 = vld [vmem:[%s1 + $0xc] sm:$0xf]
      %v168 = vld [vmem:[%s1 + $0x10] sm:$0xf]
      %v169 = vld [vmem:[%s1 + $0x14] sm:$0xf]
      %v170 = vld [vmem:[%s1 + $0x18] sm:$0xf]
      %v171 = vld [vmem:[%s1 + $0x1c] sm:$0xf]
      %v172 = vld [vmem:[%s1 + $0x20] sm:$0xf]
      %v173 = vld [vmem:[%s1 + $0x24] sm:$0xf]
      %v174 = vld [vmem:[%s1 + $0x28] sm:$0xf]
      %v175 = vld [vmem:[%s1 + $0x2c] sm:$0xf]
      %v176 = vld [vmem:[%s1 + $0x30] sm:$0xf]
      %v177 = vld [vmem:[%s1 + $0x34] sm:$0xf]
      %v178 = vld [vmem:[%s1 + $0x38] sm:$0xf]
      %v179 = vld [vmem:[%s1 + $0x3c] sm:$0xf]
      %v196 = vunpack.c.l.b16 %v148
      %v197 = vunpack.c.l.b16 %v149
      %v198 = vunpack.c.l.b16 %v150
      %v199 = vunpack.c.l.b16 %v151
      %v200 = vunpack.c.l.b16 %v152
      %v201 = vunpack.c.l.b16 %v153
      %v202 = vunpack.c.l.b16 %v154
      %v203 = vunpack.c.l.b16 %v155
      %v204 = vunpack.c.l.b16 %v156
      %v205 = vunpack.c.l.b16 %v157
      %v206 = vunpack.c.l.b16 %v158
      %v207 = vunpack.c.l.b16 %v159
      %v208 = vunpack.c.l.b16 %v160
      %v209 = vunpack.c.l.b16 %v161
      %v210 = vunpack.c.l.b16 %v162
      %v211 = vunpack.c.l.b16 %v163
      %v212 = vpack.c.b16 %v197, %v196
      %v213 = vpack.c.b16 %v199, %v198
      %v214 = vpack.c.b16 %v201, %v200
      %v215 = vpack.c.b16 %v203, %v202
      %v216 = vpack.c.b16 %v205, %v204
      %v217 = vpack.c.b16 %v207, %v206
      %v218 = vpack.c.b16 %v209, %v208
      %v219 = vpack.c.b16 %v211, %v210
      %v244 = vunpack.c.l.b16 %v164
      %v245 = vunpack.c.l.b16 %v165
      %v246 = vunpack.c.l.b16 %v166
      %v247 = vunpack.c.l.b16 %v167
      %v248 = vunpack.c.l.b16 %v168
      %v249 = vunpack.c.l.b16 %v169
      %v250 = vunpack.c.l.b16 %v170
      %v251 = vunpack.c.l.b16 %v171
      %v252 = vunpack.c.l.b16 %v172
      %v253 = vunpack.c.l.b16 %v173
      %v254 = vunpack.c.l.b16 %v174
      %v255 = vunpack.c.l.b16 %v175
      %v256 = vunpack.c.l.b16 %v176
      %v257 = vunpack.c.l.b16 %v177
      %v258 = vunpack.c.l.b16 %v178
      %v259 = vunpack.c.l.b16 %v179
      %v260 = vpack.c.b16 %v245, %v244
      %v261 = vpack.c.b16 %v247, %v246
      %v262 = vpack.c.b16 %v249, %v248
      %v263 = vpack.c.b16 %v251, %v250
      %v264 = vpack.c.b16 %v253, %v252
      %v265 = vpack.c.b16 %v255, %v254
      %v266 = vpack.c.b16 %v257, %v256
      %v267 = vpack.c.b16 %v259, %v258
      %276 = vmatprep.subr.bf16.mxu0 0
      %277 = vmatpush1.bf16.msra.mxu0 %v267
      %278 = vmatprep.subr.bf16.mxu0 0
      %279 = vmatpush1.bf16.msra.mxu0 %v266
      %280 = vmatprep.subr.bf16.mxu0 0
      %281 = vmatpush1.bf16.msra.mxu0 %v265
      %282 = vmatprep.subr.bf16.mxu0 0
      %283 = vmatpush1.bf16.msra.mxu0 %v264
      %284 = vmatprep.subr.bf16.mxu0 0
      %285 = vmatpush1.bf16.msra.mxu0 %v263
      %286 = vmatprep.subr.bf16.mxu0 0
      %287 = vmatpush1.bf16.msra.mxu0 %v262
      %288 = vmatprep.subr.bf16.mxu0 0
      %289 = vmatpush1.bf16.msra.mxu0 %v261
      %290 = vmatprep.subr.bf16.mxu0 0
      %291 = vmatpush1.bf16.msra.mxu0 %v260
      %292 = vmatprep.subr.bf16.mxu0 0
      %293 = vmatpush2.bf16.msra.mxu0 0
      %294 = vmatprep.subr.bf16.mxu0 0
      %295 = vmatpush2.bf16.msra.mxu0 0
      %296 = vmatprep.subr.bf16.mxu0 0
      %297 = vmatpush2.bf16.msra.mxu0 0
      %298 = vmatprep.subr.bf16.mxu0 0
      %299 = vmatpush2.bf16.msra.mxu0 0
      %300 = vmatprep.subr.bf16.mxu0 0
      %301 = vmatpush2.bf16.msra.mxu0 0
      %302 = vmatprep.subr.bf16.mxu0 0
      %303 = vmatpush2.bf16.msra.mxu0 0
      %304 = vmatprep.subr.bf16.mxu0 0
      %305 = vmatpush2.bf16.msra.mxu0 0
      %306 = vmatprep.subr.bf16.mxu0 0
      %307 = vmatpush2.bf16.msra.mxu0 0
      %308 = vmatprep.mubr.bf16.mxu0 0
      %309 = vmatmul.mubr.bf16.gmra.mxu0 %v212
      %v310 = vpop.f32.mrf.mxu0
      %v311 = vadd.f32 0.0, %v310
      %v312 = vpop.f32.mrf.mxu0
      %v313 = vpop.f32.mrf.mxu0
      %v314 = vadd.f32 0.0, %v313
      %v315 = vpop.f32.mrf.mxu0
      %316 = vmatprep.mubr.bf16.mxu0 0
      %317 = vmatmul.mubr.bf16.gmra.mxu0 %v213
      %v318 = vpop.f32.mrf.mxu0
      %v319 = vadd.f32 0.0, %v318
      %v320 = vpop.f32.mrf.mxu0
      %v321 = vpop.f32.mrf.mxu0
      %v322 = vadd.f32 0.0, %v321
      %v323 = vpop.f32.mrf.mxu0
      %324 = vmatprep.mubr.bf16.mxu0 0
      %325 = vmatmul.mubr.bf16.gmra.mxu0 %v214
      %v326 = vpop.f32.mrf.mxu0
      %v327 = vadd.f32 0.0, %v326
      %v328 = vpop.f32.mrf.mxu0
      %v329 = vpop.f32.mrf.mxu0
      %v330 = vadd.f32 0.0, %v329
      %v331 = vpop.f32.mrf.mxu0
      %332 = vmatprep.mubr.bf16.mxu0 0
      %333 = vmatmul.mubr.bf16.gmra.mxu0 %v215
      %v334 = vpop.f32.mrf.mxu0
      %v335 = vadd.f32 0.0, %v334
      %v336 = vpop.f32.mrf.mxu0
      %v337 = vpop.f32.mrf.mxu0
      %v338 = vadd.f32 0.0, %v337
      %v339 = vpop.f32.mrf.mxu0
      %340 = vmatprep.mubr.bf16.mxu0 0
      %341 = vmatmul.mubr.bf16.gmra.mxu0 %v216
      %v342 = vpop.f32.mrf.mxu0
      %v343 = vadd.f32 0.0, %v342
      %v344 = vpop.f32.mrf.mxu0
      %v345 = vpop.f32.mrf.mxu0
      %v346 = vadd.f32 0.0, %v345
      %v347 = vpop.f32.mrf.mxu0
      %348 = vmatprep.mubr.bf16.mxu0 0
      %349 = vmatmul.mubr.bf16.gmra.mxu0 %v217
      %v350 = vpop.f32.mrf.mxu0
      %v351 = vadd.f32 0.0, %v350
      %v352 = vpop.f32.mrf.mxu0
      %v353 = vpop.f32.mrf.mxu0
      %v354 = vadd.f32 0.0, %v353
      %v355 = vpop.f32.mrf.mxu0
      %356 = vmatprep.mubr.bf16.mxu0 0
      %357 = vmatmul.mubr.bf16.gmra.mxu0 %v218
      %v358 = vpop.f32.mrf.mxu0
      %v359 = vadd.f32 0.0, %v358
      %v360 = vpop.f32.mrf.mxu0
      %v361 = vpop.f32.mrf.mxu0
      %v362 = vadd.f32 0.0, %v361
      %v363 = vpop.f32.mrf.mxu0
      %364 = vmatprep.mubr.bf16.mxu0 0
      %365 = vmatmul.mubr.bf16.gmra.mxu0 %v219
      %v366 = vpop.f32.mrf.mxu0
      %v367 = vadd.f32 0.0, %v366
      %v368 = vpop.f32.mrf.mxu0
      %v369 = vpop.f32.mrf.mxu0
      %v370 = vadd.f32 0.0, %v369
      %v371 = vpop.f32.mrf.mxu0
      %372 = vdwg.mxu0
      %373 = vst [vmem:[%s145] sm:$0xff] %v311
      %374 = vst [vmem:[%s145 + $0x8] sm:$0xff] %v314
      %375 = vst [vmem:[%s145 + $0x10] sm:$0xff] %v319
      %376 = vst [vmem:[%s145 + $0x18] sm:$0xff] %v322
      %377 = vst [vmem:[%s145 + $0x20] sm:$0xff] %v327
      %378 = vst [vmem:[%s145 + $0x28] sm:$0xff] %v330
      %379 = vst [vmem:[%s145 + $0x30] sm:$0xff] %v335
      %380 = vst [vmem:[%s145 + $0x38] sm:$0xff] %v338
      %381 = vst [vmem:[%s145 + $0x40] sm:$0xff] %v343
      %382 = vst [vmem:[%s145 + $0x48] sm:$0xff] %v346
      %383 = vst [vmem:[%s145 + $0x50] sm:$0xff] %v351
      %384 = vst [vmem:[%s145 + $0x58] sm:$0xff] %v354
      %385 = vst [vmem:[%s145 + $0x60] sm:$0xff] %v359
      %386 = vst [vmem:[%s145 + $0x68] sm:$0xff] %v362
      %387 = vst [vmem:[%s145 + $0x70] sm:$0xff] %v367
      %388 = vst [vmem:[%s145 + $0x78] sm:$0xff] %v370
      %s389 = smul.u32 16, %s13
      %p390 = scmp.lt.s32.totalorder %s389, 31
      %s391 = scalar_select %p390, %s389, 31
      %s392 = smul.addr %s391, 8
      %s393 = scalar_lea.vmem %s2, %s392
      // Predicated region
      $region29: #{_lambda_.7} parent=27 // pred_check
        %p394 = pneg %p78
      $region30: #{_lambda_.7} parent=27 // pred_check_branch
        %396 = sbr.rel (%p394) target = $region32
      $region31: #{_lambda_.7} parent=27 // pred_region
        %s397 = smul.u32 16, %s13
      $region32: #{_lambda_.7} parent=27 // pred_fallthru
        _
    $region28: #{_lambda_.7} parent=5 // pred_fallthru
      _
    %p398 = scmp.le.s32.totalorder 2, %s8
    // Predicated region
    $region33: #{_lambda_.7} parent=5 // pred_check
      %p399 = pneg %p398
    $region34: #{_lambda_.7} parent=5 // pred_check_branch
      %401 = sbr.rel (%p399) target = $region36
    $region35: #{_lambda_.7} parent=5 // pred_region
      %s402 = ssub.s32 %s8, 2
      // Predicated region
      $region37: #{_lambda_.7} parent=35 // pred_check
        %p403 = pneg %p84
      $region38: #{_lambda_.7} parent=35 // pred_check_branch
        %405 = sbr.rel (%p403) target = $region40
      $region39: #{_lambda_.7} parent=35 // pred_region
        %s406 = smul.u32 16, %s14
        %p407 = scmp.lt.s32.totalorder %s406, 31
        %s408 = scalar_select %p407, %s406, 31
        %s409 = smul.addr %s408, 8
        %s410 = scalar_lea.vmem %s2, %s409
      $region40: #{_lambda_.7} parent=35 // pred_fallthru
        _
    $region36: #{_lambda_.7} parent=5 // pred_fallthru
      _
  $region6: #{_lambda_.7} parent=0 // loop_footer
    %s12 = sadd.s32 1, %s8
  $region7: #{_lambda_.7} parent=0 // loop_footer_branch
    %7 = sbr.rel target = $region3
  $region8: #{_lambda_.7} parent=0 // loop_exit
    _

// kernel: _lambda_.9
$region0: #{_lambda_.9}
  #allocation0 [shape = 'u32[]', space=smem, size = 0x4, offset = 0x4, fixed_abs, tag = 'smem constant byte address 0x4 - core index']
  #allocation1 [shape = 'u32[144,128]{1,0:T(1,128)}', space=vmem, size = 0x12000, scoped, tag = 'internal scratch']
  %s0 = inlined_call_operand.vmem [shape: bf16[112,1280], index: 0, kind: input, shape index: {}]
  %s1 = inlined_call_operand.vmem [shape: bf16[1280,128], index: 1, kind: input, shape index: {}]
  %s2 = inlined_call_operand.vmem [shape: bf16[128,128], index: 2, kind: input, shape index: {}]
  %s3 = inlined_call_operand.vmem [shape: f32[112,128], index: 3, kind: output, shape index: {}]
  %s4 = sld [smem:[#allocation0]]
  $region22: #{_lambda_.9} parent=0
    _
  %s6 = ssub.s32 1, %s4
  %s7 = scalar_select 0, %s6, %s4
  // Predicated region
  $region2: #{_lambda_.9} parent=0 // pred_check
    _
  $region3: #{_lambda_.9} parent=0 // pred_check_branch
    %9 = sbr.rel (0) target = $region5
  $region4: #{_lambda_.9} parent=0 // pred_region
    _
  $region5: #{_lambda_.9} parent=0 // pred_fallthru
    _
  // Predicated region
  $region6: #{_lambda_.9} parent=0 // pred_check
    _
  $region7: #{_lambda_.9} parent=0 // pred_check_branch
    %11 = sbr.rel (0) target = $region9
  $region8: #{_lambda_.9} parent=0 // pred_region
    _
  $region9: #{_lambda_.9} parent=0 // pred_fallthru
    _
  // Predicated region
  $region10: #{_lambda_.9} parent=0 // pred_check
    _
  $region11: #{_lambda_.9} parent=0 // pred_check_branch
    %13 = sbr.rel (0) target = $region13
  $region12: #{_lambda_.9} parent=0 // pred_region
    _
  $region13: #{_lambda_.9} parent=0 // pred_fallthru
    _
  %v15 = vld [vmem:[%s0] sm:$0xff]
  %v16 = vld [vmem:[%s0 + $0x8] sm:$0xff]
  %v17 = vld [vmem:[%s0 + $0x10] sm:$0xff]
  %v18 = vld [vmem:[%s0 + $0x18] sm:$0xff]
  %v19 = vld [vmem:[%s0 + $0x20] sm:$0xff]
  %v20 = vld [vmem:[%s0 + $0x28] sm:$0xff]
  %v21 = vld [vmem:[%s0 + $0x30] sm:$0xff]
  %v22 = vld [vmem:[%s0 + $0x38] sm:$0xff]
  %v23 = vld [vmem:[%s0 + $0x40] sm:$0xff]
  %v24 = vld [vmem:[%s0 + $0x48] sm:$0xff]
  %v25 = vld [vmem:[%s0 + $0x50] sm:$0xff]
  %v26 = vld [vmem:[%s0 + $0x58] sm:$0xff]
  %v27 = vld [vmem:[%s0 + $0x60] sm:$0xff]
  %v28 = vld [vmem:[%s0 + $0x68] sm:$0xff]
  %v29 = vld [vmem:[%s0 + $0x70] sm:$0xff]
  %v30 = vld [vmem:[%s0 + $0x78] sm:$0xff]
  %v31 = vld [vmem:[%s0 + $0x80] sm:$0xff]
  %v32 = vld [vmem:[%s0 + $0x88] sm:$0xff]
  %v33 = vld [vmem:[%s0 + $0x90] sm:$0xff]
  %v34 = vld [vmem:[%s0 + $0x98] sm:$0xff]
  %v35 = vld [vmem:[%s0 + $0xa0] sm:$0xff]
  %v36 = vld [vmem:[%s0 + $0xa8] sm:$0xff]
  %v37 = vld [vmem:[%s0 + $0xb0] sm:$0xff]
  %v38 = vld [vmem:[%s0 + $0xb8] sm:$0xff]
  %v39 = vld [vmem:[%s0 + $0xc0] sm:$0xff]
  %v40 = vld [vmem:[%s0 + $0xc8] sm:$0xff]
  %v41 = vld [vmem:[%s0 + $0xd0] sm:$0xff]
  %v42 = vld [vmem:[%s0 + $0xd8] sm:$0xff]
  %v43 = vld [vmem:[%s0 + $0xe0] sm:$0xff]
  %v44 = vld [vmem:[%s0 + $0xe8] sm:$0xff]
  %v45 = vld [vmem:[%s0 + $0xf0] sm:$0xff]
  %v46 = vld [vmem:[%s0 + $0xf8] sm:$0xff]
  %v47 = vld [vmem:[%s0 + $0x100] sm:$0xff]
  %v48 = vld [vmem:[%s0 + $0x108] sm:$0xff]
  %v49 = vld [vmem:[%s0 + $0x110] sm:$0xff]
  %v50 = vld [vmem:[%s0 + $0x118] sm:$0xff]
  %v51 = vld [vmem:[%s0 + $0x120] sm:$0xff]
  %v52 = vld [vmem:[%s0 + $0x128] sm:$0xff]
  %v53 = vld [vmem:[%s0 + $0x130] sm:$0xff]
  %v54 = vld [vmem:[%s0 + $0x138] sm:$0xff]
  %v55 = vld [vmem:[%s0 + $0x140] sm:$0xff]
  %v56 = vld [vmem:[%s0 + $0x148] sm:$0xff]
  %v57 = vld [vmem:[%s0 + $0x150] sm:$0xff]
  %v58 = vld [vmem:[%s0 + $0x158] sm:$0xff]
  %v59 = vld [vmem:[%s0 + $0x160] sm:$0xff]
  %v60 = vld [vmem:[%s0 + $0x168] sm:$0xff]
  %v61 = vld [vmem:[%s0 + $0x170] sm:$0xff]
  %v62 = vld [vmem:[%s0 + $0x178] sm:$0xff]
  %v63 = vld [vmem:[%s0 + $0x180] sm:$0xff]
  %v64 = vld [vmem:[%s0 + $0x188] sm:$0xff]
  %v65 = vld [vmem:[%s0 + $0x190] sm:$0xff]
  %v66 = vld [vmem:[%s0 + $0x198] sm:$0xff]
  %v67 = vld [vmem:[%s0 + $0x1a0] sm:$0xff]
  %v68 = vld [vmem:[%s0 + $0x1a8] sm:$0xff]
  %v69 = vld [vmem:[%s0 + $0x1b0] sm:$0xff]
  %v70 = vld [vmem:[%s0 + $0x1b8] sm:$0xff]
  %v71 = vld [vmem:[%s0 + $0x1c0] sm:$0xff]
  %v72 = vld [vmem:[%s0 + $0x1c8] sm:$0xff]
  %v73 = vld [vmem:[%s0 + $0x1d0] sm:$0xff]
  %v74 = vld [vmem:[%s0 + $0x1d8] sm:$0xff]
  %v75 = vld [vmem:[%s0 + $0x1e0] sm:$0xff]
  %v76 = vld [vmem:[%s0 + $0x1e8] sm:$0xff]
  %v77 = vld [vmem:[%s0 + $0x1f0] sm:$0xff]
  %v78 = vld [vmem:[%s0 + $0x1f8] sm:$0xff]
  %v79 = vld [vmem:[%s0 + $0x200] sm:$0xff]
  %v80 = vld [vmem:[%s0 + $0x208] sm:$0xff]
  %v81 = vld [vmem:[%s0 + $0x210] sm:$0xff]
  %v82 = vld [vmem:[%s0 + $0x218] sm:$0xff]
  %v83 = vld [vmem:[%s0 + $0x220] sm:$0xff]
  %v84 = vld [vmem:[%s0 + $0x228] sm:$0xff]
  %v85 = vld [vmem:[%s1] sm:$0xf]
  %v86 = vld [vmem:[%s1 + $0x4] sm:$0xf]
  %v87 = vld [vmem:[%s1 + $0x8] sm:$0xf]
  %v88 = vld [vmem:[%s1 + $0xc] sm:$0xf]
  %v89 = vld [vmem:[%s1 + $0x10] sm:$0xf]
  %v90 = vld [vmem:[%s1 + $0x14] sm:$0xf]
  %v91 = vld [vmem:[%s1 + $0x18] sm:$0xf]
  %v92 = vld [vmem:[%s1 + $0x1c] sm:$0xf]
  %v93 = vld [vmem:[%s1 + $0x20] sm:$0xf]
  %v94 = vld [vmem:[%s1 + $0x24] sm:$0xf]
  %v95 = vld [vmem:[%s1 + $0x28] sm:$0xf]
  %v96 = vld [vmem:[%s1 + $0x2c] sm:$0xf]
  %v97 = vld [vmem:[%s1 + $0x30] sm:$0xf]
  %v98 = vld [vmem:[%s1 + $0x34] sm:$0xf]
  %v99 = vld [vmem:[%s1 + $0x38] sm:$0xf]
  %v100 = vld [vmem:[%s1 + $0x3c] sm:$0xf]
  %v101 = vld [vmem:[%s1 + $0x40] sm:$0xf]
  %v102 = vld [vmem:[%s1 + $0x44] sm:$0xf]
  %v103 = vld [vmem:[%s1 + $0x48] sm:$0xf]
  %v104 = vld [vmem:[%s1 + $0x4c] sm:$0xf]
  %v105 = vld [vmem:[%s1 + $0x50] sm:$0xf]
  %v106 = vld [vmem:[%s1 + $0x54] sm:$0xf]
  %v107 = vld [vmem:[%s1 + $0x58] sm:$0xf]
  %v108 = vld [vmem:[%s1 + $0x5c] sm:$0xf]
  %v109 = vld [vmem:[%s1 + $0x60] sm:$0xf]
  %v110 = vld [vmem:[%s1 + $0x64] sm:$0xf]
  %v111 = vld [vmem:[%s1 + $0x68] sm:$0xf]
  %v112 = vld [vmem:[%s1 + $0x6c] sm:$0xf]
  %v113 = vld [vmem:[%s1 + $0x70] sm:$0xf]
  %v114 = vld [vmem:[%s1 + $0x74] sm:$0xf]
  %v115 = vld [vmem:[%s1 + $0x78] sm:$0xf]
  %v116 = vld [vmem:[%s1 + $0x7c] sm:$0xf]
  %v117 = vld [vmem:[%s1 + $0x80] sm:$0xf]
  %v118 = vld [vmem:[%s1 + $0x84] sm:$0xf]
  %v119 = vld [vmem:[%s1 + $0x88] sm:$0xf]
  %v120 = vld [vmem:[%s1 + $0x8c] sm:$0xf]
  %v121 = vld [vmem:[%s1 + $0x90] sm:$0xf]
  %v122 = vld [vmem:[%s1 + $0x94] sm:$0xf]
  %v123 = vld [vmem:[%s1 + $0x98] sm:$0xf]
  %v124 = vld [vmem:[%s1 + $0x9c] sm:$0xf]
  %v125 = vld [vmem:[%s1 + $0xa0] sm:$0xf]
  %v126 = vld [vmem:[%s1 + $0xa4] sm:$0xf]
  %v127 = vld [vmem:[%s1 + $0xa8] sm:$0xf]
  %v128 = vld [vmem:[%s1 + $0xac] sm:$0xf]
  %v129 = vld [vmem:[%s1 + $0xb0] sm:$0xf]
  %v130 = vld [vmem:[%s1 + $0xb4] sm:$0xf]
  %v131 = vld [vmem:[%s1 + $0xb8] sm:$0xf]
  %v132 = vld [vmem:[%s1 + $0xbc] sm:$0xf]
  %v133 = vld [vmem:[%s1 + $0xc0] sm:$0xf]
  %v134 = vld [vmem:[%s1 + $0xc4] sm:$0xf]
  %v135 = vld [vmem:[%s1 + $0xc8] sm:$0xf]
  %v136 = vld [vmem:[%s1 + $0xcc] sm:$0xf]
  %v137 = vld [vmem:[%s1 + $0xd0] sm:$0xf]
  %v138 = vld [vmem:[%s1 + $0xd4] sm:$0xf]
  %v139 = vld [vmem:[%s1 + $0xd8] sm:$0xf]
  %v140 = vld [vmem:[%s1 + $0xdc] sm:$0xf]
  %v141 = vld [vmem:[%s1 + $0xe0] sm:$0xf]
  %v142 = vld [vmem:[%s1 + $0xe4] sm:$0xf]
  %v143 = vld [vmem:[%s1 + $0xe8] sm:$0xf]
  %v144 = vld [vmem:[%s1 + $0xec] sm:$0xf]
  %v145 = vld [vmem:[%s1 + $0xf0] sm:$0xf]
  %v146 = vld [vmem:[%s1 + $0xf4] sm:$0xf]
  %v147 = vld [vmem:[%s1 + $0xf8] sm:$0xf]
  %v148 = vld [vmem:[%s1 + $0xfc] sm:$0xf]
  %v149 = vld [vmem:[%s1 + $0x100] sm:$0xf]
  %v150 = vld [vmem:[%s1 + $0x104] sm:$0xf]
  %v151 = vld [vmem:[%s1 + $0x108] sm:$0xf]
  %v152 = vld [vmem:[%s1 + $0x10c] sm:$0xf]
  %v153 = vld [vmem:[%s1 + $0x110] sm:$0xf]
  %v154 = vld [vmem:[%s1 + $0x114] sm:$0xf]
  %v155 = vld [vmem:[%s1 + $0x118] sm:$0xf]
  %v156 = vld [vmem:[%s1 + $0x11c] sm:$0xf]
  %v157 = vld [vmem:[%s1 + $0x120] sm:$0xf]
  %v158 = vld [vmem:[%s1 + $0x124] sm:$0xf]
  %v159 = vld [vmem:[%s1 + $0x128] sm:$0xf]
  %v160 = vld [vmem:[%s1 + $0x12c] sm:$0xf]
  %v161 = vld [vmem:[%s1 + $0x130] sm:$0xf]
  %v162 = vld [vmem:[%s1 + $0x134] sm:$0xf]
  %v163 = vld [vmem:[%s1 + $0x138] sm:$0xf]
  %v164 = vld [vmem:[%s1 + $0x13c] sm:$0xf]
  %v165 = vld [vmem:[%s1 + $0x140] sm:$0xf]
  %v166 = vld [vmem:[%s1 + $0x144] sm:$0xf]
  %v167 = vld [vmem:[%s1 + $0x148] sm:$0xf]
  %v168 = vld [vmem:[%s1 + $0x14c] sm:$0xf]
  %v169 = vld [vmem:[%s1 + $0x150] sm:$0xf]
  %v170 = vld [vmem:[%s1 + $0x154] sm:$0xf]
  %v171 = vld [vmem:[%s1 + $0x158] sm:$0xf]
  %v172 = vld [vmem:[%s1 + $0x15c] sm:$0xf]
  %v173 = vld [vmem:[%s1 + $0x160] sm:$0xf]
  %v174 = vld [vmem:[%s1 + $0x164] sm:$0xf]
  %v175 = vld [vmem:[%s1 + $0x168] sm:$0xf]
  %v176 = vld [vmem:[%s1 + $0x16c] sm:$0xf]
  %v177 = vld [vmem:[%s1 + $0x170] sm:$0xf]
  %v178 = vld [vmem:[%s1 + $0x174] sm:$0xf]
  %v179 = vld [vmem:[%s1 + $0x178] sm:$0xf]
  %v180 = vld [vmem:[%s1 + $0x17c] sm:$0xf]
  %v181 = vld [vmem:[%s1 + $0x180] sm:$0xf]
  %v182 = vld [vmem:[%s1 + $0x184] sm:$0xf]
  %v183 = vld [vmem:[%s1 + $0x188] sm:$0xf]
  %v184 = vld [vmem:[%s1 + $0x18c] sm:$0xf]
  %v185 = vld [vmem:[%s1 + $0x190] sm:$0xf]
  %v186 = vld [vmem:[%s1 + $0x194] sm:$0xf]
  %v187 = vld [vmem:[%s1 + $0x198] sm:$0xf]
  %v188 = vld [vmem:[%s1 + $0x19c] sm:$0xf]
  %v189 = vld [vmem:[%s1 + $0x1a0] sm:$0xf]
  %v190 = vld [vmem:[%s1 + $0x1a4] sm:$0xf]
  %v191 = vld [vmem:[%s1 + $0x1a8] sm:$0xf]
  %v192 = vld [vmem:[%s1 + $0x1ac] sm:$0xf]
  %v193 = vld [vmem:[%s1 + $0x1b0] sm:$0xf]
  %v194 = vld [vmem:[%s1 + $0x1b4] sm:$0xf]
  %v195 = vld [vmem:[%s1 + $0x1b8] sm:$0xf]
  %v196 = vld [vmem:[%s1 + $0x1bc] sm:$0xf]
  %v197 = vld [vmem:[%s1 + $0x1c0] sm:$0xf]
  %v198 = vld [vmem:[%s1 + $0x1c4] sm:$0xf]
  %v199 = vld [vmem:[%s1 + $0x1c8] sm:$0xf]
  %v200 = vld [vmem:[%s1 + $0x1cc] sm:$0xf]
  %v201 = vld [vmem:[%s1 + $0x1d0] sm:$0xf]
  %v202 = vld [vmem:[%s1 + $0x1d4] sm:$0xf]
  %v203 = vld [vmem:[%s1 + $0x1d8] sm:$0xf]
  %v204 = vld [vmem:[%s1 + $0x1dc] sm:$0xf]
  %v205 = vld [vmem:[%s1 + $0x1e0] sm:$0xf]
  %v206 = vld [vmem:[%s1 + $0x1e4] sm:$0xf]
  %v207 = vld [vmem:[%s1 + $0x1e8] sm:$0xf]
  %v208 = vld [vmem:[%s1 + $0x1ec] sm:$0xf]
  %v209 = vld [vmem:[%s1 + $0x1f0] sm:$0xf]
  %v210 = vld [vmem:[%s1 + $0x1f4] sm:$0xf]
  %v211 = vld [vmem:[%s1 + $0x1f8] sm:$0xf]
  %v212 = vld [vmem:[%s1 + $0x1fc] sm:$0xf]
  %v213 = vld [vmem:[%s1 + $0x200] sm:$0xf]
  %v214 = vld [vmem:[%s1 + $0x204] sm:$0xf]
  %v215 = vld [vmem:[%s1 + $0x208] sm:$0xf]
  %v216 = vld [vmem:[%s1 + $0x20c] sm:$0xf]
  %v217 = vld [vmem:[%s1 + $0x210] sm:$0xf]
  %v218 = vld [vmem:[%s1 + $0x214] sm:$0xf]
  %v219 = vld [vmem:[%s1 + $0x218] sm:$0xf]
  %v220 = vld [vmem:[%s1 + $0x21c] sm:$0xf]
  %v221 = vld [vmem:[%s1 + $0x220] sm:$0xf]
  %v222 = vld [vmem:[%s1 + $0x224] sm:$0xf]
  %v223 = vld [vmem:[%s1 + $0x228] sm:$0xf]
  %v224 = vld [vmem:[%s1 + $0x22c] sm:$0xf]
  %v225 = vld [vmem:[%s1 + $0x230] sm:$0xf]
  %v226 = vld [vmem:[%s1 + $0x234] sm:$0xf]
  %v227 = vld [vmem:[%s1 + $0x238] sm:$0xf]
  %v228 = vld [vmem:[%s1 + $0x23c] sm:$0xf]
  %v229 = vld [vmem:[%s1 + $0x240] sm:$0xf]
  %v230 = vld [vmem:[%s1 + $0x244] sm:$0xf]
  %v231 = vld [vmem:[%s1 + $0x248] sm:$0xf]
  %v232 = vld [vmem:[%s1 + $0x24c] sm:$0xf]
  %v233 = vld [vmem:[%s1 + $0x250] sm:$0xf]
  %v234 = vld [vmem:[%s1 + $0x254] sm:$0xf]
  %v235 = vld [vmem:[%s1 + $0x258] sm:$0xf]
  %v236 = vld [vmem:[%s1 + $0x25c] sm:$0xf]
  %v237 = vld [vmem:[%s1 + $0x260] sm:$0xf]
  %v238 = vld [vmem:[%s1 + $0x264] sm:$0xf]
  %v239 = vld [vmem:[%s1 + $0x268] sm:$0xf]
  %v240 = vld [vmem:[%s1 + $0x26c] sm:$0xf]
  %v241 = vld [vmem:[%s1 + $0x270] sm:$0xf]
  %v242 = vld [vmem:[%s1 + $0x274] sm:$0xf]
  %v243 = vld [vmem:[%s1 + $0x278] sm:$0xf]
  %v244 = vld [vmem:[%s1 + $0x27c] sm:$0xf]
  %v315 = vunpack.c.l.b16 %v15
  %v316 = vunpack.c.h.b16 %v15
  %v317 = vunpack.c.l.b16 %v16
  %v318 = vunpack.c.h.b16 %v16
  %v319 = vunpack.c.l.b16 %v17
  %v320 = vunpack.c.h.b16 %v17
  %v321 = vunpack.c.l.b16 %v18
  %v322 = vunpack.c.h.b16 %v18
  %v323 = vunpack.c.l.b16 %v19
  %v324 = vunpack.c.h.b16 %v19
  %v325 = vunpack.c.l.b16 %v20
  %v326 = vunpack.c.h.b16 %v20
  %v327 = vunpack.c.l.b16 %v21
  %v328 = vunpack.c.h.b16 %v21
  %v329 = vunpack.c.l.b16 %v22
  %v330 = vunpack.c.h.b16 %v22
  %v331 = vunpack.c.l.b16 %v23
  %v332 = vunpack.c.h.b16 %v23
  %v333 = vunpack.c.l.b16 %v24
  %v334 = vunpack.c.h.b16 %v24
  %v335 = vunpack.c.l.b16 %v25
  %v336 = vunpack.c.h.b16 %v25
  %v337 = vunpack.c.l.b16 %v26
  %v338 = vunpack.c.h.b16 %v26
  %v339 = vunpack.c.l.b16 %v27
  %v340 = vunpack.c.h.b16 %v27
  %v341 = vunpack.c.l.b16 %v28
  %v342 = vunpack.c.h.b16 %v28
  %v343 = vunpack.c.l.b16 %v29
  %v344 = vunpack.c.h.b16 %v29
  %v345 = vunpack.c.l.b16 %v30
  %v346 = vunpack.c.h.b16 %v30
  %v347 = vunpack.c.l.b16 %v31
  %v348 = vunpack.c.h.b16 %v31
  %v349 = vunpack.c.l.b16 %v32
  %v350 = vunpack.c.h.b16 %v32
  %v351 = vunpack.c.l.b16 %v33
  %v352 = vunpack.c.h.b16 %v33
  %v353 = vunpack.c.l.b16 %v34
  %v354 = vunpack.c.h.b16 %v34
  %v355 = vunpack.c.l.b16 %v35
  %v356 = vunpack.c.h.b16 %v35
  %v357 = vunpack.c.l.b16 %v36
  %v358 = vunpack.c.h.b16 %v36
  %v359 = vunpack.c.l.b16 %v37
  %v360 = vunpack.c.h.b16 %v37
  %v361 = vunpack.c.l.b16 %v38
  %v362 = vunpack.c.h.b16 %v38
  %v363 = vunpack.c.l.b16 %v39
  %v364 = vunpack.c.h.b16 %v39
  %v365 = vunpack.c.l.b16 %v40
  %v366 = vunpack.c.h.b16 %v40
  %v367 = vunpack.c.l.b16 %v41
  %v368 = vunpack.c.h.b16 %v41
  %v369 = vunpack.c.l.b16 %v42
  %v370 = vunpack.c.h.b16 %v42
  %v371 = vunpack.c.l.b16 %v43
  %v372 = vunpack.c.h.b16 %v43
  %v373 = vunpack.c.l.b16 %v44
  %v374 = vunpack.c.h.b16 %v44
  %v375 = vunpack.c.l.b16 %v45
  %v376 = vunpack.c.h.b16 %v45
  %v377 = vunpack.c.l.b16 %v46
  %v378 = vunpack.c.h.b16 %v46
  %v379 = vunpack.c.l.b16 %v47
  %v380 = vunpack.c.h.b16 %v47
  %v381 = vunpack.c.l.b16 %v48
  %v382 = vunpack.c.h.b16 %v48
  %v383 = vunpack.c.l.b16 %v49
  %v384 = vunpack.c.h.b16 %v49
  %v385 = vunpack.c.l.b16 %v50
  %v386 = vunpack.c.h.b16 %v50
  %v387 = vunpack.c.l.b16 %v51
  %v388 = vunpack.c.h.b16 %v51
  %v389 = vunpack.c.l.b16 %v52
  %v390 = vunpack.c.h.b16 %v52
  %v391 = vunpack.c.l.b16 %v53
  %v392 = vunpack.c.h.b16 %v53
  %v393 = vunpack.c.l.b16 %v54
  %v394 = vunpack.c.h.b16 %v54
  %v395 = vunpack.c.l.b16 %v55
  %v396 = vunpack.c.h.b16 %v55
  %v397 = vunpack.c.l.b16 %v56
  %v398 = vunpack.c.h.b16 %v56
  %v399 = vunpack.c.l.b16 %v57
  %v400 = vunpack.c.h.b16 %v57
  %v401 = vunpack.c.l.b16 %v58
  %v402 = vunpack.c.h.b16 %v58
  %v403 = vunpack.c.l.b16 %v59
  %v404 = vunpack.c.h.b16 %v59
  %v405 = vunpack.c.l.b16 %v60
  %v406 = vunpack.c.h.b16 %v60
  %v407 = vunpack.c.l.b16 %v61
  %v408 = vunpack.c.h.b16 %v61
  %v409 = vunpack.c.l.b16 %v62
  %v410 = vunpack.c.h.b16 %v62
  %v411 = vunpack.c.l.b16 %v63
  %v412 = vunpack.c.h.b16 %v63
  %v413 = vunpack.c.l.b16 %v64
  %v414 = vunpack.c.h.b16 %v64
  %v415 = vunpack.c.l.b16 %v65
  %v416 = vunpack.c.h.b16 %v65
  %v417 = vunpack.c.l.b16 %v66
  %v418 = vunpack.c.h.b16 %v66
  %v419 = vunpack.c.l.b16 %v67
  %v420 = vunpack.c.h.b16 %v67
  %v421 = vunpack.c.l.b16 %v68
  %v422 = vunpack.c.h.b16 %v68
  %v423 = vunpack.c.l.b16 %v69
  %v424 = vunpack.c.h.b16 %v69
  %v425 = vunpack.c.l.b16 %v70
  %v426 = vunpack.c.h.b16 %v70
  %v427 = vunpack.c.l.b16 %v71
  %v428 = vunpack.c.h.b16 %v71
  %v429 = vunpack.c.l.b16 %v72
  %v430 = vunpack.c.h.b16 %v72
  %v431 = vunpack.c.l.b16 %v73
  %v432 = vunpack.c.h.b16 %v73
  %v433 = vunpack.c.l.b16 %v74
  %v434 = vunpack.c.h.b16 %v74
  %v435 = vunpack.c.l.b16 %v75
  %v436 = vunpack.c.h.b16 %v75
  %v437 = vunpack.c.l.b16 %v76
  %v438 = vunpack.c.h.b16 %v76
  %v439 = vunpack.c.l.b16 %v77
  %v440 = vunpack.c.h.b16 %v77
  %v441 = vunpack.c.l.b16 %v78
  %v442 = vunpack.c.h.b16 %v78
  %v443 = vunpack.c.l.b16 %v79
  %v444 = vunpack.c.h.b16 %v79
  %v445 = vunpack.c.l.b16 %v80
  %v446 = vunpack.c.h.b16 %v80
  %v447 = vunpack.c.l.b16 %v81
  %v448 = vunpack.c.h.b16 %v81
  %v449 = vunpack.c.l.b16 %v82
  %v450 = vunpack.c.h.b16 %v82
  %v451 = vunpack.c.l.b16 %v83
  %v452 = vunpack.c.h.b16 %v83
  %v453 = vunpack.c.l.b16 %v84
  %v454 = vunpack.c.h.b16 %v84
  %v455 = vpack.c.b16 %v325, %v315
  %v456 = vpack.c.b16 %v326, %v316
  %v457 = vpack.c.b16 %v327, %v317
  %v458 = vpack.c.b16 %v328, %v318
  %v459 = vpack.c.b16 %v329, %v319
  %v460 = vpack.c.b16 %v330, %v320
  %v461 = vpack.c.b16 %v331, %v321
  %v462 = vpack.c.b16 %v332, %v322
  %v463 = vpack.c.b16 %v333, %v323
  %v464 = vpack.c.b16 %v334, %v324
  %v465 = vpack.c.b16 %v345, %v335
  %v466 = vpack.c.b16 %v346, %v336
  %v467 = vpack.c.b16 %v347, %v337
  %v468 = vpack.c.b16 %v348, %v338
  %v469 = vpack.c.b16 %v349, %v339
  %v470 = vpack.c.b16 %v350, %v340
  %v471 = vpack.c.b16 %v351, %v341
  %v472 = vpack.c.b16 %v352, %v342
  %v473 = vpack.c.b16 %v353, %v343
  %v474 = vpack.c.b16 %v354, %v344
  %v475 = vpack.c.b16 %v365, %v355
  %v476 = vpack.c.b16 %v366, %v356
  %v477 = vpack.c.b16 %v367, %v357
  %v478 = vpack.c.b16 %v368, %v358
  %v479 = vpack.c.b16 %v369, %v359
  %v480 = vpack.c.b16 %v370, %v360
  %v481 = vpack.c.b16 %v371, %v361
  %v482 = vpack.c.b16 %v372, %v362
  %v483 = vpack.c.b16 %v373, %v363
  %v484 = vpack.c.b16 %v374, %v364
  %v485 = vpack.c.b16 %v385, %v375
  %v486 = vpack.c.b16 %v386, %v376
  %v487 = vpack.c.b16 %v387, %v377
  %v488 = vpack.c.b16 %v388, %v378
  %v489 = vpack.c.b16 %v389, %v379
  %v490 = vpack.c.b16 %v390, %v380
  %v491 = vpack.c.b16 %v391, %v381
  %v492 = vpack.c.b16 %v392, %v382
  %v493 = vpack.c.b16 %v393, %v383
  %v494 = vpack.c.b16 %v394, %v384
  %v495 = vpack.c.b16 %v405, %v395
  %v496 = vpack.c.b16 %v406, %v396
  %v497 = vpack.c.b16 %v407, %v397
  %v498 = vpack.c.b16 %v408, %v398
  %v499 = vpack.c.b16 %v409, %v399
  %v500 = vpack.c.b16 %v410, %v400
  %v501 = vpack.c.b16 %v411, %v401
  %v502 = vpack.c.b16 %v412, %v402
  %v503 = vpack.c.b16 %v413, %v403
  %v504 = vpack.c.b16 %v414, %v404
  %v505 = vpack.c.b16 %v425, %v415
  %v506 = vpack.c.b16 %v426, %v416
  %v507 = vpack.c.b16 %v427, %v417
  %v508 = vpack.c.b16 %v428, %v418
  %v509 = vpack.c.b16 %v429, %v419
  %v510 = vpack.c.b16 %v430, %v420
  %v511 = vpack.c.b16 %v431, %v421
  %v512 = vpack.c.b16 %v432, %v422
  %v513 = vpack.c.b16 %v433, %v423
  %v514 = vpack.c.b16 %v434, %v424
  %v515 = vpack.c.b16 %v445, %v435
  %v516 = vpack.c.b16 %v446, %v436
  %v517 = vpack.c.b16 %v447, %v437
  %v518 = vpack.c.b16 %v448, %v438
  %v519 = vpack.c.b16 %v449, %v439
  %v520 = vpack.c.b16 %v450, %v440
  %v521 = vpack.c.b16 %v451, %v441
  %v522 = vpack.c.b16 %v452, %v442
  %v523 = vpack.c.b16 %v453, %v443
  %v524 = vpack.c.b16 %v454, %v444
  %v755 = vunpack.c.l.b16 %v85
  %v756 = vunpack.c.l.b16 %v86
  %v757 = vunpack.c.l.b16 %v87
  %v758 = vunpack.c.l.b16 %v88
  %v759 = vunpack.c.l.b16 %v89
  %v760 = vunpack.c.l.b16 %v90
  %v761 = vunpack.c.l.b16 %v91
  %v762 = vunpack.c.l.b16 %v92
  %v763 = vunpack.c.l.b16 %v93
  %v764 = vunpack.c.l.b16 %v94
  %v765 = vunpack.c.l.b16 %v95
  %v766 = vunpack.c.l.b16 %v96
  %v767 = vunpack.c.l.b16 %v97
  %v768 = vunpack.c.l.b16 %v98
  %v769 = vunpack.c.l.b16 %v99
  %v770 = vunpack.c.l.b16 %v100
  %v771 = vunpack.c.l.b16 %v101
  %v772 = vunpack.c.l.b16 %v102
  %v773 = vunpack.c.l.b16 %v103
  %v774 = vunpack.c.l.b16 %v104
  %v775 = vunpack.c.l.b16 %v105
  %v776 = vunpack.c.l.b16 %v106
  %v777 = vunpack.c.l.b16 %v107
  %v778 = vunpack.c.l.b16 %v108
  %v779 = vunpack.c.l.b16 %v109
  %v780 = vunpack.c.l.b16 %v110
  %v781 = vunpack.c.l.b16 %v111
  %v782 = vunpack.c.l.b16 %v112
  %v783 = vunpack.c.l.b16 %v113
  %v784 = vunpack.c.l.b16 %v114
  %v785 = vunpack.c.l.b16 %v115
  %v786 = vunpack.c.l.b16 %v116
  %v787 = vunpack.c.l.b16 %v117
  %v788 = vunpack.c.l.b16 %v118
  %v789 = vunpack.c.l.b16 %v119
  %v790 = vunpack.c.l.b16 %v120
  %v791 = vunpack.c.l.b16 %v121
  %v792 = vunpack.c.l.b16 %v122
  %v793 = vunpack.c.l.b16 %v123
  %v794 = vunpack.c.l.b16 %v124
  %v795 = vunpack.c.l.b16 %v125
  %v796 = vunpack.c.l.b16 %v126
  %v797 = vunpack.c.l.b16 %v127
  %v798 = vunpack.c.l.b16 %v128
  %v799 = vunpack.c.l.b16 %v129
  %v800 = vunpack.c.l.b16 %v130
  %v801 = vunpack.c.l.b16 %v131
  %v802 = vunpack.c.l.b16 %v132
  %v803 = vunpack.c.l.b16 %v133
  %v804 = vunpack.c.l.b16 %v134
  %v805 = vunpack.c.l.b16 %v135
  %v806 = vunpack.c.l.b16 %v136
  %v807 = vunpack.c.l.b16 %v137
  %v808 = vunpack.c.l.b16 %v138
  %v809 = vunpack.c.l.b16 %v139
  %v810 = vunpack.c.l.b16 %v140
  %v811 = vunpack.c.l.b16 %v141
  %v812 = vunpack.c.l.b16 %v142
  %v813 = vunpack.c.l.b16 %v143
  %v814 = vunpack.c.l.b16 %v144
  %v815 = vunpack.c.l.b16 %v145
  %v816 = vunpack.c.l.b16 %v146
  %v817 = vunpack.c.l.b16 %v147
  %v818 = vunpack.c.l.b16 %v148
  %v819 = vunpack.c.l.b16 %v149
  %v820 = vunpack.c.l.b16 %v150
  %v821 = vunpack.c.l.b16 %v151
  %v822 = vunpack.c.l.b16 %v152
  %v823 = vunpack.c.l.b16 %v153
  %v824 = vunpack.c.l.b16 %v154
  %v825 = vunpack.c.l.b16 %v155
  %v826 = vunpack.c.l.b16 %v156
  %v827 = vunpack.c.l.b16 %v157
  %v828 = vunpack.c.l.b16 %v158
  %v829 = vunpack.c.l.b16 %v159
  %v830 = vunpack.c.l.b16 %v160
  %v831 = vunpack.c.l.b16 %v161
  %v832 = vunpack.c.l.b16 %v162
  %v833 = vunpack.c.l.b16 %v163
  %v834 = vunpack.c.l.b16 %v164
  %v835 = vunpack.c.l.b16 %v165
  %v836 = vunpack.c.l.b16 %v166
  %v837 = vunpack.c.l.b16 %v167
  %v838 = vunpack.c.l.b16 %v168
  %v839 = vunpack.c.l.b16 %v169
  %v840 = vunpack.c.l.b16 %v170
  %v841 = vunpack.c.l.b16 %v171
  %v842 = vunpack.c.l.b16 %v172
  %v843 = vunpack.c.l.b16 %v173
  %v844 = vunpack.c.l.b16 %v174
  %v845 = vunpack.c.l.b16 %v175
  %v846 = vunpack.c.l.b16 %v176
  %v847 = vunpack.c.l.b16 %v177
  %v848 = vunpack.c.l.b16 %v178
  %v849 = vunpack.c.l.b16 %v179
  %v850 = vunpack.c.l.b16 %v180
  %v851 = vunpack.c.l.b16 %v181
  %v852 = vunpack.c.l.b16 %v182
  %v853 = vunpack.c.l.b16 %v183
  %v854 = vunpack.c.l.b16 %v184
  %v855 = vunpack.c.l.b16 %v185
  %v856 = vunpack.c.l.b16 %v186
  %v857 = vunpack.c.l.b16 %v187
  %v858 = vunpack.c.l.b16 %v188
  %v859 = vunpack.c.l.b16 %v189
  %v860 = vunpack.c.l.b16 %v190
  %v861 = vunpack.c.l.b16 %v191
  %v862 = vunpack.c.l.b16 %v192
  %v863 = vunpack.c.l.b16 %v193
  %v864 = vunpack.c.l.b16 %v194
  %v865 = vunpack.c.l.b16 %v195
  %v866 = vunpack.c.l.b16 %v196
  %v867 = vunpack.c.l.b16 %v197
  %v868 = vunpack.c.l.b16 %v198
  %v869 = vunpack.c.l.b16 %v199
  %v870 = vunpack.c.l.b16 %v200
  %v871 = vunpack.c.l.b16 %v201
  %v872 = vunpack.c.l.b16 %v202
  %v873 = vunpack.c.l.b16 %v203
  %v874 = vunpack.c.l.b16 %v204
  %v875 = vunpack.c.l.b16 %v205
  %v876 = vunpack.c.l.b16 %v206
  %v877 = vunpack.c.l.b16 %v207
  %v878 = vunpack.c.l.b16 %v208
  %v879 = vunpack.c.l.b16 %v209
  %v880 = vunpack.c.l.b16 %v210
  %v881 = vunpack.c.l.b16 %v211
  %v882 = vunpack.c.l.b16 %v212
  %v883 = vunpack.c.l.b16 %v213
  %v884 = vunpack.c.l.b16 %v214
  %v885 = vunpack.c.l.b16 %v215
  %v886 = vunpack.c.l.b16 %v216
  %v887 = vunpack.c.l.b16 %v217
  %v888 = vunpack.c.l.b16 %v218
  %v889 = vunpack.c.l.b16 %v219
  %v890 = vunpack.c.l.b16 %v220
  %v891 = vunpack.c.l.b16 %v221
  %v892 = vunpack.c.l.b16 %v222
  %v893 = vunpack.c.l.b16 %v223
  %v894 = vunpack.c.l.b16 %v224
  %v895 = vunpack.c.l.b16 %v225
  %v896 = vunpack.c.l.b16 %v226
  %v897 = vunpack.c.l.b16 %v227
  %v898 = vunpack.c.l.b16 %v228
  %v899 = vunpack.c.l.b16 %v229
  %v900 = vunpack.c.l.b16 %v230
  %v901 = vunpack.c.l.b16 %v231
  %v902 = vunpack.c.l.b16 %v232
  %v903 = vunpack.c.l.b16 %v233
  %v904 = vunpack.c.l.b16 %v234
  %v905 = vunpack.c.l.b16 %v235
  %v906 = vunpack.c.l.b16 %v236
  %v907 = vunpack.c.l.b16 %v237
  %v908 = vunpack.c.l.b16 %v238
  %v909 = vunpack.c.l.b16 %v239
  %v910 = vunpack.c.l.b16 %v240
  %v911 = vunpack.c.l.b16 %v241
  %v912 = vunpack.c.l.b16 %v242
  %v913 = vunpack.c.l.b16 %v243
  %v914 = vunpack.c.l.b16 %v244
  %v915 = vpack.c.b16 %v756, %v755
  %v916 = vpack.c.b16 %v758, %v757
  %v917 = vpack.c.b16 %v760, %v759
  %v918 = vpack.c.b16 %v762, %v761
  %v919 = vpack.c.b16 %v764, %v763
  %v920 = vpack.c.b16 %v766, %v765
  %v921 = vpack.c.b16 %v768, %v767
  %v922 = vpack.c.b16 %v770, %v769
  %v923 = vpack.c.b16 %v772, %v771
  %v924 = vpack.c.b16 %v774, %v773
  %v925 = vpack.c.b16 %v776, %v775
  %v926 = vpack.c.b16 %v778, %v777
  %v927 = vpack.c.b16 %v780, %v779
  %v928 = vpack.c.b16 %v782, %v781
  %v929 = vpack.c.b16 %v784, %v783
  %v930 = vpack.c.b16 %v786, %v785
  %v931 = vpack.c.b16 %v788, %v787
  %v932 = vpack.c.b16 %v790, %v789
  %v933 = vpack.c.b16 %v792, %v791
  %v934 = vpack.c.b16 %v794, %v793
  %v935 = vpack.c.b16 %v796, %v795
  %v936 = vpack.c.b16 %v798, %v797
  %v937 = vpack.c.b16 %v800, %v799
  %v938 = vpack.c.b16 %v802, %v801
  %v939 = vpack.c.b16 %v804, %v803
  %v940 = vpack.c.b16 %v806, %v805
  %v941 = vpack.c.b16 %v808, %v807
  %v942 = vpack.c.b16 %v810, %v809
  %v943 = vpack.c.b16 %v812, %v811
  %v944 = vpack.c.b16 %v814, %v813
  %v945 = vpack.c.b16 %v816, %v815
  %v946 = vpack.c.b16 %v818, %v817
  %v947 = vpack.c.b16 %v820, %v819
  %v948 = vpack.c.b16 %v822, %v821
  %v949 = vpack.c.b16 %v824, %v823
  %v950 = vpack.c.b16 %v826, %v825
  %v951 = vpack.c.b16 %v828, %v827
  %v952 = vpack.c.b16 %v830, %v829
  %v953 = vpack.c.b16 %v832, %v831
  %v954 = vpack.c.b16 %v834, %v833
  %v955 = vpack.c.b16 %v836, %v835
  %v956 = vpack.c.b16 %v838, %v837
  %v957 = vpack.c.b16 %v840, %v839
  %v958 = vpack.c.b16 %v842, %v841
  %v959 = vpack.c.b16 %v844, %v843
  %v960 = vpack.c.b16 %v846, %v845
  %v961 = vpack.c.b16 %v848, %v847
  %v962 = vpack.c.b16 %v850, %v849
  %v963 = vpack.c.b16 %v852, %v851
  %v964 = vpack.c.b16 %v854, %v853
  %v965 = vpack.c.b16 %v856, %v855
  %v966 = vpack.c.b16 %v858, %v857
  %v967 = vpack.c.b16 %v860, %v859
  %v968 = vpack.c.b16 %v862, %v861
  %v969 = vpack.c.b16 %v864, %v863
  %v970 = vpack.c.b16 %v866, %v865
  %v971 = vpack.c.b16 %v868, %v867
  %v972 = vpack.c.b16 %v870, %v869
  %v973 = vpack.c.b16 %v872, %v871
  %v974 = vpack.c.b16 %v874, %v873
  %v975 = vpack.c.b16 %v876, %v875
  %v976 = vpack.c.b16 %v878, %v877
  %v977 = vpack.c.b16 %v880, %v879
  %v978 = vpack.c.b16 %v882, %v881
  %v979 = vpack.c.b16 %v884, %v883
  %v980 = vpack.c.b16 %v886, %v885
  %v981 = vpack.c.b16 %v888, %v887
  %v982 = vpack.c.b16 %v890, %v889
  %v983 = vpack.c.b16 %v892, %v891
  %v984 = vpack.c.b16 %v894, %v893
  %v985 = vpack.c.b16 %v896, %v895
  %v986 = vpack.c.b16 %v898, %v897
  %v987 = vpack.c.b16 %v900, %v899
  %v988 = vpack.c.b16 %v902, %v901
  %v989 = vpack.c.b16 %v904, %v903
  %v990 = vpack.c.b16 %v906, %v905
  %v991 = vpack.c.b16 %v908, %v907
  %v992 = vpack.c.b16 %v910, %v909
  %v993 = vpack.c.b16 %v912, %v911
  %v994 = vpack.c.b16 %v914, %v913
  %1075 = vmatprep.subr.bf16.mxu0 0
  %1076 = vmatpush1.bf16.msra.mxu0 %v922
  %1077 = vmatprep.subr.bf16.mxu0 0
  %1078 = vmatpush1.bf16.msra.mxu0 %v921
  %1079 = vmatprep.subr.bf16.mxu0 0
  %1080 = vmatpush1.bf16.msra.mxu0 %v920
  %1081 = vmatprep.subr.bf16.mxu0 0
  %1082 = vmatpush1.bf16.msra.mxu0 %v919
  %1083 = vmatprep.subr.bf16.mxu0 0
  %1084 = vmatpush1.bf16.msra.mxu0 %v918
  %1085 = vmatprep.subr.bf16.mxu0 0
  %1086 = vmatpush1.bf16.msra.mxu0 %v917
  %1087 = vmatprep.subr.bf16.mxu0 0
  %1088 = vmatpush1.bf16.msra.mxu0 %v916
  %1089 = vmatprep.subr.bf16.mxu0 0
  %1090 = vmatpush1.bf16.msra.mxu0 %v915
  %1091 = vmatprep.subr.bf16.mxu0 0
  %1092 = vmatpush2.bf16.msra.mxu0 %v930
  %1093 = vmatprep.subr.bf16.mxu0 0
  %1094 = vmatpush2.bf16.msra.mxu0 %v929
  %1095 = vmatprep.subr.bf16.mxu0 0
  %1096 = vmatpush2.bf16.msra.mxu0 %v928
  %1097 = vmatprep.subr.bf16.mxu0 0
  %1098 = vmatpush2.bf16.msra.mxu0 %v927
  %1099 = vmatprep.subr.bf16.mxu0 0
  %1100 = vmatpush2.bf16.msra.mxu0 %v926
  %1101 = vmatprep.subr.bf16.mxu0 0
  %1102 = vmatpush2.bf16.msra.mxu0 %v925
  %1103 = vmatprep.subr.bf16.mxu0 0
  %1104 = vmatpush2.bf16.msra.mxu0 %v924
  %1105 = vmatprep.subr.bf16.mxu0 0
  %1106 = vmatpush2.bf16.msra.mxu0 %v923
  %1107 = vmatprep.mubr.bf16.mxu0 %v456
  %1108 = vmatmul.mubr.bf16.gmra.mxu0 %v455
  %v1109 = vpop.f32.mrf.mxu0
  %v1110 = vadd.f32 0.0, %v1109
  %v1111 = vpop.f32.mrf.mxu0
  %v1112 = vpop.f32.mrf.mxu0
  %v1113 = vadd.f32 0.0, %v1112
  %v1114 = vpop.f32.mrf.mxu0
  %1115 = vmatprep.mubr.bf16.mxu0 %v466
  %1116 = vmatmul.mubr.bf16.gmra.mxu0 %v465
  %v1117 = vpop.f32.mrf.mxu0
  %v1118 = vadd.f32 0.0, %v1117
  %v1119 = vpop.f32.mrf.mxu0
  %v1120 = vpop.f32.mrf.mxu0
  %v1121 = vadd.f32 0.0, %v1120
  %v1122 = vpop.f32.mrf.mxu0
  %1123 = vmatprep.mubr.bf16.mxu0 %v476
  %1124 = vmatmul.mubr.bf16.gmra.mxu0 %v475
  %v1125 = vpop.f32.mrf.mxu0
  %v1126 = vadd.f32 0.0, %v1125
  %v1127 = vpop.f32.mrf.mxu0
  %v1128 = vpop.f32.mrf.mxu0
  %v1129 = vadd.f32 0.0, %v1128
  %v1130 = vpop.f32.mrf.mxu0
  %1131 = vmatprep.mubr.bf16.mxu0 %v486
  %1132 = vmatmul.mubr.bf16.gmra.mxu0 %v485
  %v1133 = vpop.f32.mrf.mxu0
  %v1134 = vadd.f32 0.0, %v1133
  %v1135 = vpop.f32.mrf.mxu0
  %v1136 = vpop.f32.mrf.mxu0
  %v1137 = vadd.f32 0.0, %v1136
  %v1138 = vpop.f32.mrf.mxu0
  %1139 = vmatprep.mubr.bf16.mxu0 %v496
  %1140 = vmatmul.mubr.bf16.gmra.mxu0 %v495
  %v1141 = vpop.f32.mrf.mxu0
  %v1142 = vadd.f32 0.0, %v1141
  %v1143 = vpop.f32.mrf.mxu0
  %v1144 = vpop.f32.mrf.mxu0
  %v1145 = vadd.f32 0.0, %v1144
  %v1146 = vpop.f32.mrf.mxu0
  %1147 = vmatprep.mubr.bf16.mxu0 %v506
  %1148 = vmatmul.mubr.bf16.gmra.mxu0 %v505
  %v1149 = vpop.f32.mrf.mxu0
  %v1150 = vadd.f32 0.0, %v1149
  %v1151 = vpop.f32.mrf.mxu0
  %v1152 = vpop.f32.mrf.mxu0
  %v1153 = vadd.f32 0.0, %v1152
  %v1154 = vpop.f32.mrf.mxu0
  %1155 = vmatprep.mubr.bf16.mxu0 %v516
  %1156 = vmatmul.mubr.bf16.gmra.mxu0 %v515
  %v1157 = vpop.f32.mrf.mxu0
  %v1158 = vadd.f32 0.0, %v1157
  %v1159 = vpop.f32.mrf.mxu0
  %v1160 = vpop.f32.mrf.mxu0
  %v1161 = vadd.f32 0.0, %v1160
  %v1162 = vpop.f32.mrf.mxu0
  %1163 = vdwg.mxu0
  %1164 = vmatprep.subr.bf16.mxu0 0
  %1165 = vmatpush1.bf16.msra.mxu0 %v938
  %1166 = vmatprep.subr.bf16.mxu0 0
  %1167 = vmatpush1.bf16.msra.mxu0 %v937
  %1168 = vmatprep.subr.bf16.mxu0 0
  %1169 = vmatpush1.bf16.msra.mxu0 %v936
  %1170 = vmatprep.subr.bf16.mxu0 0
  %1171 = vmatpush1.bf16.msra.mxu0 %v935
  %1172 = vmatprep.subr.bf16.mxu0 0
  %1173 = vmatpush1.bf16.msra.mxu0 %v934
  %1174 = vmatprep.subr.bf16.mxu0 0
  %1175 = vmatpush1.bf16.msra.mxu0 %v933
  %1176 = vmatprep.subr.bf16.mxu0 0
  %1177 = vmatpush1.bf16.msra.mxu0 %v932
  %1178 = vmatprep.subr.bf16.mxu0 0
  %1179 = vmatpush1.bf16.msra.mxu0 %v931
  %1180 = vmatprep.subr.bf16.mxu0 0
  %1181 = vmatpush2.bf16.msra.mxu0 %v946
  %1182 = vmatprep.subr.bf16.mxu0 0
  %1183 = vmatpush2.bf16.msra.mxu0 %v945
  %1184 = vmatprep.subr.bf16.mxu0 0
  %1185 = vmatpush2.bf16.msra.mxu0 %v944
  %1186 = vmatprep.subr.bf16.mxu0 0
  %1187 = vmatpush2.bf16.msra.mxu0 %v943
  %1188 = vmatprep.subr.bf16.mxu0 0
  %1189 = vmatpush2.bf16.msra.mxu0 %v942
  %1190 = vmatprep.subr.bf16.mxu0 0
  %1191 = vmatpush2.bf16.msra.mxu0 %v941
  %1192 = vmatprep.subr.bf16.mxu0 0
  %1193 = vmatpush2.bf16.msra.mxu0 %v940
  %1194 = vmatprep.subr.bf16.mxu0 0
  %1195 = vmatpush2.bf16.msra.mxu0 %v939
  %1196 = vmatprep.mubr.bf16.mxu0 %v458
  %1197 = vmatmul.mubr.bf16.gmra.mxu0 %v457
  %v1198 = vpop.f32.mrf.mxu0
  %v1199 = vadd.f32 %v1110, %v1198
  %v1200 = vpop.f32.mrf.mxu0
  %v1201 = vpop.f32.mrf.mxu0
  %v1202 = vadd.f32 %v1113, %v1201
  %v1203 = vpop.f32.mrf.mxu0
  %1204 = vmatprep.mubr.bf16.mxu0 %v468
  %1205 = vmatmul.mubr.bf16.gmra.mxu0 %v467
  %v1206 = vpop.f32.mrf.mxu0
  %v1207 = vadd.f32 %v1118, %v1206
  %v1208 = vpop.f32.mrf.mxu0
  %v1209 = vpop.f32.mrf.mxu0
  %v1210 = vadd.f32 %v1121, %v1209
  %v1211 = vpop.f32.mrf.mxu0
  %1212 = vmatprep.mubr.bf16.mxu0 %v478
  %1213 = vmatmul.mubr.bf16.gmra.mxu0 %v477
  %v1214 = vpop.f32.mrf.mxu0
  %v1215 = vadd.f32 %v1126, %v1214
  %v1216 = vpop.f32.mrf.mxu0
  %v1217 = vpop.f32.mrf.mxu0
  %v1218 = vadd.f32 %v1129, %v1217
  %v1219 = vpop.f32.mrf.mxu0
  %1220 = vmatprep.mubr.bf16.mxu0 %v488
  %1221 = vmatmul.mubr.bf16.gmra.mxu0 %v487
  %v1222 = vpop.f32.mrf.mxu0
  %v1223 = vadd.f32 %v1134, %v1222
  %v1224 = vpop.f32.mrf.mxu0
  %v1225 = vpop.f32.mrf.mxu0
  %v1226 = vadd.f32 %v1137, %v1225
  %v1227 = vpop.f32.mrf.mxu0
  %1228 = vmatprep.mubr.bf16.mxu0 %v498
  %1229 = vmatmul.mubr.bf16.gmra.mxu0 %v497
  %v1230 = vpop.f32.mrf.mxu0
  %v1231 = vadd.f32 %v1142, %v1230
  %v1232 = vpop.f32.mrf.mxu0
  %v1233 = vpop.f32.mrf.mxu0
  %v1234 = vadd.f32 %v1145, %v1233
  %v1235 = vpop.f32.mrf.mxu0
  %1236 = vmatprep.mubr.bf16.mxu0 %v508
  %1237 = vmatmul.mubr.bf16.gmra.mxu0 %v507
  %v1238 = vpop.f32.mrf.mxu0
  %v1239 = vadd.f32 %v1150, %v1238
  %v1240 = vpop.f32.mrf.mxu0
  %v1241 = vpop.f32.mrf.mxu0
  %v1242 = vadd.f32 %v1153, %v1241
  %v1243 = vpop.f32.mrf.mxu0
  %1244 = vmatprep.mubr.bf16.mxu0 %v518
  %1245 = vmatmul.mubr.bf16.gmra.mxu0 %v517
  %v1246 = vpop.f32.mrf.mxu0
  %v1247 = vadd.f32 %v1158, %v1246
  %v1248 = vpop.f32.mrf.mxu0
  %v1249 = vpop.f32.mrf.mxu0
  %v1250 = vadd.f32 %v1161, %v1249
  %v1251 = vpop.f32.mrf.mxu0
  %1252 = vdwg.mxu0
  %1253 = vmatprep.subr.bf16.mxu0 0
  %1254 = vmatpush1.bf16.msra.mxu0 %v954
  %1255 = vmatprep.subr.bf16.mxu0 0
  %1256 = vmatpush1.bf16.msra.mxu0 %v953
  %1257 = vmatprep.subr.bf16.mxu0 0
  %1258 = vmatpush1.bf16.msra.mxu0 %v952
  %1259 = vmatprep.subr.bf16.mxu0 0
  %1260 = vmatpush1.bf16.msra.mxu0 %v951
  %1261 = vmatprep.subr.bf16.mxu0 0
  %1262 = vmatpush1.bf16.msra.mxu0 %v950
  %1263 = vmatprep.subr.bf16.mxu0 0
  %1264 = vmatpush1.bf16.msra.mxu0 %v949
  %1265 = vmatprep.subr.bf16.mxu0 0
  %1266 = vmatpush1.bf16.msra.mxu0 %v948
  %1267 = vmatprep.subr.bf16.mxu0 0
  %1268 = vmatpush1.bf16.msra.mxu0 %v947
  %1269 = vmatprep.subr.bf16.mxu0 0
  %1270 = vmatpush2.bf16.msra.mxu0 %v962
  %1271 = vmatprep.subr.bf16.mxu0 0
  %1272 = vmatpush2.bf16.msra.mxu0 %v961
  %1273 = vmatprep.subr.bf16.mxu0 0
  %1274 = vmatpush2.bf16.msra.mxu0 %v960
  %1275 = vmatprep.subr.bf16.mxu0 0
  %1276 = vmatpush2.bf16.msra.mxu0 %v959
  %1277 = vmatprep.subr.bf16.mxu0 0
  %1278 = vmatpush2.bf16.msra.mxu0 %v958
  %1279 = vmatprep.subr.bf16.mxu0 0
  %1280 = vmatpush2.bf16.msra.mxu0 %v957
  %1281 = vmatprep.subr.bf16.mxu0 0
  %1282 = vmatpush2.bf16.msra.mxu0 %v956
  %1283 = vmatprep.subr.bf16.mxu0 0
  %1284 = vmatpush2.bf16.msra.mxu0 %v955
  %1285 = vmatprep.mubr.bf16.mxu0 %v460
  %1286 = vmatmul.mubr.bf16.gmra.mxu0 %v459
  %v1287 = vpop.f32.mrf.mxu0
  %v1288 = vadd.f32 %v1199, %v1287
  %v1289 = vpop.f32.mrf.mxu0
  %v1290 = vpop.f32.mrf.mxu0
  %v1291 = vadd.f32 %v1202, %v1290
  %v1292 = vpop.f32.mrf.mxu0
  %1293 = vmatprep.mubr.bf16.mxu0 %v470
  %1294 = vmatmul.mubr.bf16.gmra.mxu0 %v469
  %v1295 = vpop.f32.mrf.mxu0
  %v1296 = vadd.f32 %v1207, %v1295
  %v1297 = vpop.f32.mrf.mxu0
  %v1298 = vpop.f32.mrf.mxu0
  %v1299 = vadd.f32 %v1210, %v1298
  %v1300 = vpop.f32.mrf.mxu0
  %1301 = vmatprep.mubr.bf16.mxu0 %v480
  %1302 = vmatmul.mubr.bf16.gmra.mxu0 %v479
  %v1303 = vpop.f32.mrf.mxu0
  %v1304 = vadd.f32 %v1215, %v1303
  %v1305 = vpop.f32.mrf.mxu0
  %v1306 = vpop.f32.mrf.mxu0
  %v1307 = vadd.f32 %v1218, %v1306
  %v1308 = vpop.f32.mrf.mxu0
  %1309 = vmatprep.mubr.bf16.mxu0 %v490
  %1310 = vmatmul.mubr.bf16.gmra.mxu0 %v489
  %v1311 = vpop.f32.mrf.mxu0
  %v1312 = vadd.f32 %v1223, %v1311
  %v1313 = vpop.f32.mrf.mxu0
  %v1314 = vpop.f32.mrf.mxu0
  %v1315 = vadd.f32 %v1226, %v1314
  %v1316 = vpop.f32.mrf.mxu0
  %1317 = vmatprep.mubr.bf16.mxu0 %v500
  %1318 = vmatmul.mubr.bf16.gmra.mxu0 %v499
  %v1319 = vpop.f32.mrf.mxu0
  %v1320 = vadd.f32 %v1231, %v1319
  %v1321 = vpop.f32.mrf.mxu0
  %v1322 = vpop.f32.mrf.mxu0
  %v1323 = vadd.f32 %v1234, %v1322
  %v1324 = vpop.f32.mrf.mxu0
  %1325 = vmatprep.mubr.bf16.mxu0 %v510
  %1326 = vmatmul.mubr.bf16.gmra.mxu0 %v509
  %v1327 = vpop.f32.mrf.mxu0
  %v1328 = vadd.f32 %v1239, %v1327
  %v1329 = vpop.f32.mrf.mxu0
  %v1330 = vpop.f32.mrf.mxu0
  %v1331 = vadd.f32 %v1242, %v1330
  %v1332 = vpop.f32.mrf.mxu0
  %1333 = vmatprep.mubr.bf16.mxu0 %v520
  %1334 = vmatmul.mubr.bf16.gmra.mxu0 %v519
  %v1335 = vpop.f32.mrf.mxu0
  %v1336 = vadd.f32 %v1247, %v1335
  %v1337 = vpop.f32.mrf.mxu0
  %v1338 = vpop.f32.mrf.mxu0
  %v1339 = vadd.f32 %v1250, %v1338
  %v1340 = vpop.f32.mrf.mxu0
  %1341 = vdwg.mxu0
  %1342 = vmatprep.subr.bf16.mxu0 0
  %1343 = vmatpush1.bf16.msra.mxu0 %v970
  %1344 = vmatprep.subr.bf16.mxu0 0
  %1345 = vmatpush1.bf16.msra.mxu0 %v969
  %1346 = vmatprep.subr.bf16.mxu0 0
  %1347 = vmatpush1.bf16.msra.mxu0 %v968
  %1348 = vmatprep.subr.bf16.mxu0 0
  %1349 = vmatpush1.bf16.msra.mxu0 %v967
  %1350 = vmatprep.subr.bf16.mxu0 0
  %1351 = vmatpush1.bf16.msra.mxu0 %v966
  %1352 = vmatprep.subr.bf16.mxu0 0
  %1353 = vmatpush1.bf16.msra.mxu0 %v965
  %1354 = vmatprep.subr.bf16.mxu0 0
  %1355 = vmatpush1.bf16.msra.mxu0 %v964
  %1356 = vmatprep.subr.bf16.mxu0 0
  %1357 = vmatpush1.bf16.msra.mxu0 %v963
  %1358 = vmatprep.subr.bf16.mxu0 0
  %1359 = vmatpush2.bf16.msra.mxu0 %v978
  %1360 = vmatprep.subr.bf16.mxu0 0
  %1361 = vmatpush2.bf16.msra.mxu0 %v977
  %1362 = vmatprep.subr.bf16.mxu0 0
  %1363 = vmatpush2.bf16.msra.mxu0 %v976
  %1364 = vmatprep.subr.bf16.mxu0 0
  %1365 = vmatpush2.bf16.msra.mxu0 %v975
  %1366 = vmatprep.subr.bf16.mxu0 0
  %1367 = vmatpush2.bf16.msra.mxu0 %v974
  %1368 = vmatprep.subr.bf16.mxu0 0
  %1369 = vmatpush2.bf16.msra.mxu0 %v973
  %1370 = vmatprep.subr.bf16.mxu0 0
  %1371 = vmatpush2.bf16.msra.mxu0 %v972
  %1372 = vmatprep.subr.bf16.mxu0 0
  %1373 = vmatpush2.bf16.msra.mxu0 %v971
  %1374 = vmatprep.mubr.bf16.mxu0 %v462
  %1375 = vmatmul.mubr.bf16.gmra.mxu0 %v461
  %v1376 = vpop.f32.mrf.mxu0
  %v1377 = vadd.f32 %v1288, %v1376
  %v1378 = vpop.f32.mrf.mxu0
  %v1379 = vpop.f32.mrf.mxu0
  %v1380 = vadd.f32 %v1291, %v1379
  %v1381 = vpop.f32.mrf.mxu0
  %1382 = vmatprep.mubr.bf16.mxu0 %v472
  %1383 = vmatmul.mubr.bf16.gmra.mxu0 %v471
  %v1384 = vpop.f32.mrf.mxu0
  %v1385 = vadd.f32 %v1296, %v1384
  %v1386 = vpop.f32.mrf.mxu0
  %v1387 = vpop.f32.mrf.mxu0
  %v1388 = vadd.f32 %v1299, %v1387
  %v1389 = vpop.f32.mrf.mxu0
  %1390 = vmatprep.mubr.bf16.mxu0 %v482
  %1391 = vmatmul.mubr.bf16.gmra.mxu0 %v481
  %v1392 = vpop.f32.mrf.mxu0
  %v1393 = vadd.f32 %v1304, %v1392
  %v1394 = vpop.f32.mrf.mxu0
  %v1395 = vpop.f32.mrf.mxu0
  %v1396 = vadd.f32 %v1307, %v1395
  %v1397 = vpop.f32.mrf.mxu0
  %1398 = vmatprep.mubr.bf16.mxu0 %v492
  %1399 = vmatmul.mubr.bf16.gmra.mxu0 %v491
  %v1400 = vpop.f32.mrf.mxu0
  %v1401 = vadd.f32 %v1312, %v1400
  %v1402 = vpop.f32.mrf.mxu0
  %v1403 = vpop.f32.mrf.mxu0
  %v1404 = vadd.f32 %v1315, %v1403
  %v1405 = vpop.f32.mrf.mxu0
  %1406 = vmatprep.mubr.bf16.mxu0 %v502
  %1407 = vmatmul.mubr.bf16.gmra.mxu0 %v501
  %v1408 = vpop.f32.mrf.mxu0
  %v1409 = vadd.f32 %v1320, %v1408
  %v1410 = vpop.f32.mrf.mxu0
  %v1411 = vpop.f32.mrf.mxu0
  %v1412 = vadd.f32 %v1323, %v1411
  %v1413 = vpop.f32.mrf.mxu0
  %1414 = vmatprep.mubr.bf16.mxu0 %v512
  %1415 = vmatmul.mubr.bf16.gmra.mxu0 %v511
  %v1416 = vpop.f32.mrf.mxu0
  %v1417 = vadd.f32 %v1328, %v1416
  %v1418 = vpop.f32.mrf.mxu0
  %v1419 = vpop.f32.mrf.mxu0
  %v1420 = vadd.f32 %v1331, %v1419
  %v1421 = vpop.f32.mrf.mxu0
  %1422 = vmatprep.mubr.bf16.mxu0 %v522
  %1423 = vmatmul.mubr.bf16.gmra.mxu0 %v521
  %v1424 = vpop.f32.mrf.mxu0
  %v1425 = vadd.f32 %v1336, %v1424
  %v1426 = vpop.f32.mrf.mxu0
  %v1427 = vpop.f32.mrf.mxu0
  %v1428 = vadd.f32 %v1339, %v1427
  %v1429 = vpop.f32.mrf.mxu0
  %1430 = vdwg.mxu0
  %1431 = vmatprep.subr.bf16.mxu0 0
  %1432 = vmatpush1.bf16.msra.mxu0 %v986
  %1433 = vmatprep.subr.bf16.mxu0 0
  %1434 = vmatpush1.bf16.msra.mxu0 %v985
  %1435 = vmatprep.subr.bf16.mxu0 0
  %1436 = vmatpush1.bf16.msra.mxu0 %v984
  %1437 = vmatprep.subr.bf16.mxu0 0
  %1438 = vmatpush1.bf16.msra.mxu0 %v983
  %1439 = vmatprep.subr.bf16.mxu0 0
  %1440 = vmatpush1.bf16.msra.mxu0 %v982
  %1441 = vmatprep.subr.bf16.mxu0 0
  %1442 = vmatpush1.bf16.msra.mxu0 %v981
  %1443 = vmatprep.subr.bf16.mxu0 0
  %1444 = vmatpush1.bf16.msra.mxu0 %v980
  %1445 = vmatprep.subr.bf16.mxu0 0
  %1446 = vmatpush1.bf16.msra.mxu0 %v979
  %1447 = vmatprep.subr.bf16.mxu0 0
  %1448 = vmatpush2.bf16.msra.mxu0 %v994
  %1449 = vmatprep.subr.bf16.mxu0 0
  %1450 = vmatpush2.bf16.msra.mxu0 %v993
  %1451 = vmatprep.subr.bf16.mxu0 0
  %1452 = vmatpush2.bf16.msra.mxu0 %v992
  %1453 = vmatprep.subr.bf16.mxu0 0
  %1454 = vmatpush2.bf16.msra.mxu0 %v991
  %1455 = vmatprep.subr.bf16.mxu0 0
  %1456 = vmatpush2.bf16.msra.mxu0 %v990
  %1457 = vmatprep.subr.bf16.mxu0 0
  %1458 = vmatpush2.bf16.msra.mxu0 %v989
  %1459 = vmatprep.subr.bf16.mxu0 0
  %1460 = vmatpush2.bf16.msra.mxu0 %v988
  %1461 = vmatprep.subr.bf16.mxu0 0
  %1462 = vmatpush2.bf16.msra.mxu0 %v987
  %1463 = vmatprep.mubr.bf16.mxu0 %v464
  %1464 = vmatmul.mubr.bf16.gmra.mxu0 %v463
  %v1465 = vpop.f32.mrf.mxu0
  %v1466 = vadd.f32 %v1377, %v1465
  %v1467 = vpop.f32.mrf.mxu0
  %v1468 = vpop.f32.mrf.mxu0
  %v1469 = vadd.f32 %v1380, %v1468
  %v1470 = vpop.f32.mrf.mxu0
  %1471 = vmatprep.mubr.bf16.mxu0 %v474
  %1472 = vmatmul.mubr.bf16.gmra.mxu0 %v473
  %v1473 = vpop.f32.mrf.mxu0
  %v1474 = vadd.f32 %v1385, %v1473
  %v1475 = vpop.f32.mrf.mxu0
  %v1476 = vpop.f32.mrf.mxu0
  %v1477 = vadd.f32 %v1388, %v1476
  %v1478 = vpop.f32.mrf.mxu0
  %1479 = vmatprep.mubr.bf16.mxu0 %v484
  %1480 = vmatmul.mubr.bf16.gmra.mxu0 %v483
  %v1481 = vpop.f32.mrf.mxu0
  %v1482 = vadd.f32 %v1393, %v1481
  %v1483 = vpop.f32.mrf.mxu0
  %v1484 = vpop.f32.mrf.mxu0
  %v1485 = vadd.f32 %v1396, %v1484
  %v1486 = vpop.f32.mrf.mxu0
  %1487 = vmatprep.mubr.bf16.mxu0 %v494
  %1488 = vmatmul.mubr.bf16.gmra.mxu0 %v493
  %v1489 = vpop.f32.mrf.mxu0
  %v1490 = vadd.f32 %v1401, %v1489
  %v1491 = vpop.f32.mrf.mxu0
  %v1492 = vpop.f32.mrf.mxu0
  %v1493 = vadd.f32 %v1404, %v1492
  %v1494 = vpop.f32.mrf.mxu0
  %1495 = vmatprep.mubr.bf16.mxu0 %v504
  %1496 = vmatmul.mubr.bf16.gmra.mxu0 %v503
  %v1497 = vpop.f32.mrf.mxu0
  %v1498 = vadd.f32 %v1409, %v1497
  %v1499 = vpop.f32.mrf.mxu0
  %v1500 = vpop.f32.mrf.mxu0
  %v1501 = vadd.f32 %v1412, %v1500
  %v1502 = vpop.f32.mrf.mxu0
  %1503 = vmatprep.mubr.bf16.mxu0 %v514
  %1504 = vmatmul.mubr.bf16.gmra.mxu0 %v513
  %v1505 = vpop.f32.mrf.mxu0
  %v1506 = vadd.f32 %v1417, %v1505
  %v1507 = vpop.f32.mrf.mxu0
  %v1508 = vpop.f32.mrf.mxu0
  %v1509 = vadd.f32 %v1420, %v1508
  %v1510 = vpop.f32.mrf.mxu0
  %1511 = vmatprep.mubr.bf16.mxu0 %v524
  %1512 = vmatmul.mubr.bf16.gmra.mxu0 %v523
  %v1513 = vpop.f32.mrf.mxu0
  %v1514 = vadd.f32 %v1425, %v1513
  %v1515 = vpop.f32.mrf.mxu0
  %v1516 = vpop.f32.mrf.mxu0
  %v1517 = vadd.f32 %v1428, %v1516
  %v1518 = vpop.f32.mrf.mxu0
  %1519 = vdwg.mxu0
  %v1520 = vmax.f32 %v1466, 0.0
  %v1521 = vmax.f32 %v1469, 0.0
  %v1522 = vmax.f32 %v1474, 0.0
  %v1523 = vmax.f32 %v1477, 0.0
  %v1524 = vmax.f32 %v1482, 0.0
  %v1525 = vmax.f32 %v1485, 0.0
  %v1526 = vmax.f32 %v1490, 0.0
  %v1527 = vmax.f32 %v1493, 0.0
  %v1528 = vmax.f32 %v1498, 0.0
  %v1529 = vmax.f32 %v1501, 0.0
  %v1530 = vmax.f32 %v1506, 0.0
  %v1531 = vmax.f32 %v1509, 0.0
  %v1532 = vmax.f32 %v1514, 0.0
  %v1533 = vmax.f32 %v1517, 0.0
  %v1534 = vpack.c.bf16 %v1521, %v1520
  %v1535 = vpack.c.bf16 %v1523, %v1522
  %v1536 = vpack.c.bf16 %v1525, %v1524
  %v1537 = vpack.c.bf16 %v1527, %v1526
  %v1538 = vpack.c.bf16 %v1529, %v1528
  %v1539 = vpack.c.bf16 %v1531, %v1530
  %v1540 = vpack.c.bf16 %v1533, %v1532
  %v1541 = vld [vmem:[%s2] sm:$0xf]
  %v1542 = vld [vmem:[%s2 + $0x4] sm:$0xf]
  %v1543 = vld [vmem:[%s2 + $0x8] sm:$0xf]
  %v1544 = vld [vmem:[%s2 + $0xc] sm:$0xf]
  %v1545 = vld [vmem:[%s2 + $0x10] sm:$0xf]
  %v1546 = vld [vmem:[%s2 + $0x14] sm:$0xf]
  %v1547 = vld [vmem:[%s2 + $0x18] sm:$0xf]
  %v1548 = vld [vmem:[%s2 + $0x1c] sm:$0xf]
  %v1549 = vld [vmem:[%s2 + $0x20] sm:$0xf]
  %v1550 = vld [vmem:[%s2 + $0x24] sm:$0xf]
  %v1551 = vld [vmem:[%s2 + $0x28] sm:$0xf]
  %v1552 = vld [vmem:[%s2 + $0x2c] sm:$0xf]
  %v1553 = vld [vmem:[%s2 + $0x30] sm:$0xf]
  %v1554 = vld [vmem:[%s2 + $0x34] sm:$0xf]
  %v1555 = vld [vmem:[%s2 + $0x38] sm:$0xf]
  %v1556 = vld [vmem:[%s2 + $0x3c] sm:$0xf]
  %v1573 = vunpack.c.l.b16 %v1541
  %v1574 = vunpack.c.l.b16 %v1542
  %v1575 = vunpack.c.l.b16 %v1543
  %v1576 = vunpack.c.l.b16 %v1544
  %v1577 = vunpack.c.l.b16 %v1545
  %v1578 = vunpack.c.l.b16 %v1546
  %v1579 = vunpack.c.l.b16 %v1547
  %v1580 = vunpack.c.l.b16 %v1548
  %v1581 = vunpack.c.l.b16 %v1549
  %v1582 = vunpack.c.l.b16 %v1550
  %v1583 = vunpack.c.l.b16 %v1551
  %v1584 = vunpack.c.l.b16 %v1552
  %v1585 = vunpack.c.l.b16 %v1553
  %v1586 = vunpack.c.l.b16 %v1554
  %v1587 = vunpack.c.l.b16 %v1555
  %v1588 = vunpack.c.l.b16 %v1556
  %v1589 = vpack.c.b16 %v1574, %v1573
  %v1590 = vpack.c.b16 %v1576, %v1575
  %v1591 = vpack.c.b16 %v1578, %v1577
  %v1592 = vpack.c.b16 %v1580, %v1579
  %v1593 = vpack.c.b16 %v1582, %v1581
  %v1594 = vpack.c.b16 %v1584, %v1583
  %v1595 = vpack.c.b16 %v1586, %v1585
  %v1596 = vpack.c.b16 %v1588, %v1587
  %1605 = vmatprep.subr.bf16.mxu0 0
  %1606 = vmatpush1.bf16.msra.mxu0 %v1596
  %1607 = vmatprep.subr.bf16.mxu0 0
  %1608 = vmatpush1.bf16.msra.mxu0 %v1595
  %1609 = vmatprep.subr.bf16.mxu0 0
  %1610 = vmatpush1.bf16.msra.mxu0 %v1594
  %1611 = vmatprep.subr.bf16.mxu0 0
  %1612 = vmatpush1.bf16.msra.mxu0 %v1593
  %1613 = vmatprep.subr.bf16.mxu0 0
  %1614 = vmatpush1.bf16.msra.mxu0 %v1592
  %1615 = vmatprep.subr.bf16.mxu0 0
  %1616 = vmatpush1.bf16.msra.mxu0 %v1591
  %1617 = vmatprep.subr.bf16.mxu0 0
  %1618 = vmatpush1.bf16.msra.mxu0 %v1590
  %1619 = vmatprep.subr.bf16.mxu0 0
  %1620 = vmatpush1.bf16.msra.mxu0 %v1589
  %1621 = vmatprep.subr.bf16.mxu0 0
  %1622 = vmatpush2.bf16.msra.mxu0 0
  %1623 = vmatprep.subr.bf16.mxu0 0
  %1624 = vmatpush2.bf16.msra.mxu0 0
  %1625 = vmatprep.subr.bf16.mxu0 0
  %1626 = vmatpush2.bf16.msra.mxu0 0
  %1627 = vmatprep.subr.bf16.mxu0 0
  %1628 = vmatpush2.bf16.msra.mxu0 0
  %1629 = vmatprep.subr.bf16.mxu0 0
  %1630 = vmatpush2.bf16.msra.mxu0 0
  %1631 = vmatprep.subr.bf16.mxu0 0
  %1632 = vmatpush2.bf16.msra.mxu0 0
  %1633 = vmatprep.subr.bf16.mxu0 0
  %1634 = vmatpush2.bf16.msra.mxu0 0
  %1635 = vmatprep.subr.bf16.mxu0 0
  %1636 = vmatpush2.bf16.msra.mxu0 0
  %1637 = vmatprep.mubr.bf16.mxu0 0
  %1638 = vmatmul.mubr.bf16.gmra.mxu0 %v1534
  %v1639 = vpop.f32.mrf.mxu0
  %v1640 = vadd.f32 0.0, %v1639
  %v1641 = vpop.f32.mrf.mxu0
  %v1642 = vpop.f32.mrf.mxu0
  %v1643 = vadd.f32 0.0, %v1642
  %v1644 = vpop.f32.mrf.mxu0
  %1645 = vmatprep.mubr.bf16.mxu0 0
  %1646 = vmatmul.mubr.bf16.gmra.mxu0 %v1535
  %v1647 = vpop.f32.mrf.mxu0
  %v1648 = vadd.f32 0.0, %v1647
  %v1649 = vpop.f32.mrf.mxu0
  %v1650 = vpop.f32.mrf.mxu0
  %v1651 = vadd.f32 0.0, %v1650
  %v1652 = vpop.f32.mrf.mxu0
  %1653 = vmatprep.mubr.bf16.mxu0 0
  %1654 = vmatmul.mubr.bf16.gmra.mxu0 %v1536
  %v1655 = vpop.f32.mrf.mxu0
  %v1656 = vadd.f32 0.0, %v1655
  %v1657 = vpop.f32.mrf.mxu0
  %v1658 = vpop.f32.mrf.mxu0
  %v1659 = vadd.f32 0.0, %v1658
  %v1660 = vpop.f32.mrf.mxu0
  %1661 = vmatprep.mubr.bf16.mxu0 0
  %1662 = vmatmul.mubr.bf16.gmra.mxu0 %v1537
  %v1663 = vpop.f32.mrf.mxu0
  %v1664 = vadd.f32 0.0, %v1663
  %v1665 = vpop.f32.mrf.mxu0
  %v1666 = vpop.f32.mrf.mxu0
  %v1667 = vadd.f32 0.0, %v1666
  %v1668 = vpop.f32.mrf.mxu0
  %1669 = vmatprep.mubr.bf16.mxu0 0
  %1670 = vmatmul.mubr.bf16.gmra.mxu0 %v1538
  %v1671 = vpop.f32.mrf.mxu0
  %v1672 = vadd.f32 0.0, %v1671
  %v1673 = vpop.f32.mrf.mxu0
  %v1674 = vpop.f32.mrf.mxu0
  %v1675 = vadd.f32 0.0, %v1674
  %v1676 = vpop.f32.mrf.mxu0
  %1677 = vmatprep.mubr.bf16.mxu0 0
  %1678 = vmatmul.mubr.bf16.gmra.mxu0 %v1539
  %v1679 = vpop.f32.mrf.mxu0
  %v1680 = vadd.f32 0.0, %v1679
  %v1681 = vpop.f32.mrf.mxu0
  %v1682 = vpop.f32.mrf.mxu0
  %v1683 = vadd.f32 0.0, %v1682
  %v1684 = vpop.f32.mrf.mxu0
  %1685 = vmatprep.mubr.bf16.mxu0 0
  %1686 = vmatmul.mubr.bf16.gmra.mxu0 %v1540
  %v1687 = vpop.f32.mrf.mxu0
  %v1688 = vadd.f32 0.0, %v1687
  %v1689 = vpop.f32.mrf.mxu0
  %v1690 = vpop.f32.mrf.mxu0
  %v1691 = vadd.f32 0.0, %v1690
  %v1692 = vpop.f32.mrf.mxu0
  %1693 = vdwg.mxu0
  %1694 = vst [vmem:[%s3] sm:$0xff] %v1640
  %1695 = vst [vmem:[%s3 + $0x8] sm:$0xff] %v1643
  %1696 = vst [vmem:[%s3 + $0x10] sm:$0xff] %v1648
  %1697 = vst [vmem:[%s3 + $0x18] sm:$0xff] %v1651
  %1698 = vst [vmem:[%s3 + $0x20] sm:$0xff] %v1656
  %1699 = vst [vmem:[%s3 + $0x28] sm:$0xff] %v1659
  %1700 = vst [vmem:[%s3 + $0x30] sm:$0xff] %v1664
  %1701 = vst [vmem:[%s3 + $0x38] sm:$0xff] %v1667
  %1702 = vst [vmem:[%s3 + $0x40] sm:$0xff] %v1672
  %1703 = vst [vmem:[%s3 + $0x48] sm:$0xff] %v1675
  %1704 = vst [vmem:[%s3 + $0x50] sm:$0xff] %v1680
  %1705 = vst [vmem:[%s3 + $0x58] sm:$0xff] %v1683
  %1706 = vst [vmem:[%s3 + $0x60] sm:$0xff] %v1688
  %1707 = vst [vmem:[%s3 + $0x68] sm:$0xff] %v1691
  // Predicated region
  $region14: #{_lambda_.9} parent=0 // pred_check
    _
  $region15: #{_lambda_.9} parent=0 // pred_check_branch
    %1709 = sbr.rel (0) target = $region17
  $region16: #{_lambda_.9} parent=0 // pred_region
    _
  $region17: #{_lambda_.9} parent=0 // pred_fallthru
    _
  // Predicated region
  $region18: #{_lambda_.9} parent=0 // pred_check
    _
  $region19: #{_lambda_.9} parent=0 // pred_check_branch
    %1711 = sbr.rel (0) target = $region21
  $region20: #{_lambda_.9} parent=0 // pred_region
    _
  $region21: #{_lambda_.9} parent=0 // pred_fallthru
    _

// kernel: _lambda_.10
$region0: #{_lambda_.10}
  #allocation0 [shape = 'u32[]', space=smem, size = 0x4, offset = 0x4, fixed_abs, tag = 'smem constant byte address 0x4 - core index']
  #allocation1 [shape = 'u32[144,128]{1,0:T(1,128)}', space=vmem, size = 0x12000, scoped, tag = 'internal scratch']
  %s0 = inlined_call_operand.vmem [shape: bf16[32,256], index: 0, kind: input, shape index: {}]
  %s1 = inlined_call_operand.vmem [shape: bf16[256,128], index: 1, kind: input, shape index: {}]
  %s2 = inlined_call_operand.vmem [shape: bf16[128,128], index: 2, kind: input, shape index: {}]
  %s3 = inlined_call_operand.vmem [shape: f32[32,128], index: 3, kind: output, shape index: {}]
  %s4 = sld [smem:[#allocation0]]
  $region22: #{_lambda_.10} parent=0
    _
  %s6 = ssub.s32 1, %s4
  %s7 = scalar_select 0, %s6, %s4
  // Predicated region
  $region2: #{_lambda_.10} parent=0 // pred_check
    _
  $region3: #{_lambda_.10} parent=0 // pred_check_branch
    %9 = sbr.rel (0) target = $region5
  $region4: #{_lambda_.10} parent=0 // pred_region
    _
  $region5: #{_lambda_.10} parent=0 // pred_fallthru
    _
  // Predicated region
  $region6: #{_lambda_.10} parent=0 // pred_check
    _
  $region7: #{_lambda_.10} parent=0 // pred_check_branch
    %11 = sbr.rel (0) target = $region9
  $region8: #{_lambda_.10} parent=0 // pred_region
    _
  $region9: #{_lambda_.10} parent=0 // pred_fallthru
    _
  // Predicated region
  $region10: #{_lambda_.10} parent=0 // pred_check
    _
  $region11: #{_lambda_.10} parent=0 // pred_check_branch
    %13 = sbr.rel (0) target = $region13
  $region12: #{_lambda_.10} parent=0 // pred_region
    _
  $region13: #{_lambda_.10} parent=0 // pred_fallthru
    _
  %v15 = vld [vmem:[%s0] sm:$0xff]
  %v16 = vld [vmem:[%s0 + $0x8] sm:$0xff]
  %v17 = vld [vmem:[%s0 + $0x10] sm:$0xff]
  %v18 = vld [vmem:[%s0 + $0x18] sm:$0xff]
  %v19 = vld [vmem:[%s1] sm:$0xf]
  %v20 = vld [vmem:[%s1 + $0x4] sm:$0xf]
  %v21 = vld [vmem:[%s1 + $0x8] sm:$0xf]
  %v22 = vld [vmem:[%s1 + $0xc] sm:$0xf]
  %v23 = vld [vmem:[%s1 + $0x10] sm:$0xf]
  %v24 = vld [vmem:[%s1 + $0x14] sm:$0xf]
  %v25 = vld [vmem:[%s1 + $0x18] sm:$0xf]
  %v26 = vld [vmem:[%s1 + $0x1c] sm:$0xf]
  %v27 = vld [vmem:[%s1 + $0x20] sm:$0xf]
  %v28 = vld [vmem:[%s1 + $0x24] sm:$0xf]
  %v29 = vld [vmem:[%s1 + $0x28] sm:$0xf]
  %v30 = vld [vmem:[%s1 + $0x2c] sm:$0xf]
  %v31 = vld [vmem:[%s1 + $0x30] sm:$0xf]
  %v32 = vld [vmem:[%s1 + $0x34] sm:$0xf]
  %v33 = vld [vmem:[%s1 + $0x38] sm:$0xf]
  %v34 = vld [vmem:[%s1 + $0x3c] sm:$0xf]
  %v35 = vld [vmem:[%s1 + $0x40] sm:$0xf]
  %v36 = vld [vmem:[%s1 + $0x44] sm:$0xf]
  %v37 = vld [vmem:[%s1 + $0x48] sm:$0xf]
  %v38 = vld [vmem:[%s1 + $0x4c] sm:$0xf]
  %v39 = vld [vmem:[%s1 + $0x50] sm:$0xf]
  %v40 = vld [vmem:[%s1 + $0x54] sm:$0xf]
  %v41 = vld [vmem:[%s1 + $0x58] sm:$0xf]
  %v42 = vld [vmem:[%s1 + $0x5c] sm:$0xf]
  %v43 = vld [vmem:[%s1 + $0x60] sm:$0xf]
  %v44 = vld [vmem:[%s1 + $0x64] sm:$0xf]
  %v45 = vld [vmem:[%s1 + $0x68] sm:$0xf]
  %v46 = vld [vmem:[%s1 + $0x6c] sm:$0xf]
  %v47 = vld [vmem:[%s1 + $0x70] sm:$0xf]
  %v48 = vld [vmem:[%s1 + $0x74] sm:$0xf]
  %v49 = vld [vmem:[%s1 + $0x78] sm:$0xf]
  %v50 = vld [vmem:[%s1 + $0x7c] sm:$0xf]
  %v55 = vunpack.c.l.b16 %v15
  %v56 = vunpack.c.h.b16 %v15
  %v57 = vunpack.c.l.b16 %v16
  %v58 = vunpack.c.h.b16 %v16
  %v59 = vunpack.c.l.b16 %v17
  %v60 = vunpack.c.h.b16 %v17
  %v61 = vunpack.c.l.b16 %v18
  %v62 = vunpack.c.h.b16 %v18
  %v63 = vpack.c.b16 %v57, %v55
  %v64 = vpack.c.b16 %v58, %v56
  %v65 = vpack.c.b16 %v61, %v59
  %v66 = vpack.c.b16 %v62, %v60
  %v103 = vunpack.c.l.b16 %v19
  %v104 = vunpack.c.l.b16 %v20
  %v105 = vunpack.c.l.b16 %v21
  %v106 = vunpack.c.l.b16 %v22
  %v107 = vunpack.c.l.b16 %v23
  %v108 = vunpack.c.l.b16 %v24
  %v109 = vunpack.c.l.b16 %v25
  %v110 = vunpack.c.l.b16 %v26
  %v111 = vunpack.c.l.b16 %v27
  %v112 = vunpack.c.l.b16 %v28
  %v113 = vunpack.c.l.b16 %v29
  %v114 = vunpack.c.l.b16 %v30
  %v115 = vunpack.c.l.b16 %v31
  %v116 = vunpack.c.l.b16 %v32
  %v117 = vunpack.c.l.b16 %v33
  %v118 = vunpack.c.l.b16 %v34
  %v119 = vunpack.c.l.b16 %v35
  %v120 = vunpack.c.l.b16 %v36
  %v121 = vunpack.c.l.b16 %v37
  %v122 = vunpack.c.l.b16 %v38
  %v123 = vunpack.c.l.b16 %v39
  %v124 = vunpack.c.l.b16 %v40
  %v125 = vunpack.c.l.b16 %v41
  %v126 = vunpack.c.l.b16 %v42
  %v127 = vunpack.c.l.b16 %v43
  %v128 = vunpack.c.l.b16 %v44
  %v129 = vunpack.c.l.b16 %v45
  %v130 = vunpack.c.l.b16 %v46
  %v131 = vunpack.c.l.b16 %v47
  %v132 = vunpack.c.l.b16 %v48
  %v133 = vunpack.c.l.b16 %v49
  %v134 = vunpack.c.l.b16 %v50
  %v135 = vpack.c.b16 %v104, %v103
  %v136 = vpack.c.b16 %v106, %v105
  %v137 = vpack.c.b16 %v108, %v107
  %v138 = vpack.c.b16 %v110, %v109
  %v139 = vpack.c.b16 %v112, %v111
  %v140 = vpack.c.b16 %v114, %v113
  %v141 = vpack.c.b16 %v116, %v115
  %v142 = vpack.c.b16 %v118, %v117
  %v143 = vpack.c.b16 %v120, %v119
  %v144 = vpack.c.b16 %v122, %v121
  %v145 = vpack.c.b16 %v124, %v123
  %v146 = vpack.c.b16 %v126, %v125
  %v147 = vpack.c.b16 %v128, %v127
  %v148 = vpack.c.b16 %v130, %v129
  %v149 = vpack.c.b16 %v132, %v131
  %v150 = vpack.c.b16 %v134, %v133
  %167 = vmatprep.subr.bf16.mxu0 0
  %168 = vmatpush1.bf16.msra.mxu0 %v142
  %169 = vmatprep.subr.bf16.mxu0 0
  %170 = vmatpush1.bf16.msra.mxu0 %v141
  %171 = vmatprep.subr.bf16.mxu0 0
  %172 = vmatpush1.bf16.msra.mxu0 %v140
  %173 = vmatprep.subr.bf16.mxu0 0
  %174 = vmatpush1.bf16.msra.mxu0 %v139
  %175 = vmatprep.subr.bf16.mxu0 0
  %176 = vmatpush1.bf16.msra.mxu0 %v138
  %177 = vmatprep.subr.bf16.mxu0 0
  %178 = vmatpush1.bf16.msra.mxu0 %v137
  %179 = vmatprep.subr.bf16.mxu0 0
  %180 = vmatpush1.bf16.msra.mxu0 %v136
  %181 = vmatprep.subr.bf16.mxu0 0
  %182 = vmatpush1.bf16.msra.mxu0 %v135
  %183 = vmatprep.subr.bf16.mxu0 0
  %184 = vmatpush2.bf16.msra.mxu0 %v150
  %185 = vmatprep.subr.bf16.mxu0 0
  %186 = vmatpush2.bf16.msra.mxu0 %v149
  %187 = vmatprep.subr.bf16.mxu0 0
  %188 = vmatpush2.bf16.msra.mxu0 %v148
  %189 = vmatprep.subr.bf16.mxu0 0
  %190 = vmatpush2.bf16.msra.mxu0 %v147
  %191 = vmatprep.subr.bf16.mxu0 0
  %192 = vmatpush2.bf16.msra.mxu0 %v146
  %193 = vmatprep.subr.bf16.mxu0 0
  %194 = vmatpush2.bf16.msra.mxu0 %v145
  %195 = vmatprep.subr.bf16.mxu0 0
  %196 = vmatpush2.bf16.msra.mxu0 %v144
  %197 = vmatprep.subr.bf16.mxu0 0
  %198 = vmatpush2.bf16.msra.mxu0 %v143
  %199 = vmatprep.mubr.bf16.mxu0 %v64
  %200 = vmatmul.mubr.bf16.gmra.mxu0 %v63
  %v201 = vpop.f32.mrf.mxu0
  %v202 = vadd.f32 0.0, %v201
  %v203 = vpop.f32.mrf.mxu0
  %v204 = vpop.f32.mrf.mxu0
  %v205 = vadd.f32 0.0, %v204
  %v206 = vpop.f32.mrf.mxu0
  %207 = vmatprep.mubr.bf16.mxu0 %v66
  %208 = vmatmul.mubr.bf16.gmra.mxu0 %v65
  %v209 = vpop.f32.mrf.mxu0
  %v210 = vadd.f32 0.0, %v209
  %v211 = vpop.f32.mrf.mxu0
  %v212 = vpop.f32.mrf.mxu0
  %v213 = vadd.f32 0.0, %v212
  %v214 = vpop.f32.mrf.mxu0
  %215 = vdwg.mxu0
  %v216 = vmax.f32 %v202, 0.0
  %v217 = vmax.f32 %v205, 0.0
  %v218 = vmax.f32 %v210, 0.0
  %v219 = vmax.f32 %v213, 0.0
  %v220 = vpack.c.bf16 %v217, %v216
  %v221 = vpack.c.bf16 %v219, %v218
  %v222 = vld [vmem:[%s2] sm:$0xf]
  %v223 = vld [vmem:[%s2 + $0x4] sm:$0xf]
  %v224 = vld [vmem:[%s2 + $0x8] sm:$0xf]
  %v225 = vld [vmem:[%s2 + $0xc] sm:$0xf]
  %v226 = vld [vmem:[%s2 + $0x10] sm:$0xf]
  %v227 = vld [vmem:[%s2 + $0x14] sm:$0xf]
  %v228 = vld [vmem:[%s2 + $0x18] sm:$0xf]
  %v229 = vld [vmem:[%s2 + $0x1c] sm:$0xf]
  %v230 = vld [vmem:[%s2 + $0x20] sm:$0xf]
  %v231 = vld [vmem:[%s2 + $0x24] sm:$0xf]
  %v232 = vld [vmem:[%s2 + $0x28] sm:$0xf]
  %v233 = vld [vmem:[%s2 + $0x2c] sm:$0xf]
  %v234 = vld [vmem:[%s2 + $0x30] sm:$0xf]
  %v235 = vld [vmem:[%s2 + $0x34] sm:$0xf]
  %v236 = vld [vmem:[%s2 + $0x38] sm:$0xf]
  %v237 = vld [vmem:[%s2 + $0x3c] sm:$0xf]
  %v254 = vunpack.c.l.b16 %v222
  %v255 = vunpack.c.l.b16 %v223
  %v256 = vunpack.c.l.b16 %v224
  %v257 = vunpack.c.l.b16 %v225
  %v258 = vunpack.c.l.b16 %v226
  %v259 = vunpack.c.l.b16 %v227
  %v260 = vunpack.c.l.b16 %v228
  %v261 = vunpack.c.l.b16 %v229
  %v262 = vunpack.c.l.b16 %v230
  %v263 = vunpack.c.l.b16 %v231
  %v264 = vunpack.c.l.b16 %v232
  %v265 = vunpack.c.l.b16 %v233
  %v266 = vunpack.c.l.b16 %v234
  %v267 = vunpack.c.l.b16 %v235
  %v268 = vunpack.c.l.b16 %v236
  %v269 = vunpack.c.l.b16 %v237
  %v270 = vpack.c.b16 %v255, %v254
  %v271 = vpack.c.b16 %v257, %v256
  %v272 = vpack.c.b16 %v259, %v258
  %v273 = vpack.c.b16 %v261, %v260
  %v274 = vpack.c.b16 %v263, %v262
  %v275 = vpack.c.b16 %v265, %v264
  %v276 = vpack.c.b16 %v267, %v266
  %v277 = vpack.c.b16 %v269, %v268
  %286 = vmatprep.subr.bf16.mxu0 0
  %287 = vmatpush1.bf16.msra.mxu0 %v277
  %288 = vmatprep.subr.bf16.mxu0 0
  %289 = vmatpush1.bf16.msra.mxu0 %v276
  %290 = vmatprep.subr.bf16.mxu0 0
  %291 = vmatpush1.bf16.msra.mxu0 %v275
  %292 = vmatprep.subr.bf16.mxu0 0
  %293 = vmatpush1.bf16.msra.mxu0 %v274
  %294 = vmatprep.subr.bf16.mxu0 0
  %295 = vmatpush1.bf16.msra.mxu0 %v273
  %296 = vmatprep.subr.bf16.mxu0 0
  %297 = vmatpush1.bf16.msra.mxu0 %v272
  %298 = vmatprep.subr.bf16.mxu0 0
  %299 = vmatpush1.bf16.msra.mxu0 %v271
  %300 = vmatprep.subr.bf16.mxu0 0
  %301 = vmatpush1.bf16.msra.mxu0 %v270
  %302 = vmatprep.subr.bf16.mxu0 0
  %303 = vmatpush2.bf16.msra.mxu0 0
  %304 = vmatprep.subr.bf16.mxu0 0
  %305 = vmatpush2.bf16.msra.mxu0 0
  %306 = vmatprep.subr.bf16.mxu0 0
  %307 = vmatpush2.bf16.msra.mxu0 0
  %308 = vmatprep.subr.bf16.mxu0 0
  %309 = vmatpush2.bf16.msra.mxu0 0
  %310 = vmatprep.subr.bf16.mxu0 0
  %311 = vmatpush2.bf16.msra.mxu0 0
  %312 = vmatprep.subr.bf16.mxu0 0
  %313 = vmatpush2.bf16.msra.mxu0 0
  %314 = vmatprep.subr.bf16.mxu0 0
  %315 = vmatpush2.bf16.msra.mxu0 0
  %316 = vmatprep.subr.bf16.mxu0 0
  %317 = vmatpush2.bf16.msra.mxu0 0
  %318 = vmatprep.mubr.bf16.mxu0 0
  %319 = vmatmul.mubr.bf16.gmra.mxu0 %v220
  %v320 = vpop.f32.mrf.mxu0
  %v321 = vadd.f32 0.0, %v320
  %v322 = vpop.f32.mrf.mxu0
  %v323 = vpop.f32.mrf.mxu0
  %v324 = vadd.f32 0.0, %v323
  %v325 = vpop.f32.mrf.mxu0
  %326 = vmatprep.mubr.bf16.mxu0 0
  %327 = vmatmul.mubr.bf16.gmra.mxu0 %v221
  %v328 = vpop.f32.mrf.mxu0
  %v329 = vadd.f32 0.0, %v328
  %v330 = vpop.f32.mrf.mxu0
  %v331 = vpop.f32.mrf.mxu0
  %v332 = vadd.f32 0.0, %v331
  %v333 = vpop.f32.mrf.mxu0
  %334 = vdwg.mxu0
  %335 = vst [vmem:[%s3] sm:$0xff] %v321
  %336 = vst [vmem:[%s3 + $0x8] sm:$0xff] %v324
  %337 = vst [vmem:[%s3 + $0x10] sm:$0xff] %v329
  %338 = vst [vmem:[%s3 + $0x18] sm:$0xff] %v332
  // Predicated region
  $region14: #{_lambda_.10} parent=0 // pred_check
    _
  $region15: #{_lambda_.10} parent=0 // pred_check_branch
    %340 = sbr.rel (0) target = $region17
  $region16: #{_lambda_.10} parent=0 // pred_region
    _
  $region17: #{_lambda_.10} parent=0 // pred_fallthru
    _
  // Predicated region
  $region18: #{_lambda_.10} parent=0 // pred_check
    _
  $region19: #{_lambda_.10} parent=0 // pred_check_branch
    %342 = sbr.rel (0) target = $region21
  $region20: #{_lambda_.10} parent=0 // pred_region
    _
  $region21: #{_lambda_.10} parent=0 // pred_fallthru
    _

// kernel: _lambda_.11
$region0: #{_lambda_.11}
  #allocation0 [shape = 'u32[]', space=smem, size = 0x4, offset = 0x4, fixed_abs, tag = 'smem constant byte address 0x4 - core index']
  #allocation1 [shape = 'u32[144,128]{1,0:T(1,128)}', space=vmem, size = 0x12000, scoped, tag = 'internal scratch']
  %s0 = inlined_call_operand.vmem [shape: bf16[144,256], index: 0, kind: input, shape index: {}]
  %s1 = inlined_call_operand.vmem [shape: bf16[256,128], index: 1, kind: input, shape index: {}]
  %s2 = inlined_call_operand.vmem [shape: f32[8,144], index: 2, kind: input, shape index: {}]
  %s3 = inlined_call_operand.vmem [shape: f32[144,128], index: 3, kind: output, shape index: {0}]
  %s4 = inlined_call_operand.vmem [shape: f32[8,128], index: 4, kind: output, shape index: {1}]
  %5 = xla_tuple %s3, %s4
  %s6 = sld [smem:[#allocation0]]
  $region30: #{_lambda_.11} parent=0
    _
  %s8 = ssub.s32 1, %s6
  %s9 = scalar_select 0, %s8, %s6
  // Predicated region
  $region2: #{_lambda_.11} parent=0 // pred_check
    _
  $region3: #{_lambda_.11} parent=0 // pred_check_branch
    %11 = sbr.rel (0) target = $region5
  $region4: #{_lambda_.11} parent=0 // pred_region
    _
  $region5: #{_lambda_.11} parent=0 // pred_fallthru
    _
  // Predicated region
  $region6: #{_lambda_.11} parent=0 // pred_check
    _
  $region7: #{_lambda_.11} parent=0 // pred_check_branch
    %13 = sbr.rel (0) target = $region9
  $region8: #{_lambda_.11} parent=0 // pred_region
    _
  $region9: #{_lambda_.11} parent=0 // pred_fallthru
    _
  // Predicated region
  $region10: #{_lambda_.11} parent=0 // pred_check
    _
  $region11: #{_lambda_.11} parent=0 // pred_check_branch
    %15 = sbr.rel (0) target = $region13
  $region12: #{_lambda_.11} parent=0 // pred_region
    _
  $region13: #{_lambda_.11} parent=0 // pred_fallthru
    _
  %v17 = vld [vmem:[%s0] sm:$0xff]
  %v18 = vld [vmem:[%s0 + $0x8] sm:$0xff]
  %v19 = vld [vmem:[%s0 + $0x10] sm:$0xff]
  %v20 = vld [vmem:[%s0 + $0x18] sm:$0xff]
  %v21 = vld [vmem:[%s0 + $0x20] sm:$0xff]
  %v22 = vld [vmem:[%s0 + $0x28] sm:$0xff]
  %v23 = vld [vmem:[%s0 + $0x30] sm:$0xff]
  %v24 = vld [vmem:[%s0 + $0x38] sm:$0xff]
  %v25 = vld [vmem:[%s0 + $0x40] sm:$0xff]
  %v26 = vld [vmem:[%s0 + $0x48] sm:$0xff]
  %v27 = vld [vmem:[%s0 + $0x50] sm:$0xff]
  %v28 = vld [vmem:[%s0 + $0x58] sm:$0xff]
  %v29 = vld [vmem:[%s0 + $0x60] sm:$0xff]
  %v30 = vld [vmem:[%s0 + $0x68] sm:$0xff]
  %v31 = vld [vmem:[%s0 + $0x70] sm:$0xff]
  %v32 = vld [vmem:[%s0 + $0x78] sm:$0xff]
  %v33 = vld [vmem:[%s0 + $0x80] sm:$0xff]
  %v34 = vld [vmem:[%s0 + $0x88] sm:$0xff]
  %v35 = vld [vmem:[%s1] sm:$0xf]
  %v36 = vld [vmem:[%s1 + $0x4] sm:$0xf]
  %v37 = vld [vmem:[%s1 + $0x8] sm:$0xf]
  %v38 = vld [vmem:[%s1 + $0xc] sm:$0xf]
  %v39 = vld [vmem:[%s1 + $0x10] sm:$0xf]
  %v40 = vld [vmem:[%s1 + $0x14] sm:$0xf]
  %v41 = vld [vmem:[%s1 + $0x18] sm:$0xf]
  %v42 = vld [vmem:[%s1 + $0x1c] sm:$0xf]
  %v43 = vld [vmem:[%s1 + $0x20] sm:$0xf]
  %v44 = vld [vmem:[%s1 + $0x24] sm:$0xf]
  %v45 = vld [vmem:[%s1 + $0x28] sm:$0xf]
  %v46 = vld [vmem:[%s1 + $0x2c] sm:$0xf]
  %v47 = vld [vmem:[%s1 + $0x30] sm:$0xf]
  %v48 = vld [vmem:[%s1 + $0x34] sm:$0xf]
  %v49 = vld [vmem:[%s1 + $0x38] sm:$0xf]
  %v50 = vld [vmem:[%s1 + $0x3c] sm:$0xf]
  %v51 = vld [vmem:[%s1 + $0x40] sm:$0xf]
  %v52 = vld [vmem:[%s1 + $0x44] sm:$0xf]
  %v53 = vld [vmem:[%s1 + $0x48] sm:$0xf]
  %v54 = vld [vmem:[%s1 + $0x4c] sm:$0xf]
  %v55 = vld [vmem:[%s1 + $0x50] sm:$0xf]
  %v56 = vld [vmem:[%s1 + $0x54] sm:$0xf]
  %v57 = vld [vmem:[%s1 + $0x58] sm:$0xf]
  %v58 = vld [vmem:[%s1 + $0x5c] sm:$0xf]
  %v59 = vld [vmem:[%s1 + $0x60] sm:$0xf]
  %v60 = vld [vmem:[%s1 + $0x64] sm:$0xf]
  %v61 = vld [vmem:[%s1 + $0x68] sm:$0xf]
  %v62 = vld [vmem:[%s1 + $0x6c] sm:$0xf]
  %v63 = vld [vmem:[%s1 + $0x70] sm:$0xf]
  %v64 = vld [vmem:[%s1 + $0x74] sm:$0xf]
  %v65 = vld [vmem:[%s1 + $0x78] sm:$0xf]
  %v66 = vld [vmem:[%s1 + $0x7c] sm:$0xf]
  %v85 = vunpack.c.l.b16 %v17
  %v86 = vunpack.c.h.b16 %v17
  %v87 = vunpack.c.l.b16 %v18
  %v88 = vunpack.c.h.b16 %v18
  %v89 = vunpack.c.l.b16 %v19
  %v90 = vunpack.c.h.b16 %v19
  %v91 = vunpack.c.l.b16 %v20
  %v92 = vunpack.c.h.b16 %v20
  %v93 = vunpack.c.l.b16 %v21
  %v94 = vunpack.c.h.b16 %v21
  %v95 = vunpack.c.l.b16 %v22
  %v96 = vunpack.c.h.b16 %v22
  %v97 = vunpack.c.l.b16 %v23
  %v98 = vunpack.c.h.b16 %v23
  %v99 = vunpack.c.l.b16 %v24
  %v100 = vunpack.c.h.b16 %v24
  %v101 = vunpack.c.l.b16 %v25
  %v102 = vunpack.c.h.b16 %v25
  %v103 = vunpack.c.l.b16 %v26
  %v104 = vunpack.c.h.b16 %v26
  %v105 = vunpack.c.l.b16 %v27
  %v106 = vunpack.c.h.b16 %v27
  %v107 = vunpack.c.l.b16 %v28
  %v108 = vunpack.c.h.b16 %v28
  %v109 = vunpack.c.l.b16 %v29
  %v110 = vunpack.c.h.b16 %v29
  %v111 = vunpack.c.l.b16 %v30
  %v112 = vunpack.c.h.b16 %v30
  %v113 = vunpack.c.l.b16 %v31
  %v114 = vunpack.c.h.b16 %v31
  %v115 = vunpack.c.l.b16 %v32
  %v116 = vunpack.c.h.b16 %v32
  %v117 = vunpack.c.l.b16 %v33
  %v118 = vunpack.c.h.b16 %v33
  %v119 = vunpack.c.l.b16 %v34
  %v120 = vunpack.c.h.b16 %v34
  %v121 = vpack.c.b16 %v87, %v85
  %v122 = vpack.c.b16 %v88, %v86
  %v123 = vpack.c.b16 %v91, %v89
  %v124 = vpack.c.b16 %v92, %v90
  %v125 = vpack.c.b16 %v95, %v93
  %v126 = vpack.c.b16 %v96, %v94
  %v127 = vpack.c.b16 %v99, %v97
  %v128 = vpack.c.b16 %v100, %v98
  %v129 = vpack.c.b16 %v103, %v101
  %v130 = vpack.c.b16 %v104, %v102
  %v131 = vpack.c.b16 %v107, %v105
  %v132 = vpack.c.b16 %v108, %v106
  %v133 = vpack.c.b16 %v111, %v109
  %v134 = vpack.c.b16 %v112, %v110
  %v135 = vpack.c.b16 %v115, %v113
  %v136 = vpack.c.b16 %v116, %v114
  %v137 = vpack.c.b16 %v119, %v117
  %v138 = vpack.c.b16 %v120, %v118
  %v189 = vunpack.c.l.b16 %v35
  %v190 = vunpack.c.l.b16 %v36
  %v191 = vunpack.c.l.b16 %v37
  %v192 = vunpack.c.l.b16 %v38
  %v193 = vunpack.c.l.b16 %v39
  %v194 = vunpack.c.l.b16 %v40
  %v195 = vunpack.c.l.b16 %v41
  %v196 = vunpack.c.l.b16 %v42
  %v197 = vunpack.c.l.b16 %v43
  %v198 = vunpack.c.l.b16 %v44
  %v199 = vunpack.c.l.b16 %v45
  %v200 = vunpack.c.l.b16 %v46
  %v201 = vunpack.c.l.b16 %v47
  %v202 = vunpack.c.l.b16 %v48
  %v203 = vunpack.c.l.b16 %v49
  %v204 = vunpack.c.l.b16 %v50
  %v205 = vunpack.c.l.b16 %v51
  %v206 = vunpack.c.l.b16 %v52
  %v207 = vunpack.c.l.b16 %v53
  %v208 = vunpack.c.l.b16 %v54
  %v209 = vunpack.c.l.b16 %v55
  %v210 = vunpack.c.l.b16 %v56
  %v211 = vunpack.c.l.b16 %v57
  %v212 = vunpack.c.l.b16 %v58
  %v213 = vunpack.c.l.b16 %v59
  %v214 = vunpack.c.l.b16 %v60
  %v215 = vunpack.c.l.b16 %v61
  %v216 = vunpack.c.l.b16 %v62
  %v217 = vunpack.c.l.b16 %v63
  %v218 = vunpack.c.l.b16 %v64
  %v219 = vunpack.c.l.b16 %v65
  %v220 = vunpack.c.l.b16 %v66
  %v221 = vpack.c.b16 %v190, %v189
  %v222 = vpack.c.b16 %v192, %v191
  %v223 = vpack.c.b16 %v194, %v193
  %v224 = vpack.c.b16 %v196, %v195
  %v225 = vpack.c.b16 %v198, %v197
  %v226 = vpack.c.b16 %v200, %v199
  %v227 = vpack.c.b16 %v202, %v201
  %v228 = vpack.c.b16 %v204, %v203
  %v229 = vpack.c.b16 %v206, %v205
  %v230 = vpack.c.b16 %v208, %v207
  %v231 = vpack.c.b16 %v210, %v209
  %v232 = vpack.c.b16 %v212, %v211
  %v233 = vpack.c.b16 %v214, %v213
  %v234 = vpack.c.b16 %v216, %v215
  %v235 = vpack.c.b16 %v218, %v217
  %v236 = vpack.c.b16 %v220, %v219
  %253 = vmatprep.subr.bf16.mxu0 0
  %254 = vmatpush1.bf16.msra.mxu0 %v228
  %255 = vmatprep.subr.bf16.mxu0 0
  %256 = vmatpush1.bf16.msra.mxu0 %v227
  %257 = vmatprep.subr.bf16.mxu0 0
  %258 = vmatpush1.bf16.msra.mxu0 %v226
  %259 = vmatprep.subr.bf16.mxu0 0
  %260 = vmatpush1.bf16.msra.mxu0 %v225
  %261 = vmatprep.subr.bf16.mxu0 0
  %262 = vmatpush1.bf16.msra.mxu0 %v224
  %263 = vmatprep.subr.bf16.mxu0 0
  %264 = vmatpush1.bf16.msra.mxu0 %v223
  %265 = vmatprep.subr.bf16.mxu0 0
  %266 = vmatpush1.bf16.msra.mxu0 %v222
  %267 = vmatprep.subr.bf16.mxu0 0
  %268 = vmatpush1.bf16.msra.mxu0 %v221
  %269 = vmatprep.subr.bf16.mxu0 0
  %270 = vmatpush2.bf16.msra.mxu0 %v236
  %271 = vmatprep.subr.bf16.mxu0 0
  %272 = vmatpush2.bf16.msra.mxu0 %v235
  %273 = vmatprep.subr.bf16.mxu0 0
  %274 = vmatpush2.bf16.msra.mxu0 %v234
  %275 = vmatprep.subr.bf16.mxu0 0
  %276 = vmatpush2.bf16.msra.mxu0 %v233
  %277 = vmatprep.subr.bf16.mxu0 0
  %278 = vmatpush2.bf16.msra.mxu0 %v232
  %279 = vmatprep.subr.bf16.mxu0 0
  %280 = vmatpush2.bf16.msra.mxu0 %v231
  %281 = vmatprep.subr.bf16.mxu0 0
  %282 = vmatpush2.bf16.msra.mxu0 %v230
  %283 = vmatprep.subr.bf16.mxu0 0
  %284 = vmatpush2.bf16.msra.mxu0 %v229
  %285 = vmatprep.mubr.bf16.mxu0 %v122
  %286 = vmatmul.mubr.bf16.gmra.mxu0 %v121
  %v287 = vpop.f32.mrf.mxu0
  %v288 = vadd.f32 0.0, %v287
  %v289 = vpop.f32.mrf.mxu0
  %v290 = vpop.f32.mrf.mxu0
  %v291 = vadd.f32 0.0, %v290
  %v292 = vpop.f32.mrf.mxu0
  %293 = vmatprep.mubr.bf16.mxu0 %v124
  %294 = vmatmul.mubr.bf16.gmra.mxu0 %v123
  %v295 = vpop.f32.mrf.mxu0
  %v296 = vadd.f32 0.0, %v295
  %v297 = vpop.f32.mrf.mxu0
  %v298 = vpop.f32.mrf.mxu0
  %v299 = vadd.f32 0.0, %v298
  %v300 = vpop.f32.mrf.mxu0
  %301 = vmatprep.mubr.bf16.mxu0 %v126
  %302 = vmatmul.mubr.bf16.gmra.mxu0 %v125
  %v303 = vpop.f32.mrf.mxu0
  %v304 = vadd.f32 0.0, %v303
  %v305 = vpop.f32.mrf.mxu0
  %v306 = vpop.f32.mrf.mxu0
  %v307 = vadd.f32 0.0, %v306
  %v308 = vpop.f32.mrf.mxu0
  %309 = vmatprep.mubr.bf16.mxu0 %v128
  %310 = vmatmul.mubr.bf16.gmra.mxu0 %v127
  %v311 = vpop.f32.mrf.mxu0
  %v312 = vadd.f32 0.0, %v311
  %v313 = vpop.f32.mrf.mxu0
  %v314 = vpop.f32.mrf.mxu0
  %v315 = vadd.f32 0.0, %v314
  %v316 = vpop.f32.mrf.mxu0
  %317 = vmatprep.mubr.bf16.mxu0 %v130
  %318 = vmatmul.mubr.bf16.gmra.mxu0 %v129
  %v319 = vpop.f32.mrf.mxu0
  %v320 = vadd.f32 0.0, %v319
  %v321 = vpop.f32.mrf.mxu0
  %v322 = vpop.f32.mrf.mxu0
  %v323 = vadd.f32 0.0, %v322
  %v324 = vpop.f32.mrf.mxu0
  %325 = vmatprep.mubr.bf16.mxu0 %v132
  %326 = vmatmul.mubr.bf16.gmra.mxu0 %v131
  %v327 = vpop.f32.mrf.mxu0
  %v328 = vadd.f32 0.0, %v327
  %v329 = vpop.f32.mrf.mxu0
  %v330 = vpop.f32.mrf.mxu0
  %v331 = vadd.f32 0.0, %v330
  %v332 = vpop.f32.mrf.mxu0
  %333 = vmatprep.mubr.bf16.mxu0 %v134
  %334 = vmatmul.mubr.bf16.gmra.mxu0 %v133
  %v335 = vpop.f32.mrf.mxu0
  %v336 = vadd.f32 0.0, %v335
  %v337 = vpop.f32.mrf.mxu0
  %v338 = vpop.f32.mrf.mxu0
  %v339 = vadd.f32 0.0, %v338
  %v340 = vpop.f32.mrf.mxu0
  %341 = vmatprep.mubr.bf16.mxu0 %v136
  %342 = vmatmul.mubr.bf16.gmra.mxu0 %v135
  %v343 = vpop.f32.mrf.mxu0
  %v344 = vadd.f32 0.0, %v343
  %v345 = vpop.f32.mrf.mxu0
  %v346 = vpop.f32.mrf.mxu0
  %v347 = vadd.f32 0.0, %v346
  %v348 = vpop.f32.mrf.mxu0
  %349 = vmatprep.mubr.bf16.mxu0 %v138
  %350 = vmatmul.mubr.bf16.gmra.mxu0 %v137
  %v351 = vpop.f32.mrf.mxu0
  %v352 = vadd.f32 0.0, %v351
  %v353 = vpop.f32.mrf.mxu0
  %v354 = vpop.f32.mrf.mxu0
  %v355 = vadd.f32 0.0, %v354
  %v356 = vpop.f32.mrf.mxu0
  %357 = vdwg.mxu0
  %v358 = vmax.f32 %v288, 0.0
  %v359 = vmax.f32 %v291, 0.0
  %v360 = vmax.f32 %v296, 0.0
  %v361 = vmax.f32 %v299, 0.0
  %v362 = vmax.f32 %v304, 0.0
  %v363 = vmax.f32 %v307, 0.0
  %v364 = vmax.f32 %v312, 0.0
  %v365 = vmax.f32 %v315, 0.0
  %v366 = vmax.f32 %v320, 0.0
  %v367 = vmax.f32 %v323, 0.0
  %v368 = vmax.f32 %v328, 0.0
  %v369 = vmax.f32 %v331, 0.0
  %v370 = vmax.f32 %v336, 0.0
  %v371 = vmax.f32 %v339, 0.0
  %v372 = vmax.f32 %v344, 0.0
  %v373 = vmax.f32 %v347, 0.0
  %v374 = vmax.f32 %v352, 0.0
  %v375 = vmax.f32 %v355, 0.0
  %376 = vst [vmem:[%s3] sm:$0xff] %v358
  %377 = vst [vmem:[%s3 + $0x8] sm:$0xff] %v359
  %378 = vst [vmem:[%s3 + $0x10] sm:$0xff] %v360
  %379 = vst [vmem:[%s3 + $0x18] sm:$0xff] %v361
  %380 = vst [vmem:[%s3 + $0x20] sm:$0xff] %v362
  %381 = vst [vmem:[%s3 + $0x28] sm:$0xff] %v363
  %382 = vst [vmem:[%s3 + $0x30] sm:$0xff] %v364
  %383 = vst [vmem:[%s3 + $0x38] sm:$0xff] %v365
  %384 = vst [vmem:[%s3 + $0x40] sm:$0xff] %v366
  %385 = vst [vmem:[%s3 + $0x48] sm:$0xff] %v367
  %386 = vst [vmem:[%s3 + $0x50] sm:$0xff] %v368
  %387 = vst [vmem:[%s3 + $0x58] sm:$0xff] %v369
  %388 = vst [vmem:[%s3 + $0x60] sm:$0xff] %v370
  %389 = vst [vmem:[%s3 + $0x68] sm:$0xff] %v371
  %390 = vst [vmem:[%s3 + $0x70] sm:$0xff] %v372
  %391 = vst [vmem:[%s3 + $0x78] sm:$0xff] %v373
  %392 = vst [vmem:[%s3 + $0x80] sm:$0xff] %v374
  %393 = vst [vmem:[%s3 + $0x88] sm:$0xff] %v375
  %v394 = vld [vmem:[%s2] sm:$0xff]
  %v395 = vld [vmem:[%s2 + $0x8] sm:$0xff]
  %vm396 = vcmask 130048
  %v398 = vsel %vm396, %v395, 0
  %400 = vmatprep.subr.mxu0 0.0
  %401 = vmatpush1.msra.mxu0 %v373
  %402 = vmatprep.subr.mxu0 0.0
  %403 = vmatpush1.msra.mxu0 %v372
  %404 = vmatprep.subr.mxu0 0.0
  %405 = vmatpush1.msra.mxu0 %v371
  %406 = vmatprep.subr.mxu0 0.0
  %407 = vmatpush1.msra.mxu0 %v370
  %408 = vmatprep.subr.mxu0 0.0
  %409 = vmatpush1.msra.mxu0 %v369
  %410 = vmatprep.subr.mxu0 0.0
  %411 = vmatpush1.msra.mxu0 %v368
  %412 = vmatprep.subr.mxu0 0.0
  %413 = vmatpush1.msra.mxu0 %v367
  %414 = vmatprep.subr.mxu0 0.0
  %415 = vmatpush1.msra.mxu0 %v366
  %416 = vmatprep.subr.mxu0 0.0
  %417 = vmatpush1.msra.mxu0 %v365
  %418 = vmatprep.subr.mxu0 0.0
  %419 = vmatpush1.msra.mxu0 %v364
  %420 = vmatprep.subr.mxu0 0.0
  %421 = vmatpush1.msra.mxu0 %v363
  %422 = vmatprep.subr.mxu0 0.0
  %423 = vmatpush1.msra.mxu0 %v362
  %424 = vmatprep.subr.mxu0 0.0
  %425 = vmatpush1.msra.mxu0 %v361
  %426 = vmatprep.subr.mxu0 0.0
  %427 = vmatpush1.msra.mxu0 %v360
  %428 = vmatprep.subr.mxu0 0.0
  %429 = vmatpush1.msra.mxu0 %v359
  %430 = vmatprep.subr.mxu0 0.0
  %431 = vmatpush1.msra.mxu0 %v358
  %432 = vmatprep.subr.mxu0 0.0
  %433 = vmatpush2.msra.mxu0 0.0
  %434 = vmatprep.subr.mxu0 0.0
  %435 = vmatpush2.msra.mxu0 0.0
  %436 = vmatprep.subr.mxu0 0.0
  %437 = vmatpush2.msra.mxu0 0.0
  %438 = vmatprep.subr.mxu0 0.0
  %439 = vmatpush2.msra.mxu0 0.0
  %440 = vmatprep.subr.mxu0 0.0
  %441 = vmatpush2.msra.mxu0 0.0
  %442 = vmatprep.subr.mxu0 0.0
  %443 = vmatpush2.msra.mxu0 0.0
  %444 = vmatprep.subr.mxu0 0.0
  %445 = vmatpush2.msra.mxu0 0.0
  %446 = vmatprep.subr.mxu0 0.0
  %447 = vmatpush2.msra.mxu0 0.0
  %448 = vmatprep.subr.mxu0 0.0
  %449 = vmatpush2.msra.mxu0 0.0
  %450 = vmatprep.subr.mxu0 0.0
  %451 = vmatpush2.msra.mxu0 0.0
  %452 = vmatprep.subr.mxu0 0.0
  %453 = vmatpush2.msra.mxu0 0.0
  %454 = vmatprep.subr.mxu0 0.0
  %455 = vmatpush2.msra.mxu0 0.0
  %456 = vmatprep.subr.mxu0 0.0
  %457 = vmatpush2.msra.mxu0 0.0
  %458 = vmatprep.subr.mxu0 0.0
  %459 = vmatpush2.msra.mxu0 0.0
  %460 = vmatprep.subr.mxu0 0.0
  %461 = vmatpush2.msra.mxu0 %v375
  %462 = vmatprep.subr.mxu0 0.0
  %463 = vmatpush2.msra.mxu0 %v374
  %464 = vmatprep.mubr.f32.mxu0 %v398
  %465 = vmatmul.mubr.f32.gmra.mxu0 %v394
  %v466 = vpop.f32.mrf.mxu0
  %v467 = vadd.f32 0.0, %v466
  %v468 = vpop.f32.mrf.mxu0
  %469 = vdwg.mxu0
  %470 = vst [vmem:[%s4] sm:$0xff] %v467
  // Predicated region
  $region14: #{_lambda_.11} parent=0 // pred_check
    _
  $region15: #{_lambda_.11} parent=0 // pred_check_branch
    %472 = sbr.rel (0) target = $region17
  $region16: #{_lambda_.11} parent=0 // pred_region
    _
  $region17: #{_lambda_.11} parent=0 // pred_fallthru
    _
  // Predicated region
  $region18: #{_lambda_.11} parent=0 // pred_check
    _
  $region19: #{_lambda_.11} parent=0 // pred_check_branch
    %474 = sbr.rel (0) target = $region21
  $region20: #{_lambda_.11} parent=0 // pred_region
    _
  $region21: #{_lambda_.11} parent=0 // pred_fallthru
    _
  // Predicated region
  $region22: #{_lambda_.11} parent=0 // pred_check
    _
  $region23: #{_lambda_.11} parent=0 // pred_check_branch
    %476 = sbr.rel (0) target = $region25
  $region24: #{_lambda_.11} parent=0 // pred_region
    _
  $region25: #{_lambda_.11} parent=0 // pred_fallthru
    _
  // Predicated region
  $region26: #{_lambda_.11} parent=0 // pred_check
    _
  $region27: #{_lambda_.11} parent=0 // pred_check_branch
    %478 = sbr.rel (0) target = $region29
  $region28: #{_lambda_.11} parent=0 // pred_region
    _
  $region29: #{_lambda_.11} parent=0 // pred_fallthru
    _

// kernel: _lambda_.13
$region0: #{_lambda_.13}
  #allocation0 [shape = 'u32[]', space=smem, size = 0x4, offset = 0x4, fixed_abs, tag = 'smem constant byte address 0x4 - core index']
  #allocation1 [shape = 'u32[144,128]{1,0:T(1,128)}', space=vmem, size = 0x12000, scoped, tag = 'internal scratch']
  %s0 = inlined_call_operand.vmem [shape: f32[40,128], index: 0, kind: input, shape index: {}]
  %s1 = inlined_call_operand.vmem [shape: f32[128,128], index: 1, kind: input, shape index: {}]
  %s2 = inlined_call_operand.vmem [shape: f32[40,128], index: 2, kind: output, shape index: {}]
  %s3 = sld [smem:[#allocation0]]
  $region18: #{_lambda_.13} parent=0
    _
  %s5 = ssub.s32 1, %s3
  %s6 = scalar_select 0, %s5, %s3
  // Predicated region
  $region2: #{_lambda_.13} parent=0 // pred_check
    _
  $region3: #{_lambda_.13} parent=0 // pred_check_branch
    %8 = sbr.rel (0) target = $region5
  $region4: #{_lambda_.13} parent=0 // pred_region
    _
  $region5: #{_lambda_.13} parent=0 // pred_fallthru
    _
  // Predicated region
  $region6: #{_lambda_.13} parent=0 // pred_check
    _
  $region7: #{_lambda_.13} parent=0 // pred_check_branch
    %10 = sbr.rel (0) target = $region9
  $region8: #{_lambda_.13} parent=0 // pred_region
    _
  $region9: #{_lambda_.13} parent=0 // pred_fallthru
    _
  %v11 = vld [vmem:[%s0] sm:$0xff]
  %v12 = vld [vmem:[%s0 + $0x8] sm:$0xff]
  %v13 = vld [vmem:[%s0 + $0x10] sm:$0xff]
  %v14 = vld [vmem:[%s0 + $0x18] sm:$0xff]
  %v15 = vld [vmem:[%s0 + $0x20] sm:$0xff]
  %v16 = vld [vmem:[%s1] sm:$0xff]
  %v17 = vld [vmem:[%s1 + $0x8] sm:$0xff]
  %v18 = vld [vmem:[%s1 + $0x10] sm:$0xff]
  %v19 = vld [vmem:[%s1 + $0x18] sm:$0xff]
  %v20 = vld [vmem:[%s1 + $0x20] sm:$0xff]
  %v21 = vld [vmem:[%s1 + $0x28] sm:$0xff]
  %v22 = vld [vmem:[%s1 + $0x30] sm:$0xff]
  %v23 = vld [vmem:[%s1 + $0x38] sm:$0xff]
  %v24 = vld [vmem:[%s1 + $0x40] sm:$0xff]
  %v25 = vld [vmem:[%s1 + $0x48] sm:$0xff]
  %v26 = vld [vmem:[%s1 + $0x50] sm:$0xff]
  %v27 = vld [vmem:[%s1 + $0x58] sm:$0xff]
  %v28 = vld [vmem:[%s1 + $0x60] sm:$0xff]
  %v29 = vld [vmem:[%s1 + $0x68] sm:$0xff]
  %v30 = vld [vmem:[%s1 + $0x70] sm:$0xff]
  %v31 = vld [vmem:[%s1 + $0x78] sm:$0xff]
  %32 = vmatprep.subr.mxu0 0.0
  %33 = vmatpush1.msra.mxu0 %v31
  %34 = vmatprep.subr.mxu0 0.0
  %35 = vmatpush1.msra.mxu0 %v30
  %36 = vmatprep.subr.mxu0 0.0
  %37 = vmatpush1.msra.mxu0 %v29
  %38 = vmatprep.subr.mxu0 0.0
  %39 = vmatpush1.msra.mxu0 %v28
  %40 = vmatprep.subr.mxu0 0.0
  %41 = vmatpush1.msra.mxu0 %v27
  %42 = vmatprep.subr.mxu0 0.0
  %43 = vmatpush1.msra.mxu0 %v26
  %44 = vmatprep.subr.mxu0 0.0
  %45 = vmatpush1.msra.mxu0 %v25
  %46 = vmatprep.subr.mxu0 0.0
  %47 = vmatpush1.msra.mxu0 %v24
  %48 = vmatprep.subr.mxu0 0.0
  %49 = vmatpush1.msra.mxu0 %v23
  %50 = vmatprep.subr.mxu0 0.0
  %51 = vmatpush1.msra.mxu0 %v22
  %52 = vmatprep.subr.mxu0 0.0
  %53 = vmatpush1.msra.mxu0 %v21
  %54 = vmatprep.subr.mxu0 0.0
  %55 = vmatpush1.msra.mxu0 %v20
  %56 = vmatprep.subr.mxu0 0.0
  %57 = vmatpush1.msra.mxu0 %v19
  %58 = vmatprep.subr.mxu0 0.0
  %59 = vmatpush1.msra.mxu0 %v18
  %60 = vmatprep.subr.mxu0 0.0
  %61 = vmatpush1.msra.mxu0 %v17
  %62 = vmatprep.subr.mxu0 0.0
  %63 = vmatpush1.msra.mxu0 %v16
  %64 = vmatprep.subr.mxu0 0.0
  %65 = vmatpush2.msra.mxu0 0.0
  %66 = vmatprep.subr.mxu0 0.0
  %67 = vmatpush2.msra.mxu0 0.0
  %68 = vmatprep.subr.mxu0 0.0
  %69 = vmatpush2.msra.mxu0 0.0
  %70 = vmatprep.subr.mxu0 0.0
  %71 = vmatpush2.msra.mxu0 0.0
  %72 = vmatprep.subr.mxu0 0.0
  %73 = vmatpush2.msra.mxu0 0.0
  %74 = vmatprep.subr.mxu0 0.0
  %75 = vmatpush2.msra.mxu0 0.0
  %76 = vmatprep.subr.mxu0 0.0
  %77 = vmatpush2.msra.mxu0 0.0
  %78 = vmatprep.subr.mxu0 0.0
  %79 = vmatpush2.msra.mxu0 0.0
  %80 = vmatprep.subr.mxu0 0.0
  %81 = vmatpush2.msra.mxu0 0.0
  %82 = vmatprep.subr.mxu0 0.0
  %83 = vmatpush2.msra.mxu0 0.0
  %84 = vmatprep.subr.mxu0 0.0
  %85 = vmatpush2.msra.mxu0 0.0
  %86 = vmatprep.subr.mxu0 0.0
  %87 = vmatpush2.msra.mxu0 0.0
  %88 = vmatprep.subr.mxu0 0.0
  %89 = vmatpush2.msra.mxu0 0.0
  %90 = vmatprep.subr.mxu0 0.0
  %91 = vmatpush2.msra.mxu0 0.0
  %92 = vmatprep.subr.mxu0 0.0
  %93 = vmatpush2.msra.mxu0 0.0
  %94 = vmatprep.subr.mxu0 0.0
  %95 = vmatpush2.msra.mxu0 0.0
  %96 = vmatprep.mubr.f32.mxu0 0.0
  %97 = vmatmul.mubr.f32.gmra.mxu0 %v11
  %v98 = vpop.f32.mrf.mxu0
  %v99 = vadd.f32 0.0, %v98
  %v100 = vpop.f32.mrf.mxu0
  %101 = vmatprep.mubr.f32.mxu0 0.0
  %102 = vmatmul.mubr.f32.gmra.mxu0 %v12
  %v103 = vpop.f32.mrf.mxu0
  %v104 = vadd.f32 0.0, %v103
  %v105 = vpop.f32.mrf.mxu0
  %106 = vmatprep.mubr.f32.mxu0 0.0
  %107 = vmatmul.mubr.f32.gmra.mxu0 %v13
  %v108 = vpop.f32.mrf.mxu0
  %v109 = vadd.f32 0.0, %v108
  %v110 = vpop.f32.mrf.mxu0
  %111 = vmatprep.mubr.f32.mxu0 0.0
  %112 = vmatmul.mubr.f32.gmra.mxu0 %v14
  %v113 = vpop.f32.mrf.mxu0
  %v114 = vadd.f32 0.0, %v113
  %v115 = vpop.f32.mrf.mxu0
  %116 = vmatprep.mubr.f32.mxu0 0.0
  %117 = vmatmul.mubr.f32.gmra.mxu0 %v15
  %v118 = vpop.f32.mrf.mxu0
  %v119 = vadd.f32 0.0, %v118
  %v120 = vpop.f32.mrf.mxu0
  %121 = vdwg.mxu0
  %122 = vst [vmem:[%s2] sm:$0xff] %v99
  %123 = vst [vmem:[%s2 + $0x8] sm:$0xff] %v104
  %124 = vst [vmem:[%s2 + $0x10] sm:$0xff] %v109
  %125 = vst [vmem:[%s2 + $0x18] sm:$0xff] %v114
  %126 = vst [vmem:[%s2 + $0x20] sm:$0xff] %v119
  // Predicated region
  $region10: #{_lambda_.13} parent=0 // pred_check
    _
  $region11: #{_lambda_.13} parent=0 // pred_check_branch
    %128 = sbr.rel (0) target = $region13
  $region12: #{_lambda_.13} parent=0 // pred_region
    _
  $region13: #{_lambda_.13} parent=0 // pred_fallthru
    _
  // Predicated region
  $region14: #{_lambda_.13} parent=0 // pred_check
    _
  $region15: #{_lambda_.13} parent=0 // pred_check_branch
    %130 = sbr.rel (0) target = $region17
  $region16: #{_lambda_.13} parent=0 // pred_region
    _
  $region17: #{_lambda_.13} parent=0 // pred_fallthru
    _

</llo_original>
